<compile_context>
chip_gen: v7x
topology: tpu7x:2x2x1
jax: 0.10.0
libtpu: 0.0.40
codegen_flags: <defaults>
</compile_context>

<pallas_src>
import functools

import jax
import jax.numpy as jnp
from jax import lax
from jax.experimental import pallas as pl
from jax.experimental.pallas import tpu as pltpu


# ---------------------------------------------------------------------------
# Kernel 1: MaxPool3d(2, 2) fused with zero-padding of the pooled d axis.
# Grid: (N*C,).  Each step pools one (n, c) volume and writes pooled planes
# into o_ref[2 : Do+2]; planes {0, 1, Do+2, Do+3} are zeros (conv d-padding
# + flat-index slack for the conv's shifted-slice reads).
# ---------------------------------------------------------------------------
def _pool_pad_kernel(x_ref, o_ref, *, n_do):
    # x_ref: (1, Do, 2, H, W)  f32 input (d split into pairs by a free reshape)
    # o_ref: (1, Do+4, Ho, Wo) bf16 pooled + d-padded volume
    H, W = x_ref.shape[3], x_ref.shape[4]
    Ho, Wo = H // 2, W // 2

    # 0/1 selection matrices: pick even/odd W lanes and even/odd H sublanes.
    # Exact in f32 (each row/column has a single nonzero), avoids strided
    # lane gathers, and runs on the otherwise idle MXU.
    wi = lax.broadcasted_iota(jnp.int32, (W, Wo), 0)
    wj = lax.broadcasted_iota(jnp.int32, (W, Wo), 1)
    sel_w0 = (wi == 2 * wj).astype(jnp.float32)
    sel_w1 = (wi == 2 * wj + 1).astype(jnp.float32)
    hi = lax.broadcasted_iota(jnp.int32, (Ho, H), 0)
    hj = lax.broadcasted_iota(jnp.int32, (Ho, H), 1)
    sel_h0 = (hj == 2 * hi).astype(jnp.float32)
    sel_h1 = (hj == 2 * hi + 1).astype(jnp.float32)

    # Zero the four padding planes.
    zplane = jnp.zeros((Ho, Wo), o_ref.dtype)
    for dpad in (0, 1, n_do + 2, n_do + 3):
        o_ref[0, dpad] = zplane

    # Pool each d-pair: max over d, then W compaction, then H compaction.
    for d in range(n_do):
        m = jnp.maximum(x_ref[0, d, 0], x_ref[0, d, 1])              # (H, W)
        q = jnp.maximum(
            jnp.dot(m, sel_w0, preferred_element_type=jnp.float32),
            jnp.dot(m, sel_w1, preferred_element_type=jnp.float32))  # (H, Wo)
        r = jnp.maximum(
            jnp.dot(sel_h0, q, preferred_element_type=jnp.float32),
            jnp.dot(sel_h1, q, preferred_element_type=jnp.float32))  # (Ho, Wo)
        o_ref[0, d + 2] = r.astype(o_ref.dtype)


def maxpool3d_2_padded(x):
    """MaxPool3d(2,2) of NCDHW input -> bf16 (N*C, Do+4, Ho, Wo) volume with
    zero planes around the pooled data (ready for the conv kernel)."""
    N, C, D, H, W = x.shape
    Do, Ho, Wo = D // 2, H // 2, W // 2
    Dp = Do + 4
    xv = x.reshape(N * C, Do, 2, H, W)          # metadata-only reshape
    return pl.pallas_call(
        functools.partial(_pool_pad_kernel, n_do=Do),
        out_shape=jax.ShapeDtypeStruct((N * C, Dp, Ho, Wo), jnp.bfloat16),
        grid=(N * C,),
        in_specs=[pl.BlockSpec((1, Do, 2, H, W), lambda nc: (nc, 0, 0, 0, 0))],
        out_specs=pl.BlockSpec((1, Dp, Ho, Wo), lambda nc: (nc, 0, 0, 0)),
        compiler_params=pltpu.CompilerParams(
            dimension_semantics=("parallel",)),
    )(xv)


# ---------------------------------------------------------------------------
# Kernel 2: Conv3d(k=3, pad=1, bias=False) + InstanceNorm3d + ReLU.
# One sample per grid step; 27 shifted lane-dense matmuls into an f32
# accumulator; h/w zero-padding applied as masks (d padding is physical
# zeros); stats in one f32 pass; ReLU fused.
# ---------------------------------------------------------------------------
def _conv_in_relu_kernel(pp_ref, w_ref, o_ref, *, n_do, n_ho, n_wo, eps):
    # pp_ref: (1, C, Lp)     bf16 pooled volume, d-padded, flat (d, h, w) lanes
    # w_ref : (27, Cout, C)  bf16 weights, tap index = 9*kd + 3*kh + kw
    # o_ref : (1, Cout, L)   L = Do*Ho*Wo  (== flattened NCDHW spatial)
    hw = n_ho * n_wo
    L = n_do * hw
    cout = w_ref.shape[1]

    # (h, w) coordinates of every output position along the flat lane axis.
    pos = lax.broadcasted_iota(jnp.int32, (1, L), 1)
    w_id = pos % n_wo
    h_id = (pos // n_wo) % n_ho

    acc = jnp.zeros((cout, L), jnp.float32)
    for kh in range(3):
        hv = jnp.logical_and(h_id + (kh - 1) >= 0, h_id + (kh - 1) < n_ho)
        for kw in range(3):
            wv = jnp.logical_and(w_id + (kw - 1) >= 0, w_id + (kw - 1) < n_wo)
            mask = jnp.logical_and(hv, wv).astype(jnp.float32)       # (1, L)
            part = jnp.zeros((cout, L), jnp.float32)
            for kd in range(3):
                tap = 9 * kd + 3 * kh + kw
                delta = (kd + 1) * hw + (kh - 1) * n_wo + (kw - 1)
                xs = pp_ref[0, :, pl.ds(delta, L)]                   # (C, L) bf16
                part = part + jnp.dot(w_ref[tap], xs,
                                      preferred_element_type=jnp.float32)
            # h/w conv zero-padding: taps whose flat read wrapped across a
            # row/plane boundary are zeroed here (d padding is real zeros).
            acc = acc + part * mask

    # InstanceNorm3d(affine=False): per-(n, channel) stats over L voxels,
    # single pass with f32 sum / sum-of-squares.
    inv_l = 1.0 / L
    mean = jnp.sum(acc, axis=1, keepdims=True) * inv_l               # (Cout, 1)
    ex2 = jnp.sum(acc * acc, axis=1, keepdims=True) * inv_l
    var = ex2 - mean * mean
    y = (acc - mean) * lax.rsqrt(var + eps)
    o_ref[0] = jnp.maximum(y, 0.0).astype(o_ref.dtype)


def conv_instnorm_relu(pp, weight, out_dtype, eps=1e-5):
    NC, Dp, Ho, Wo = pp.shape
    Cout, C = weight.shape[0], weight.shape[1]
    N = NC // C
    Do = Dp - 4
    hw = Ho * Wo
    L = Do * hw
    Lp = Dp * hw

    pp_flat = pp.reshape(N, C, Lp)                                   # free reshape
    # (Cout, C, 3, 3, 3) -> (27, Cout, C), tap = 9*kd + 3*kh + kw  (tiny tensor)
    w_taps = weight.transpose(2, 3, 4, 0, 1).reshape(27, Cout, C)
    w_taps = w_taps.astype(jnp.bfloat16)

    out_flat = pl.pallas_call(
        functools.partial(_conv_in_relu_kernel,
                          n_do=Do, n_ho=Ho, n_wo=Wo, eps=eps),
        out_shape=jax.ShapeDtypeStruct((N, Cout, L), out_dtype),
        grid=(N,),
        in_specs=[
            pl.BlockSpec((1, C, Lp), lambda n: (n, 0, 0)),
            pl.BlockSpec((27, Cout, C), lambda n: (0, 0, 0)),
        ],
        out_specs=pl.BlockSpec((1, Cout, L), lambda n: (n, 0, 0)),
        compiler_params=pltpu.CompilerParams(
            dimension_semantics=("parallel",)),
    )(pp_flat, w_taps)
    # Lane axis already is the flattened (d, h, w) order -> free reshape only.
    return out_flat.reshape(N, Cout, Do, Ho, Wo)


def downsample_conv(x, weight, eps=1e-5):
    """Forward pass of DownsampleConv: maxpool -> conv -> instancenorm -> relu."""
    N, C, D, H, W = x.shape
    assert D % 2 == 0 and H % 2 == 0 and W % 2 == 0
    pp = maxpool3d_2_padded(x)
    return conv_instnorm_relu(pp, weight, x.dtype, eps)


# --------------------------- pure-JAX reference -----------------------------
def downsample_conv_ref(x, weight, eps=1e-5):
    N, C, D, H, W = x.shape
    xp = x.reshape(N, C, D // 2, 2, H // 2, 2, W // 2, 2).max(axis=(3, 5, 7))
    y = jax.lax.conv_general_dilated(
        xp, weight, window_strides=(1, 1, 1), padding=((1, 1),) * 3,
        dimension_numbers=("NCDHW", "OIDHW", "NCDHW"))
    mean = y.mean(axis=(2, 3, 4), keepdims=True)
    var = ((y - mean) ** 2).mean(axis=(2, 3, 4), keepdims=True)
    y = (y - mean) * jax.lax.rsqrt(var + eps)
    return jnp.maximum(y, 0.0)


if __name__ == "__main__":
    key = jax.random.PRNGKey(0)
    kx, kw = jax.random.split(key)

    N, Cin, Cout, D, H, W = 2, 4, 8, 16, 16, 16
    x = jax.random.normal(kx, (N, Cin, D, H, W), dtype=jnp.float32)
    # deterministic Kaiming-scaled conv weight init; Conv3d has bias=False
    fan_in = Cin * 3 * 3 * 3
    weight = jax.random.normal(kw, (Cout, Cin, 3, 3, 3), jnp.float32) * (2.0 / fan_in) ** 0.5

    out = jax.block_until_ready(downsample_conv(x, weight))
    ref = jax.block_until_ready(downsample_conv_ref(x, weight))

    assert out.shape == (N, Cout, D // 2, H // 2, W // 2), out.shape
    # tolerance reflects bf16 conv operands / bf16 pooled intermediate
    assert bool(jnp.allclose(out, ref, atol=3e-2, rtol=3e-2)), \
        float(jnp.max(jnp.abs(out - ref)))
    print("KERNEL_OK")
</pallas_src>

<mosaic_0001>
module attributes {stable_mosaic.version = 11 : i64} {
  func.func @_pool_pad_kernel(%arg0: i32, %arg1: memref<1x8x2x16x16xf32, #tpu.memory_space<vmem>>, %arg2: memref<1x12x8x8xbf16, #tpu.memory_space<vmem>>) attributes {dimension_semantics = [#tpu.dimension_semantics<parallel>], iteration_bounds = array<i64: 8>, scalar_prefetch = 0 : i64, scratch_operands = 0 : i64, tpu.core_type = #tpu.core_type<tc>, window_params = [{transform_indices = @transform_0, window_bounds = array<i64: 1, 8, 2, 16, 16>}, {transform_indices = @transform_1, window_bounds = array<i64: 1, 12, 8, 8>}]} {
    %0 = tpu.iota {dimensions = array<i32: 0>} : vector<16x8xi32>
    %1 = tpu.iota {dimensions = array<i32: 1>} : vector<16x8xi32>
    %c2_i32 = arith.constant 2 : i32
    %2 = vector.broadcast %c2_i32 : i32 to vector<16x8xi32>
    %3 = arith.muli %2, %1 : vector<16x8xi32>
    %4 = arith.cmpi eq, %0, %3 : vector<16x8xi32>
    %5 = arith.extui %4 : vector<16x8xi1> to vector<16x8xi32>
    %6 = arith.sitofp %5 : vector<16x8xi32> to vector<16x8xf32>
    %c2_i32_0 = arith.constant 2 : i32
    %7 = vector.broadcast %c2_i32_0 : i32 to vector<16x8xi32>
    %8 = arith.muli %7, %1 : vector<16x8xi32>
    %c1_i32 = arith.constant 1 : i32
    %9 = vector.broadcast %c1_i32 : i32 to vector<16x8xi32>
    %10 = arith.addi %8, %9 : vector<16x8xi32>
    %11 = arith.cmpi eq, %0, %10 : vector<16x8xi32>
    %12 = arith.extui %11 : vector<16x8xi1> to vector<16x8xi32>
    %13 = arith.sitofp %12 : vector<16x8xi32> to vector<16x8xf32>
    %14 = tpu.iota {dimensions = array<i32: 0>} : vector<8x16xi32>
    %15 = tpu.iota {dimensions = array<i32: 1>} : vector<8x16xi32>
    %c2_i32_1 = arith.constant 2 : i32
    %16 = vector.broadcast %c2_i32_1 : i32 to vector<8x16xi32>
    %17 = arith.muli %16, %14 : vector<8x16xi32>
    %18 = arith.cmpi eq, %15, %17 : vector<8x16xi32>
    %19 = arith.extui %18 : vector<8x16xi1> to vector<8x16xi32>
    %20 = arith.sitofp %19 : vector<8x16xi32> to vector<8x16xf32>
    %c2_i32_2 = arith.constant 2 : i32
    %21 = vector.broadcast %c2_i32_2 : i32 to vector<8x16xi32>
    %22 = arith.muli %21, %14 : vector<8x16xi32>
    %c1_i32_3 = arith.constant 1 : i32
    %23 = vector.broadcast %c1_i32_3 : i32 to vector<8x16xi32>
    %24 = arith.addi %22, %23 : vector<8x16xi32>
    %25 = arith.cmpi eq, %15, %24 : vector<8x16xi32>
    %26 = arith.extui %25 : vector<8x16xi1> to vector<8x16xi32>
    %27 = arith.sitofp %26 : vector<8x16xi32> to vector<8x16xf32>
    %cst = arith.constant 0.000000e+00 : bf16
    %28 = vector.broadcast %cst : bf16 to vector<8x8xbf16>
    %c0 = arith.constant 0 : index
    %c0_4 = arith.constant 0 : index
    %c0_5 = arith.constant 0 : index
    %c0_6 = arith.constant 0 : index
    %29 = vector.load %arg2[%c0, %c0_4, %c0_5, %c0_6] : memref<1x12x8x8xbf16, #tpu.memory_space<vmem>>, vector<1x1x8x8xbf16>
    %30 = vector.shape_cast %29 : vector<1x1x8x8xbf16> to vector<8x8xbf16>
    %31 = vector.shape_cast %28 : vector<8x8xbf16> to vector<1x1x8x8xbf16>
    tpu.vector_store %arg2[%c0, %c0_4, %c0_5, %c0_6], %31 {strides = array<i32>} : memref<1x12x8x8xbf16, #tpu.memory_space<vmem>>, vector<1x1x8x8xbf16>,
    %c0_7 = arith.constant 0 : index
    %c1 = arith.constant 1 : index
    %c0_8 = arith.constant 0 : index
    %c0_9 = arith.constant 0 : index
    %32 = vector.load %arg2[%c0_7, %c1, %c0_8, %c0_9] : memref<1x12x8x8xbf16, #tpu.memory_space<vmem>>, vector<1x1x8x8xbf16>
    %33 = vector.shape_cast %32 : vector<1x1x8x8xbf16> to vector<8x8xbf16>
    %34 = vector.shape_cast %28 : vector<8x8xbf16> to vector<1x1x8x8xbf16>
    tpu.vector_store %arg2[%c0_7, %c1, %c0_8, %c0_9], %34 {strides = array<i32>} : memref<1x12x8x8xbf16, #tpu.memory_space<vmem>>, vector<1x1x8x8xbf16>,
    %c0_10 = arith.constant 0 : index
    %c10 = arith.constant 10 : index
    %c0_11 = arith.constant 0 : index
    %c0_12 = arith.constant 0 : index
    %35 = vector.load %arg2[%c0_10, %c10, %c0_11, %c0_12] : memref<1x12x8x8xbf16, #tpu.memory_space<vmem>>, vector<1x1x8x8xbf16>
    %36 = vector.shape_cast %35 : vector<1x1x8x8xbf16> to vector<8x8xbf16>
    %37 = vector.shape_cast %28 : vector<8x8xbf16> to vector<1x1x8x8xbf16>
    tpu.vector_store %arg2[%c0_10, %c10, %c0_11, %c0_12], %37 {strides = array<i32>} : memref<1x12x8x8xbf16, #tpu.memory_space<vmem>>, vector<1x1x8x8xbf16>,
    %c0_13 = arith.constant 0 : index
    %c11 = arith.constant 11 : index
    %c0_14 = arith.constant 0 : index
    %c0_15 = arith.constant 0 : index
    %38 = vector.load %arg2[%c0_13, %c11, %c0_14, %c0_15] : memref<1x12x8x8xbf16, #tpu.memory_space<vmem>>, vector<1x1x8x8xbf16>
    %39 = vector.shape_cast %38 : vector<1x1x8x8xbf16> to vector<8x8xbf16>
    %40 = vector.shape_cast %28 : vector<8x8xbf16> to vector<1x1x8x8xbf16>
    tpu.vector_store %arg2[%c0_13, %c11, %c0_14, %c0_15], %40 {strides = array<i32>} : memref<1x12x8x8xbf16, #tpu.memory_space<vmem>>, vector<1x1x8x8xbf16>,
    %c0_16 = arith.constant 0 : index
    %c0_17 = arith.constant 0 : index
    %c0_18 = arith.constant 0 : index
    %c0_19 = arith.constant 0 : index
    %c0_20 = arith.constant 0 : index
    %41 = vector.load %arg1[%c0_16, %c0_17, %c0_18, %c0_19, %c0_20] : memref<1x8x2x16x16xf32, #tpu.memory_space<vmem>>, vector<1x1x1x16x16xf32>
    %42 = vector.shape_cast %41 : vector<1x1x1x16x16xf32> to vector<16x16xf32>
    %c0_21 = arith.constant 0 : index
    %c0_22 = arith.constant 0 : index
    %c1_23 = arith.constant 1 : index
    %c0_24 = arith.constant 0 : index
    %c0_25 = arith.constant 0 : index
    %43 = vector.load %arg1[%c0_21, %c0_22, %c1_23, %c0_24, %c0_25] : memref<1x8x2x16x16xf32, #tpu.memory_space<vmem>>, vector<1x1x1x16x16xf32>
    %44 = vector.shape_cast %43 : vector<1x1x1x16x16xf32> to vector<16x16xf32>
    %45 = arith.maximumf %42, %44 : vector<16x16xf32>
    %cst_26 = arith.constant dense<0.000000e+00> : vector<16x8xf32>
    %46 = tpu.matmul %45, %6, %cst_26 {dimension_numbers = #tpu.dot_dimension_numbers<[1], [0], [0], [1], [0, 0, 1, 1], [], []>} : vector<16x16xf32>, vector<16x8xf32>, vector<16x8xf32> -> vector<16x8xf32>
    %cst_27 = arith.constant dense<0.000000e+00> : vector<16x8xf32>
    %47 = tpu.matmul %45, %13, %cst_27 {dimension_numbers = #tpu.dot_dimension_numbers<[1], [0], [0], [1], [0, 0, 1, 1], [], []>} : vector<16x16xf32>, vector<16x8xf32>, vector<16x8xf32> -> vector<16x8xf32>
    %48 = arith.maximumf %46, %47 : vector<16x8xf32>
    %cst_28 = arith.constant dense<0.000000e+00> : vector<8x8xf32>
    %49 = tpu.matmul %20, %48, %cst_28 {dimension_numbers = #tpu.dot_dimension_numbers<[1], [0], [0], [1], [0, 0, 1, 1], [], []>} : vector<8x16xf32>, vector<16x8xf32>, vector<8x8xf32> -> vector<8x8xf32>
    %cst_29 = arith.constant dense<0.000000e+00> : vector<8x8xf32>
    %50 = tpu.matmul %27, %48, %cst_29 {dimension_numbers = #tpu.dot_dimension_numbers<[1], [0], [0], [1], [0, 0, 1, 1], [], []>} : vector<8x16xf32>, vector<16x8xf32>, vector<8x8xf32> -> vector<8x8xf32>
    %51 = arith.maximumf %49, %50 : vector<8x8xf32>
    %52 = arith.truncf %51 : vector<8x8xf32> to vector<8x8xbf16>
    %c0_30 = arith.constant 0 : index
    %c2 = arith.constant 2 : index
    %c0_31 = arith.constant 0 : index
    %c0_32 = arith.constant 0 : index
    %53 = vector.load %arg2[%c0_30, %c2, %c0_31, %c0_32] : memref<1x12x8x8xbf16, #tpu.memory_space<vmem>>, vector<1x1x8x8xbf16>
    %54 = vector.shape_cast %53 : vector<1x1x8x8xbf16> to vector<8x8xbf16>
    %55 = vector.shape_cast %52 : vector<8x8xbf16> to vector<1x1x8x8xbf16>
    tpu.vector_store %arg2[%c0_30, %c2, %c0_31, %c0_32], %55 {strides = array<i32>} : memref<1x12x8x8xbf16, #tpu.memory_space<vmem>>, vector<1x1x8x8xbf16>,
    %c0_33 = arith.constant 0 : index
    %c1_34 = arith.constant 1 : index
    %c0_35 = arith.constant 0 : index
    %c0_36 = arith.constant 0 : index
    %c0_37 = arith.constant 0 : index
    %56 = vector.load %arg1[%c0_33, %c1_34, %c0_35, %c0_36, %c0_37] : memref<1x8x2x16x16xf32, #tpu.memory_space<vmem>>, vector<1x1x1x16x16xf32>
    %57 = vector.shape_cast %56 : vector<1x1x1x16x16xf32> to vector<16x16xf32>
    %c0_38 = arith.constant 0 : index
    %c1_39 = arith.constant 1 : index
    %c1_40 = arith.constant 1 : index
    %c0_41 = arith.constant 0 : index
    %c0_42 = arith.constant 0 : index
    %58 = vector.load %arg1[%c0_38, %c1_39, %c1_40, %c0_41, %c0_42] : memref<1x8x2x16x16xf32, #tpu.memory_space<vmem>>, vector<1x1x1x16x16xf32>
    %59 = vector.shape_cast %58 : vector<1x1x1x16x16xf32> to vector<16x16xf32>
    %60 = arith.maximumf %57, %59 : vector<16x16xf32>
    %cst_43 = arith.constant dense<0.000000e+00> : vector<16x8xf32>
    %61 = tpu.matmul %60, %6, %cst_43 {dimension_numbers = #tpu.dot_dimension_numbers<[1], [0], [0], [1], [0, 0, 1, 1], [], []>} : vector<16x16xf32>, vector<16x8xf32>, vector<16x8xf32> -> vector<16x8xf32>
    %cst_44 = arith.constant dense<0.000000e+00> : vector<16x8xf32>
    %62 = tpu.matmul %60, %13, %cst_44 {dimension_numbers = #tpu.dot_dimension_numbers<[1], [0], [0], [1], [0, 0, 1, 1], [], []>} : vector<16x16xf32>, vector<16x8xf32>, vector<16x8xf32> -> vector<16x8xf32>
    %63 = arith.maximumf %61, %62 : vector<16x8xf32>
    %cst_45 = arith.constant dense<0.000000e+00> : vector<8x8xf32>
    %64 = tpu.matmul %20, %63, %cst_45 {dimension_numbers = #tpu.dot_dimension_numbers<[1], [0], [0], [1], [0, 0, 1, 1], [], []>} : vector<8x16xf32>, vector<16x8xf32>, vector<8x8xf32> -> vector<8x8xf32>
    %cst_46 = arith.constant dense<0.000000e+00> : vector<8x8xf32>
    %65 = tpu.matmul %27, %63, %cst_46 {dimension_numbers = #tpu.dot_dimension_numbers<[1], [0], [0], [1], [0, 0, 1, 1], [], []>} : vector<8x16xf32>, vector<16x8xf32>, vector<8x8xf32> -> vector<8x8xf32>
    %66 = arith.maximumf %64, %65 : vector<8x8xf32>
    %67 = arith.truncf %66 : vector<8x8xf32> to vector<8x8xbf16>
    %c0_47 = arith.constant 0 : index
    %c3 = arith.constant 3 : index
    %c0_48 = arith.constant 0 : index
    %c0_49 = arith.constant 0 : index
    %68 = vector.load %arg2[%c0_47, %c3, %c0_48, %c0_49] : memref<1x12x8x8xbf16, #tpu.memory_space<vmem>>, vector<1x1x8x8xbf16>
    %69 = vector.shape_cast %68 : vector<1x1x8x8xbf16> to vector<8x8xbf16>
    %70 = vector.shape_cast %67 : vector<8x8xbf16> to vector<1x1x8x8xbf16>
    tpu.vector_store %arg2[%c0_47, %c3, %c0_48, %c0_49], %70 {strides = array<i32>} : memref<1x12x8x8xbf16, #tpu.memory_space<vmem>>, vector<1x1x8x8xbf16>,
    %c0_50 = arith.constant 0 : index
    %c2_51 = arith.constant 2 : index
    %c0_52 = arith.constant 0 : index
    %c0_53 = arith.constant 0 : index
    %c0_54 = arith.constant 0 : index
    %71 = vector.load %arg1[%c0_50, %c2_51, %c0_52, %c0_53, %c0_54] : memref<1x8x2x16x16xf32, #tpu.memory_space<vmem>>, vector<1x1x1x16x16xf32>
    %72 = vector.shape_cast %71 : vector<1x1x1x16x16xf32> to vector<16x16xf32>
    %c0_55 = arith.constant 0 : index
    %c2_56 = arith.constant 2 : index
    %c1_57 = arith.constant 1 : index
    %c0_58 = arith.constant 0 : index
    %c0_59 = arith.constant 0 : index
    %73 = vector.load %arg1[%c0_55, %c2_56, %c1_57, %c0_58, %c0_59] : memref<1x8x2x16x16xf32, #tpu.memory_space<vmem>>, vector<1x1x1x16x16xf32>
    %74 = vector.shape_cast %73 : vector<1x1x1x16x16xf32> to vector<16x16xf32>
    %75 = arith.maximumf %72, %74 : vector<16x16xf32>
    %cst_60 = arith.constant dense<0.000000e+00> : vector<16x8xf32>
    %76 = tpu.matmul %75, %6, %cst_60 {dimension_numbers = #tpu.dot_dimension_numbers<[1], [0], [0], [1], [0, 0, 1, 1], [], []>} : vector<16x16xf32>, vector<16x8xf32>, vector<16x8xf32> -> vector<16x8xf32>
    %cst_61 = arith.constant dense<0.000000e+00> : vector<16x8xf32>
    %77 = tpu.matmul %75, %13, %cst_61 {dimension_numbers = #tpu.dot_dimension_numbers<[1], [0], [0], [1], [0, 0, 1, 1], [], []>} : vector<16x16xf32>, vector<16x8xf32>, vector<16x8xf32> -> vector<16x8xf32>
    %78 = arith.maximumf %76, %77 : vector<16x8xf32>
    %cst_62 = arith.constant dense<0.000000e+00> : vector<8x8xf32>
    %79 = tpu.matmul %20, %78, %cst_62 {dimension_numbers = #tpu.dot_dimension_numbers<[1], [0], [0], [1], [0, 0, 1, 1], [], []>} : vector<8x16xf32>, vector<16x8xf32>, vector<8x8xf32> -> vector<8x8xf32>
    %cst_63 = arith.constant dense<0.000000e+00> : vector<8x8xf32>
    %80 = tpu.matmul %27, %78, %cst_63 {dimension_numbers = #tpu.dot_dimension_numbers<[1], [0], [0], [1], [0, 0, 1, 1], [], []>} : vector<8x16xf32>, vector<16x8xf32>, vector<8x8xf32> -> vector<8x8xf32>
    %81 = arith.maximumf %79, %80 : vector<8x8xf32>
    %82 = arith.truncf %81 : vector<8x8xf32> to vector<8x8xbf16>
    %c0_64 = arith.constant 0 : index
    %c4 = arith.constant 4 : index
    %c0_65 = arith.constant 0 : index
    %c0_66 = arith.constant 0 : index
    %83 = vector.load %arg2[%c0_64, %c4, %c0_65, %c0_66] : memref<1x12x8x8xbf16, #tpu.memory_space<vmem>>, vector<1x1x8x8xbf16>
    %84 = vector.shape_cast %83 : vector<1x1x8x8xbf16> to vector<8x8xbf16>
    %85 = vector.shape_cast %82 : vector<8x8xbf16> to vector<1x1x8x8xbf16>
    tpu.vector_store %arg2[%c0_64, %c4, %c0_65, %c0_66], %85 {strides = array<i32>} : memref<1x12x8x8xbf16, #tpu.memory_space<vmem>>, vector<1x1x8x8xbf16>,
    %c0_67 = arith.constant 0 : index
    %c3_68 = arith.constant 3 : index
    %c0_69 = arith.constant 0 : index
    %c0_70 = arith.constant 0 : index
    %c0_71 = arith.constant 0 : index
    %86 = vector.load %arg1[%c0_67, %c3_68, %c0_69, %c0_70, %c0_71] : memref<1x8x2x16x16xf32, #tpu.memory_space<vmem>>, vector<1x1x1x16x16xf32>
    %87 = vector.shape_cast %86 : vector<1x1x1x16x16xf32> to vector<16x16xf32>
    %c0_72 = arith.constant 0 : index
    %c3_73 = arith.constant 3 : index
    %c1_74 = arith.constant 1 : index
    %c0_75 = arith.constant 0 : index
    %c0_76 = arith.constant 0 : index
    %88 = vector.load %arg1[%c0_72, %c3_73, %c1_74, %c0_75, %c0_76] : memref<1x8x2x16x16xf32, #tpu.memory_space<vmem>>, vector<1x1x1x16x16xf32>
    %89 = vector.shape_cast %88 : vector<1x1x1x16x16xf32> to vector<16x16xf32>
    %90 = arith.maximumf %87, %89 : vector<16x16xf32>
    %cst_77 = arith.constant dense<0.000000e+00> : vector<16x8xf32>
    %91 = tpu.matmul %90, %6, %cst_77 {dimension_numbers = #tpu.dot_dimension_numbers<[1], [0], [0], [1], [0, 0, 1, 1], [], []>} : vector<16x16xf32>, vector<16x8xf32>, vector<16x8xf32> -> vector<16x8xf32>
    %cst_78 = arith.constant dense<0.000000e+00> : vector<16x8xf32>
    %92 = tpu.matmul %90, %13, %cst_78 {dimension_numbers = #tpu.dot_dimension_numbers<[1], [0], [0], [1], [0, 0, 1, 1], [], []>} : vector<16x16xf32>, vector<16x8xf32>, vector<16x8xf32> -> vector<16x8xf32>
    %93 = arith.maximumf %91, %92 : vector<16x8xf32>
    %cst_79 = arith.constant dense<0.000000e+00> : vector<8x8xf32>
    %94 = tpu.matmul %20, %93, %cst_79 {dimension_numbers = #tpu.dot_dimension_numbers<[1], [0], [0], [1], [0, 0, 1, 1], [], []>} : vector<8x16xf32>, vector<16x8xf32>, vector<8x8xf32> -> vector<8x8xf32>
    %cst_80 = arith.constant dense<0.000000e+00> : vector<8x8xf32>
    %95 = tpu.matmul %27, %93, %cst_80 {dimension_numbers = #tpu.dot_dimension_numbers<[1], [0], [0], [1], [0, 0, 1, 1], [], []>} : vector<8x16xf32>, vector<16x8xf32>, vector<8x8xf32> -> vector<8x8xf32>
    %96 = arith.maximumf %94, %95 : vector<8x8xf32>
    %97 = arith.truncf %96 : vector<8x8xf32> to vector<8x8xbf16>
    %c0_81 = arith.constant 0 : index
    %c5 = arith.constant 5 : index
    %c0_82 = arith.constant 0 : index
    %c0_83 = arith.constant 0 : index
    %98 = vector.load %arg2[%c0_81, %c5, %c0_82, %c0_83] : memref<1x12x8x8xbf16, #tpu.memory_space<vmem>>, vector<1x1x8x8xbf16>
    %99 = vector.shape_cast %98 : vector<1x1x8x8xbf16> to vector<8x8xbf16>
    %100 = vector.shape_cast %97 : vector<8x8xbf16> to vector<1x1x8x8xbf16>
    tpu.vector_store %arg2[%c0_81, %c5, %c0_82, %c0_83], %100 {strides = array<i32>} : memref<1x12x8x8xbf16, #tpu.memory_space<vmem>>, vector<1x1x8x8xbf16>,
    %c0_84 = arith.constant 0 : index
    %c4_85 = arith.constant 4 : index
    %c0_86 = arith.constant 0 : index
    %c0_87 = arith.constant 0 : index
    %c0_88 = arith.constant 0 : index
    %101 = vector.load %arg1[%c0_84, %c4_85, %c0_86, %c0_87, %c0_88] : memref<1x8x2x16x16xf32, #tpu.memory_space<vmem>>, vector<1x1x1x16x16xf32>
    %102 = vector.shape_cast %101 : vector<1x1x1x16x16xf32> to vector<16x16xf32>
    %c0_89 = arith.constant 0 : index
    %c4_90 = arith.constant 4 : index
    %c1_91 = arith.constant 1 : index
    %c0_92 = arith.constant 0 : index
    %c0_93 = arith.constant 0 : index
    %103 = vector.load %arg1[%c0_89, %c4_90, %c1_91, %c0_92, %c0_93] : memref<1x8x2x16x16xf32, #tpu.memory_space<vmem>>, vector<1x1x1x16x16xf32>
    %104 = vector.shape_cast %103 : vector<1x1x1x16x16xf32> to vector<16x16xf32>
    %105 = arith.maximumf %102, %104 : vector<16x16xf32>
    %cst_94 = arith.constant dense<0.000000e+00> : vector<16x8xf32>
    %106 = tpu.matmul %105, %6, %cst_94 {dimension_numbers = #tpu.dot_dimension_numbers<[1], [0], [0], [1], [0, 0, 1, 1], [], []>} : vector<16x16xf32>, vector<16x8xf32>, vector<16x8xf32> -> vector<16x8xf32>
    %cst_95 = arith.constant dense<0.000000e+00> : vector<16x8xf32>
    %107 = tpu.matmul %105, %13, %cst_95 {dimension_numbers = #tpu.dot_dimension_numbers<[1], [0], [0], [1], [0, 0, 1, 1], [], []>} : vector<16x16xf32>, vector<16x8xf32>, vector<16x8xf32> -> vector<16x8xf32>
    %108 = arith.maximumf %106, %107 : vector<16x8xf32>
    %cst_96 = arith.constant dense<0.000000e+00> : vector<8x8xf32>
    %109 = tpu.matmul %20, %108, %cst_96 {dimension_numbers = #tpu.dot_dimension_numbers<[1], [0], [0], [1], [0, 0, 1, 1], [], []>} : vector<8x16xf32>, vector<16x8xf32>, vector<8x8xf32> -> vector<8x8xf32>
    %cst_97 = arith.constant dense<0.000000e+00> : vector<8x8xf32>
    %110 = tpu.matmul %27, %108, %cst_97 {dimension_numbers = #tpu.dot_dimension_numbers<[1], [0], [0], [1], [0, 0, 1, 1], [], []>} : vector<8x16xf32>, vector<16x8xf32>, vector<8x8xf32> -> vector<8x8xf32>
    %111 = arith.maximumf %109, %110 : vector<8x8xf32>
    %112 = arith.truncf %111 : vector<8x8xf32> to vector<8x8xbf16>
    %c0_98 = arith.constant 0 : index
    %c6 = arith.constant 6 : index
    %c0_99 = arith.constant 0 : index
    %c0_100 = arith.constant 0 : index
    %113 = vector.load %arg2[%c0_98, %c6, %c0_99, %c0_100] : memref<1x12x8x8xbf16, #tpu.memory_space<vmem>>, vector<1x1x8x8xbf16>
    %114 = vector.shape_cast %113 : vector<1x1x8x8xbf16> to vector<8x8xbf16>
    %115 = vector.shape_cast %112 : vector<8x8xbf16> to vector<1x1x8x8xbf16>
    tpu.vector_store %arg2[%c0_98, %c6, %c0_99, %c0_100], %115 {strides = array<i32>} : memref<1x12x8x8xbf16, #tpu.memory_space<vmem>>, vector<1x1x8x8xbf16>,
    %c0_101 = arith.constant 0 : index
    %c5_102 = arith.constant 5 : index
    %c0_103 = arith.constant 0 : index
    %c0_104 = arith.constant 0 : index
    %c0_105 = arith.constant 0 : index
    %116 = vector.load %arg1[%c0_101, %c5_102, %c0_103, %c0_104, %c0_105] : memref<1x8x2x16x16xf32, #tpu.memory_space<vmem>>, vector<1x1x1x16x16xf32>
    %117 = vector.shape_cast %116 : vector<1x1x1x16x16xf32> to vector<16x16xf32>
    %c0_106 = arith.constant 0 : index
    %c5_107 = arith.constant 5 : index
    %c1_108 = arith.constant 1 : index
    %c0_109 = arith.constant 0 : index
    %c0_110 = arith.constant 0 : index
    %118 = vector.load %arg1[%c0_106, %c5_107, %c1_108, %c0_109, %c0_110] : memref<1x8x2x16x16xf32, #tpu.memory_space<vmem>>, vector<1x1x1x16x16xf32>
    %119 = vector.shape_cast %118 : vector<1x1x1x16x16xf32> to vector<16x16xf32>
    %120 = arith.maximumf %117, %119 : vector<16x16xf32>
    %cst_111 = arith.constant dense<0.000000e+00> : vector<16x8xf32>
    %121 = tpu.matmul %120, %6, %cst_111 {dimension_numbers = #tpu.dot_dimension_numbers<[1], [0], [0], [1], [0, 0, 1, 1], [], []>} : vector<16x16xf32>, vector<16x8xf32>, vector<16x8xf32> -> vector<16x8xf32>
    %cst_112 = arith.constant dense<0.000000e+00> : vector<16x8xf32>
    %122 = tpu.matmul %120, %13, %cst_112 {dimension_numbers = #tpu.dot_dimension_numbers<[1], [0], [0], [1], [0, 0, 1, 1], [], []>} : vector<16x16xf32>, vector<16x8xf32>, vector<16x8xf32> -> vector<16x8xf32>
    %123 = arith.maximumf %121, %122 : vector<16x8xf32>
    %cst_113 = arith.constant dense<0.000000e+00> : vector<8x8xf32>
    %124 = tpu.matmul %20, %123, %cst_113 {dimension_numbers = #tpu.dot_dimension_numbers<[1], [0], [0], [1], [0, 0, 1, 1], [], []>} : vector<8x16xf32>, vector<16x8xf32>, vector<8x8xf32> -> vector<8x8xf32>
    %cst_114 = arith.constant dense<0.000000e+00> : vector<8x8xf32>
    %125 = tpu.matmul %27, %123, %cst_114 {dimension_numbers = #tpu.dot_dimension_numbers<[1], [0], [0], [1], [0, 0, 1, 1], [], []>} : vector<8x16xf32>, vector<16x8xf32>, vector<8x8xf32> -> vector<8x8xf32>
    %126 = arith.maximumf %124, %125 : vector<8x8xf32>
    %127 = arith.truncf %126 : vector<8x8xf32> to vector<8x8xbf16>
    %c0_115 = arith.constant 0 : index
    %c7 = arith.constant 7 : index
    %c0_116 = arith.constant 0 : index
    %c0_117 = arith.constant 0 : index
    %128 = vector.load %arg2[%c0_115, %c7, %c0_116, %c0_117] : memref<1x12x8x8xbf16, #tpu.memory_space<vmem>>, vector<1x1x8x8xbf16>
    %129 = vector.shape_cast %128 : vector<1x1x8x8xbf16> to vector<8x8xbf16>
    %130 = vector.shape_cast %127 : vector<8x8xbf16> to vector<1x1x8x8xbf16>
    tpu.vector_store %arg2[%c0_115, %c7, %c0_116, %c0_117], %130 {strides = array<i32>} : memref<1x12x8x8xbf16, #tpu.memory_space<vmem>>, vector<1x1x8x8xbf16>,
    %c0_118 = arith.constant 0 : index
    %c6_119 = arith.constant 6 : index
    %c0_120 = arith.constant 0 : index
    %c0_121 = arith.constant 0 : index
    %c0_122 = arith.constant 0 : index
    %131 = vector.load %arg1[%c0_118, %c6_119, %c0_120, %c0_121, %c0_122] : memref<1x8x2x16x16xf32, #tpu.memory_space<vmem>>, vector<1x1x1x16x16xf32>
    %132 = vector.shape_cast %131 : vector<1x1x1x16x16xf32> to vector<16x16xf32>
    %c0_123 = arith.constant 0 : index
    %c6_124 = arith.constant 6 : index
    %c1_125 = arith.constant 1 : index
    %c0_126 = arith.constant 0 : index
    %c0_127 = arith.constant 0 : index
    %133 = vector.load %arg1[%c0_123, %c6_124, %c1_125, %c0_126, %c0_127] : memref<1x8x2x16x16xf32, #tpu.memory_space<vmem>>, vector<1x1x1x16x16xf32>
    %134 = vector.shape_cast %133 : vector<1x1x1x16x16xf32> to vector<16x16xf32>
    %135 = arith.maximumf %132, %134 : vector<16x16xf32>
    %cst_128 = arith.constant dense<0.000000e+00> : vector<16x8xf32>
    %136 = tpu.matmul %135, %6, %cst_128 {dimension_numbers = #tpu.dot_dimension_numbers<[1], [0], [0], [1], [0, 0, 1, 1], [], []>} : vector<16x16xf32>, vector<16x8xf32>, vector<16x8xf32> -> vector<16x8xf32>
    %cst_129 = arith.constant dense<0.000000e+00> : vector<16x8xf32>
    %137 = tpu.matmul %135, %13, %cst_129 {dimension_numbers = #tpu.dot_dimension_numbers<[1], [0], [0], [1], [0, 0, 1, 1], [], []>} : vector<16x16xf32>, vector<16x8xf32>, vector<16x8xf32> -> vector<16x8xf32>
    %138 = arith.maximumf %136, %137 : vector<16x8xf32>
    %cst_130 = arith.constant dense<0.000000e+00> : vector<8x8xf32>
    %139 = tpu.matmul %20, %138, %cst_130 {dimension_numbers = #tpu.dot_dimension_numbers<[1], [0], [0], [1], [0, 0, 1, 1], [], []>} : vector<8x16xf32>, vector<16x8xf32>, vector<8x8xf32> -> vector<8x8xf32>
    %cst_131 = arith.constant dense<0.000000e+00> : vector<8x8xf32>
    %140 = tpu.matmul %27, %138, %cst_131 {dimension_numbers = #tpu.dot_dimension_numbers<[1], [0], [0], [1], [0, 0, 1, 1], [], []>} : vector<8x16xf32>, vector<16x8xf32>, vector<8x8xf32> -> vector<8x8xf32>
    %141 = arith.maximumf %139, %140 : vector<8x8xf32>
    %142 = arith.truncf %141 : vector<8x8xf32> to vector<8x8xbf16>
    %c0_132 = arith.constant 0 : index
    %c8 = arith.constant 8 : index
    %c0_133 = arith.constant 0 : index
    %c0_134 = arith.constant 0 : index
    %143 = vector.load %arg2[%c0_132, %c8, %c0_133, %c0_134] : memref<1x12x8x8xbf16, #tpu.memory_space<vmem>>, vector<1x1x8x8xbf16>
    %144 = vector.shape_cast %143 : vector<1x1x8x8xbf16> to vector<8x8xbf16>
    %145 = vector.shape_cast %142 : vector<8x8xbf16> to vector<1x1x8x8xbf16>
    tpu.vector_store %arg2[%c0_132, %c8, %c0_133, %c0_134], %145 {strides = array<i32>} : memref<1x12x8x8xbf16, #tpu.memory_space<vmem>>, vector<1x1x8x8xbf16>,
    %c0_135 = arith.constant 0 : index
    %c7_136 = arith.constant 7 : index
    %c0_137 = arith.constant 0 : index
    %c0_138 = arith.constant 0 : index
    %c0_139 = arith.constant 0 : index
    %146 = vector.load %arg1[%c0_135, %c7_136, %c0_137, %c0_138, %c0_139] : memref<1x8x2x16x16xf32, #tpu.memory_space<vmem>>, vector<1x1x1x16x16xf32>
    %147 = vector.shape_cast %146 : vector<1x1x1x16x16xf32> to vector<16x16xf32>
    %c0_140 = arith.constant 0 : index
    %c7_141 = arith.constant 7 : index
    %c1_142 = arith.constant 1 : index
    %c0_143 = arith.constant 0 : index
    %c0_144 = arith.constant 0 : index
    %148 = vector.load %arg1[%c0_140, %c7_141, %c1_142, %c0_143, %c0_144] : memref<1x8x2x16x16xf32, #tpu.memory_space<vmem>>, vector<1x1x1x16x16xf32>
    %149 = vector.shape_cast %148 : vector<1x1x1x16x16xf32> to vector<16x16xf32>
    %150 = arith.maximumf %147, %149 : vector<16x16xf32>
    %cst_145 = arith.constant dense<0.000000e+00> : vector<16x8xf32>
    %151 = tpu.matmul %150, %6, %cst_145 {dimension_numbers = #tpu.dot_dimension_numbers<[1], [0], [0], [1], [0, 0, 1, 1], [], []>} : vector<16x16xf32>, vector<16x8xf32>, vector<16x8xf32> -> vector<16x8xf32>
    %cst_146 = arith.constant dense<0.000000e+00> : vector<16x8xf32>
    %152 = tpu.matmul %150, %13, %cst_146 {dimension_numbers = #tpu.dot_dimension_numbers<[1], [0], [0], [1], [0, 0, 1, 1], [], []>} : vector<16x16xf32>, vector<16x8xf32>, vector<16x8xf32> -> vector<16x8xf32>
    %153 = arith.maximumf %151, %152 : vector<16x8xf32>
    %cst_147 = arith.constant dense<0.000000e+00> : vector<8x8xf32>
    %154 = tpu.matmul %20, %153, %cst_147 {dimension_numbers = #tpu.dot_dimension_numbers<[1], [0], [0], [1], [0, 0, 1, 1], [], []>} : vector<8x16xf32>, vector<16x8xf32>, vector<8x8xf32> -> vector<8x8xf32>
    %cst_148 = arith.constant dense<0.000000e+00> : vector<8x8xf32>
    %155 = tpu.matmul %27, %153, %cst_148 {dimension_numbers = #tpu.dot_dimension_numbers<[1], [0], [0], [1], [0, 0, 1, 1], [], []>} : vector<8x16xf32>, vector<16x8xf32>, vector<8x8xf32> -> vector<8x8xf32>
    %156 = arith.maximumf %154, %155 : vector<8x8xf32>
    %157 = arith.truncf %156 : vector<8x8xf32> to vector<8x8xbf16>
    %c0_149 = arith.constant 0 : index
    %c9 = arith.constant 9 : index
    %c0_150 = arith.constant 0 : index
    %c0_151 = arith.constant 0 : index
    %158 = vector.load %arg2[%c0_149, %c9, %c0_150, %c0_151] : memref<1x12x8x8xbf16, #tpu.memory_space<vmem>>, vector<1x1x8x8xbf16>
    %159 = vector.shape_cast %158 : vector<1x1x8x8xbf16> to vector<8x8xbf16>
    %160 = vector.shape_cast %157 : vector<8x8xbf16> to vector<1x1x8x8xbf16>
    tpu.vector_store %arg2[%c0_149, %c9, %c0_150, %c0_151], %160 {strides = array<i32>} : memref<1x12x8x8xbf16, #tpu.memory_space<vmem>>, vector<1x1x8x8xbf16>,
    return
  }
  func.func @transform_0(%arg0: i32) -> (i32, i32, i32, i32, i32) {
    %c0_i32 = arith.constant 0 : i32
    %c0_i32_0 = arith.constant 0 : i32
    %c0_i32_1 = arith.constant 0 : i32
    %c0_i32_2 = arith.constant 0 : i32
    %c0_i32_3 = arith.constant 0 : i32
    return %arg0, %c0_i32, %c0_i32_0, %c0_i32_1, %c0_i32_2 : i32, i32, i32, i32, i32
  }
  func.func @transform_1(%arg0: i32) -> (i32, i32, i32, i32) {
    %c0_i32 = arith.constant 0 : i32
    %c0_i32_0 = arith.constant 0 : i32
    %c0_i32_1 = arith.constant 0 : i32
    %c0_i32_2 = arith.constant 0 : i32
    return %arg0, %c0_i32, %c0_i32_0, %c0_i32_1 : i32, i32, i32, i32
  }
}

</mosaic_0001>

<llo_original>
// kernel: tpu_custom_call.1
$region0: #{tpu_custom_call.1}
  #allocation0 [shape = 'u32[]', space=smem, size = 0x4, offset = 0x4, fixed_abs, tag = 'smem constant byte address 0x4 - core index']
  #allocation1 [shape = 'u32[144,128]{1,0:T(1,128)}', space=vmem, size = 0x12000, scoped, tag = 'internal scratch']
  %s0 = inlined_call_operand.hbm [shape: f32[8,8,2,16,16], index: 0, kind: input, shape index: {}]
  %s1 = inlined_call_operand.vmem [shape: bf16[8,12,8,8], index: 1, kind: output, shape index: {}]
  %s2 = sld [smem:[#allocation0]]
  $region41: #{tpu_custom_call.1} parent=0
    _
  %s4 = ssub.s32 1, %s2
  %s5 = scalar_select 0, %s4, %s2
  $region1: #{tpu_custom_call.1} parent=0
    #allocation2 [shape = 'u8[262144]{0}', space=vmem, size = 0x40000, scoped, tag = 'input window, operand 0']
    #allocation3 [shape = 's32[2]{0}', space=sflag, size = 0x8, scoped, tag = 'scoped memory for tpu_custom_call.1']
    %6 = vsyncpa [#allocation3], 0
    %s7 = scalar_lea.sflag [#allocation3], 1
    %8 = vsyncpa %s7, 0
    loop: start=0, step=1, limit=10
    $region2: #{tpu_custom_call.1} parent=1 // loop_pre_header
      _
    $region3: #{tpu_custom_call.1} parent=1 // loop_header
      %s10 = sphi 0, %s14
      %p11 = scmp.ge.s32.totalorder %s10, 10
      %s20 = sphi 0, %s22
      %s23 = sphi 0, %s20
      %s24 = sphi 0, %s23
      %s40 = sphi 0, %s24
      %s46 = sphi 0, %s48
      %s49 = sphi 0, %s46
      %s50 = sphi 0, %s49
      %s66 = sphi 0, %s50
    $region4: #{tpu_custom_call.1} parent=1 // loop_header_branch
      %13 = sbr.rel (%p11) target = $region8
    $region5: #{tpu_custom_call.1} parent=1 // loop_body
      %s15 = ssub.s32 %s10, 1
      %s16 = ssub.s32 %s10, 2
      %s17 = sadd.s32 %s10, 1
      %s18 = ssub.s32 %s10, %s17
      %p19 = scmp.eq.s32.totalorder %s18, 0
      %s21 = sadd.s32 %s20, 1
      %s22 = scalar_select %p19, %s20, %s21
      %p25 = pneg %p19
      %p26 = scmp.eq.s32.totalorder %s10, 7
      %p27 = por %p25, %p26
      %p28 = scmp.ne.s32.totalorder %s20, %s23
      %p29 = scmp.eq.s32.totalorder %s10, 0
      %p30 = por %p28, %p29
      %p31 = scmp.ne.s32.totalorder %s20, %s23
      %p32 = scmp.eq.s32.totalorder %s15, 7
      %p33 = por %p31, %p32
      %p34 = scmp.ne.s32.totalorder %s23, %s24
      %p35 = scmp.eq.s32.totalorder %s15, 0
      %p36 = por %p34, %p35
      %p37 = scmp.ne.s32.totalorder %s23, %s24
      %p38 = scmp.eq.s32.totalorder %s16, 7
      %p39 = por %p37, %p38
      %p41 = scmp.ne.s32.totalorder %s24, %s40
      %p42 = scmp.eq.s32.totalorder %s16, 0
      %p43 = por %p41, %p42
      %s44 = ssub.s32 %s10, %s17
      %p45 = scmp.eq.s32.totalorder %s44, 0
      %s47 = sadd.s32 %s46, 1
      %s48 = scalar_select %p45, %s46, %s47
      %p51 = pneg %p45
      %p52 = scmp.eq.s32.totalorder %s10, 7
      %p53 = por %p51, %p52
      %p54 = scmp.ne.s32.totalorder %s46, %s49
      %p55 = scmp.eq.s32.totalorder %s10, 0
      %p56 = por %p54, %p55
      %p57 = scmp.ne.s32.totalorder %s46, %s49
      %p58 = scmp.eq.s32.totalorder %s15, 7
      %p59 = por %p57, %p58
      %p60 = scmp.ne.s32.totalorder %s49, %s50
      %p61 = scmp.eq.s32.totalorder %s15, 0
      %p62 = por %p60, %p61
      %p63 = scmp.ne.s32.totalorder %s49, %s50
      %p64 = scmp.eq.s32.totalorder %s16, 7
      %p65 = por %p63, %p64
      %p67 = scmp.ne.s32.totalorder %s50, %s66
      %p68 = scmp.eq.s32.totalorder %s16, 0
      %p69 = por %p67, %p68
      %p70 = scmp.le.s32.totalorder 1, %s10
      %p71 = scmp.lt.s32.totalorder %s10, 9
      %p72 = pnand %p70, %p71
      %p73 = pneg %p72
      // Predicated region
      $region9: #{tpu_custom_call.1} parent=5 // pred_check
        _
      $region10: #{tpu_custom_call.1} parent=5 // pred_check_branch
        %75 = sbr.rel (%p72) target = $region12
      $region11: #{tpu_custom_call.1} parent=5 // pred_region
        %s76 = ssub.s32 %s10, 1
      $region12: #{tpu_custom_call.1} parent=5 // pred_fallthru
        _
      %p77 = scmp.lt.s32.totalorder %s10, 8
      // Predicated region
      $region13: #{tpu_custom_call.1} parent=5 // pred_check
        %p78 = pneg %p77
      $region14: #{tpu_custom_call.1} parent=5 // pred_check_branch
        %80 = sbr.rel (%p78) target = $region16
      $region15: #{tpu_custom_call.1} parent=5 // pred_region
        // Predicated region
        $region17: #{tpu_custom_call.1} parent=15 // pred_check
          %p81 = pneg %p30
        $region18: #{tpu_custom_call.1} parent=15 // pred_check_branch
          %83 = sbr.rel (%p81) target = $region20
        $region19: #{tpu_custom_call.1} parent=15 // pred_region
          %s84 = sand.u32 %s20, 1
          %s85 = scalar_lea.sflag [#allocation3], %s84
          %s86 = sand.u32 %s20, 1
          %s87 = smul.addr %s86, 256
          %s88 = scalar_lea.vmem [#allocation2], %s87
          %s90 = ssub.s32 4096, 4096
          %91 = vsyncadd %s85, %s90
          %s92 = smul.addr %s10, 32
          %s93 = smul.addr %s92, 128
          %s94 = scalar_lea.hbm %s0, %s93
          %s95 = sshll.u32 %s88, 4
          %s96 = int_to_ptr.vmem [resolvable:$true] %s95
          %101 = dma.hbm_to_vmem [thread:$0]  %s94, 4096, %s96, %s85, 128, 128, 8
        $region20: #{tpu_custom_call.1} parent=15 // pred_fallthru
          _
      $region16: #{tpu_custom_call.1} parent=5 // pred_fallthru
        _
      %p102 = scmp.le.s32.totalorder 1, %s10
      %p103 = scmp.lt.s32.totalorder %s10, 9
      %p104 = pnand %p102, %p103
      %p105 = pneg %p104
      // Predicated region
      $region21: #{tpu_custom_call.1} parent=5 // pred_check
        _
      $region22: #{tpu_custom_call.1} parent=5 // pred_check_branch
        %107 = sbr.rel (%p104) target = $region24
      $region23: #{tpu_custom_call.1} parent=5 // pred_region
        %s108 = ssub.s32 %s10, 1
        %s109 = sand.u32 %s23, 1
        %s110 = scalar_lea.sflag [#allocation3], %s109
        %s111 = sand.u32 %s23, 1
        %s112 = smul.addr %s111, 256
        %s113 = scalar_lea.vmem [#allocation2], %s112
        // Predicated region
        $region25: #{tpu_custom_call.1} parent=23 // pred_check
          %p114 = pneg %p36
        $region26: #{tpu_custom_call.1} parent=23 // pred_check_branch
          %116 = sbr.rel (%p114) target = $region28
        $region27: #{tpu_custom_call.1} parent=23 // pred_region
          %117 = dma.done %s110, 4096
        $region28: #{tpu_custom_call.1} parent=23 // pred_fallthru
          _
        %s118 = sand.u32 %s23, 1
        %s119 = scalar_lea.sflag [#allocation3], %s118
        %s120 = sand.u32 %s23, 1
        %s121 = smul.addr %s120, 256
        %s122 = scalar_lea.vmem [#allocation2], %s121
        %p123 = pneg %p36
        %p124 = pneg %p33
        %p125 = pneg %p62
        %p126 = pneg %p59
        %p127 = scmp.lt.s32.totalorder %s15, 7
        %s128 = scalar_select %p127, %s15, 7
        %s129 = smul.addr %s128, 12
        %s130 = smul.addr %s129, 4
        %s131 = scalar_lea.vmem %s1, %s130
        %p132 = scmp.lt.s32.totalorder %s15, 7
        %s133 = scalar_select %p132, %s15, 7
        %s134 = smul.addr %s133, 12
        %s135 = smul.addr %s134, 4
        %s136 = scalar_lea.vmem %s1, %s135
        %v138 = vlaneseq
        %v139 = vshrl.u32 %v138, 7
        %v140 = vadd.s32 %v139, 8
        %v141 = vlaneseq
        %v142 = vand.u32 %v141, 127
        %v143 = vmul.u32 %v142, 2
        %vm144 = vcmp.eq.s32.totalorder %v139, %v143
        %vm145 = vcmp.eq.s32.totalorder %v140, %v143
        %v146 = vsel %vm144, 1, 0
        %v147 = vsel %vm145, 1, 0
        %v148 = vcvt.s32.f32 %v146
        %v149 = vcvt.s32.f32 %v147
        %v150 = vadd.s32 %v143, 1
        %vm151 = vcmp.eq.s32.totalorder %v139, %v150
        %vm152 = vcmp.eq.s32.totalorder %v140, %v150
        %v153 = vsel %vm151, 1, 0
        %v154 = vsel %vm152, 1, 0
        %v155 = vcvt.s32.f32 %v153
        %v156 = vcvt.s32.f32 %v154
        %v157 = vmul.u32 %v139, 2
        %vm158 = vcmp.eq.s32.totalorder %v142, %v157
        %v159 = vsel %vm158, 1, 0
        %v160 = vcvt.s32.f32 %v159
        %v161 = vadd.s32 %v157, 1
        %vm162 = vcmp.eq.s32.totalorder %v142, %v161
        %v163 = vsel %vm162, 1, 0
        %v164 = vcvt.s32.f32 %v163
        %vm165 = vcmask 60416
        %166 = vst.msk [vmem:[%s136] sm:$0xf] %vm165, 0
        %s167 = scalar_lea.vmem %s136, 4
        %168 = vst.msk [vmem:[%s167] sm:$0xf] %vm165, 0
        %s169 = scalar_lea.vmem %s136, 40
        %170 = vst.msk [vmem:[%s169] sm:$0xf] %vm165, 0
        %s171 = scalar_lea.vmem %s136, 44
        %172 = vst.msk [vmem:[%s171] sm:$0xf] %vm165, 0
        %v173 = vld [vmem:[%s113] sm:$0xff]
        %v174 = vld [vmem:[%s113 + $0x8] sm:$0xff]
        %s175 = scalar_lea.vmem %s113, 16 [#allocation2]
        %v176 = vld [vmem:[%s175] sm:$0xff]
        %v177 = vld [vmem:[%s175 + $0x8] sm:$0xff]
        %v178 = vmax.f32 %v173, %v176
        %v179 = vmax.f32 %v174, %v177
        %vm180 = vcmask 130048
        %v182 = vsel %vm180, %v178, 0
        %v185 = vsel %vm180, %v179, 0
        %187 = vmatprep.subr.mxu0 0.0
        %188 = vmatpush1.msra.mxu0 %v148
        %189 = vmatprep.subr.mxu0 0.0
        %190 = vmatpush1.msra.mxu0 %v149
        %191 = vmatprep.subr.mxu0 0.0
        %192 = vmatpush1.msra.mxu0 0.0
        %193 = vmatprep.subr.mxu0 0.0
        %194 = vmatpush1.msra.mxu0 0.0
        %195 = vmatprep.subr.mxu0 0.0
        %196 = vmatpush1.msra.mxu0 0.0
        %197 = vmatprep.subr.mxu0 0.0
        %198 = vmatpush1.msra.mxu0 0.0
        %199 = vmatprep.subr.mxu0 0.0
        %200 = vmatpush1.msra.mxu0 0.0
        %201 = vmatprep.subr.mxu0 0.0
        %202 = vmatpush1.msra.mxu0 0.0
        %203 = vmatprep.subr.mxu0 0.0
        %204 = vmatpush1.msra.mxu0 0.0
        %205 = vmatprep.subr.mxu0 0.0
        %206 = vmatpush1.msra.mxu0 0.0
        %207 = vmatprep.subr.mxu0 0.0
        %208 = vmatpush1.msra.mxu0 0.0
        %209 = vmatprep.subr.mxu0 0.0
        %210 = vmatpush1.msra.mxu0 0.0
        %211 = vmatprep.subr.mxu0 0.0
        %212 = vmatpush1.msra.mxu0 0.0
        %213 = vmatprep.subr.mxu0 0.0
        %214 = vmatpush1.msra.mxu0 0.0
        %215 = vmatprep.subr.mxu0 0.0
        %216 = vmatpush1.msra.mxu0 0.0
        %217 = vmatprep.subr.mxu0 0.0
        %218 = vmatpush1.msra.mxu0 0.0
        %219 = vmatprep.subr.mxu0 0.0
        %220 = vmatpush1.msra.mxu0 0.0
        %221 = vmatprep.subr.mxu0 0.0
        %222 = vmatpush1.msra.mxu0 0.0
        %223 = vmatprep.subr.mxu0 0.0
        %224 = vmatpush1.msra.mxu0 0.0
        %225 = vmatprep.subr.mxu0 0.0
        %226 = vmatpush1.msra.mxu0 0.0
        %227 = vmatprep.subr.mxu0 0.0
        %228 = vmatpush1.msra.mxu0 0.0
        %229 = vmatprep.subr.mxu0 0.0
        %230 = vmatpush1.msra.mxu0 0.0
        %231 = vmatprep.subr.mxu0 0.0
        %232 = vmatpush1.msra.mxu0 0.0
        %233 = vmatprep.subr.mxu0 0.0
        %234 = vmatpush1.msra.mxu0 0.0
        %235 = vmatprep.subr.mxu0 0.0
        %236 = vmatpush1.msra.mxu0 0.0
        %237 = vmatprep.subr.mxu0 0.0
        %238 = vmatpush1.msra.mxu0 0.0
        %239 = vmatprep.subr.mxu0 0.0
        %240 = vmatpush1.msra.mxu0 0.0
        %241 = vmatprep.subr.mxu0 0.0
        %242 = vmatpush1.msra.mxu0 0.0
        %243 = vmatprep.subr.mxu0 0.0
        %244 = vmatpush1.msra.mxu0 0.0
        %245 = vmatprep.subr.mxu0 0.0
        %246 = vmatpush1.msra.mxu0 0.0
        %247 = vmatprep.subr.mxu0 0.0
        %248 = vmatpush1.msra.mxu0 0.0
        %249 = vmatprep.subr.mxu0 0.0
        %250 = vmatpush1.msra.mxu0 0.0
        %251 = vmatprep.mubr.f32.mxu0 0.0
        %252 = vmatmul.mubr.f32.gmra.mrb[0].mxu0 %v182
        %v253 = vpop.f32.mrb[0].mxu0
        %v254 = vadd.f32 0.0, %v253
        %v255 = vpop.f32.mrb[0].mxu0
        %256 = vmatprep.mubr.f32.mxu0 0.0
        %257 = vmatmul.mubr.f32.gmra.mrb[0].mxu0 %v185
        %v258 = vpop.f32.mrb[0].mxu0
        %v259 = vadd.f32 0.0, %v258
        %v260 = vpop.f32.mrb[0].mxu0
        %261 = vdwg.mxu0
        %262 = vmatprep.subr.mxu0 0.0
        %263 = vmatpush1.msra.mxu0 %v155
        %264 = vmatprep.subr.mxu0 0.0
        %265 = vmatpush1.msra.mxu0 %v156
        %266 = vmatprep.subr.mxu0 0.0
        %267 = vmatpush1.msra.mxu0 0.0
        %268 = vmatprep.subr.mxu0 0.0
        %269 = vmatpush1.msra.mxu0 0.0
        %270 = vmatprep.subr.mxu0 0.0
        %271 = vmatpush1.msra.mxu0 0.0
        %272 = vmatprep.subr.mxu0 0.0
        %273 = vmatpush1.msra.mxu0 0.0
        %274 = vmatprep.subr.mxu0 0.0
        %275 = vmatpush1.msra.mxu0 0.0
        %276 = vmatprep.subr.mxu0 0.0
        %277 = vmatpush1.msra.mxu0 0.0
        %278 = vmatprep.subr.mxu0 0.0
        %279 = vmatpush1.msra.mxu0 0.0
        %280 = vmatprep.subr.mxu0 0.0
        %281 = vmatpush1.msra.mxu0 0.0
        %282 = vmatprep.subr.mxu0 0.0
        %283 = vmatpush1.msra.mxu0 0.0
        %284 = vmatprep.subr.mxu0 0.0
        %285 = vmatpush1.msra.mxu0 0.0
        %286 = vmatprep.subr.mxu0 0.0
        %287 = vmatpush1.msra.mxu0 0.0
        %288 = vmatprep.subr.mxu0 0.0
        %289 = vmatpush1.msra.mxu0 0.0
        %290 = vmatprep.subr.mxu0 0.0
        %291 = vmatpush1.msra.mxu0 0.0
        %292 = vmatprep.subr.mxu0 0.0
        %293 = vmatpush1.msra.mxu0 0.0
        %294 = vmatprep.subr.mxu0 0.0
        %295 = vmatpush1.msra.mxu0 0.0
        %296 = vmatprep.subr.mxu0 0.0
        %297 = vmatpush1.msra.mxu0 0.0
        %298 = vmatprep.subr.mxu0 0.0
        %299 = vmatpush1.msra.mxu0 0.0
        %300 = vmatprep.subr.mxu0 0.0
        %301 = vmatpush1.msra.mxu0 0.0
        %302 = vmatprep.subr.mxu0 0.0
        %303 = vmatpush1.msra.mxu0 0.0
        %304 = vmatprep.subr.mxu0 0.0
        %305 = vmatpush1.msra.mxu0 0.0
        %306 = vmatprep.subr.mxu0 0.0
        %307 = vmatpush1.msra.mxu0 0.0
        %308 = vmatprep.subr.mxu0 0.0
        %309 = vmatpush1.msra.mxu0 0.0
        %310 = vmatprep.subr.mxu0 0.0
        %311 = vmatpush1.msra.mxu0 0.0
        %312 = vmatprep.subr.mxu0 0.0
        %313 = vmatpush1.msra.mxu0 0.0
        %314 = vmatprep.subr.mxu0 0.0
        %315 = vmatpush1.msra.mxu0 0.0
        %316 = vmatprep.subr.mxu0 0.0
        %317 = vmatpush1.msra.mxu0 0.0
        %318 = vmatprep.subr.mxu0 0.0
        %319 = vmatpush1.msra.mxu0 0.0
        %320 = vmatprep.subr.mxu0 0.0
        %321 = vmatpush1.msra.mxu0 0.0
        %322 = vmatprep.subr.mxu0 0.0
        %323 = vmatpush1.msra.mxu0 0.0
        %324 = vmatprep.subr.mxu0 0.0
        %325 = vmatpush1.msra.mxu0 0.0
        %326 = vmatprep.mubr.f32.mxu0 0.0
        %327 = vmatmul.mubr.f32.gmra.mrb[0].mxu0 %v182
        %v328 = vpop.f32.mrb[0].mxu0
        %v329 = vadd.f32 0.0, %v328
        %v330 = vpop.f32.mrb[0].mxu0
        %331 = vmatprep.mubr.f32.mxu0 0.0
        %332 = vmatmul.mubr.f32.gmra.mrb[0].mxu0 %v185
        %v333 = vpop.f32.mrb[0].mxu0
        %v334 = vadd.f32 0.0, %v333
        %v335 = vpop.f32.mrb[0].mxu0
        %336 = vdwg.mxu0
        %v337 = vmax.f32 %v254, %v329
        %v338 = vmax.f32 %v259, %v334
        %v340 = vsel %vm180, %v160, 0
        %342 = vmatprep.subr.mxu0 0.0
        %343 = vmatpush1.msra.mxu0 %v337
        %344 = vmatprep.subr.mxu0 0.0
        %345 = vmatpush1.msra.mxu0 %v338
        %346 = vmatprep.subr.mxu0 0.0
        %347 = vmatpush1.msra.mxu0 0.0
        %348 = vmatprep.subr.mxu0 0.0
        %349 = vmatpush1.msra.mxu0 0.0
        %350 = vmatprep.subr.mxu0 0.0
        %351 = vmatpush1.msra.mxu0 0.0
        %352 = vmatprep.subr.mxu0 0.0
        %353 = vmatpush1.msra.mxu0 0.0
        %354 = vmatprep.subr.mxu0 0.0
        %355 = vmatpush1.msra.mxu0 0.0
        %356 = vmatprep.subr.mxu0 0.0
        %357 = vmatpush1.msra.mxu0 0.0
        %358 = vmatprep.subr.mxu0 0.0
        %359 = vmatpush1.msra.mxu0 0.0
        %360 = vmatprep.subr.mxu0 0.0
        %361 = vmatpush1.msra.mxu0 0.0
        %362 = vmatprep.subr.mxu0 0.0
        %363 = vmatpush1.msra.mxu0 0.0
        %364 = vmatprep.subr.mxu0 0.0
        %365 = vmatpush1.msra.mxu0 0.0
        %366 = vmatprep.subr.mxu0 0.0
        %367 = vmatpush1.msra.mxu0 0.0
        %368 = vmatprep.subr.mxu0 0.0
        %369 = vmatpush1.msra.mxu0 0.0
        %370 = vmatprep.subr.mxu0 0.0
        %371 = vmatpush1.msra.mxu0 0.0
        %372 = vmatprep.subr.mxu0 0.0
        %373 = vmatpush1.msra.mxu0 0.0
        %374 = vmatprep.subr.mxu0 0.0
        %375 = vmatpush1.msra.mxu0 0.0
        %376 = vmatprep.subr.mxu0 0.0
        %377 = vmatpush1.msra.mxu0 0.0
        %378 = vmatprep.subr.mxu0 0.0
        %379 = vmatpush1.msra.mxu0 0.0
        %380 = vmatprep.subr.mxu0 0.0
        %381 = vmatpush1.msra.mxu0 0.0
        %382 = vmatprep.subr.mxu0 0.0
        %383 = vmatpush1.msra.mxu0 0.0
        %384 = vmatprep.subr.mxu0 0.0
        %385 = vmatpush1.msra.mxu0 0.0
        %386 = vmatprep.subr.mxu0 0.0
        %387 = vmatpush1.msra.mxu0 0.0
        %388 = vmatprep.subr.mxu0 0.0
        %389 = vmatpush1.msra.mxu0 0.0
        %390 = vmatprep.subr.mxu0 0.0
        %391 = vmatpush1.msra.mxu0 0.0
        %392 = vmatprep.subr.mxu0 0.0
        %393 = vmatpush1.msra.mxu0 0.0
        %394 = vmatprep.subr.mxu0 0.0
        %395 = vmatpush1.msra.mxu0 0.0
        %396 = vmatprep.subr.mxu0 0.0
        %397 = vmatpush1.msra.mxu0 0.0
        %398 = vmatprep.subr.mxu0 0.0
        %399 = vmatpush1.msra.mxu0 0.0
        %400 = vmatprep.subr.mxu0 0.0
        %401 = vmatpush1.msra.mxu0 0.0
        %402 = vmatprep.subr.mxu0 0.0
        %403 = vmatpush1.msra.mxu0 0.0
        %404 = vmatprep.subr.mxu0 0.0
        %405 = vmatpush1.msra.mxu0 0.0
        %406 = vmatprep.mubr.f32.mxu0 0.0
        %407 = vmatmul.mubr.f32.gmra.mrb[0].mxu0 %v340
        %v408 = vpop.f32.mrb[0].mxu0
        %v409 = vadd.f32 0.0, %v408
        %v410 = vpop.f32.mrb[0].mxu0
        %411 = vdwg.mxu0
        %v413 = vsel %vm180, %v164, 0
        %415 = vmatprep.subr.mxu0 0.0
        %416 = vmatpush1.msra.mxu0 %v337
        %417 = vmatprep.subr.mxu0 0.0
        %418 = vmatpush1.msra.mxu0 %v338
        %419 = vmatprep.subr.mxu0 0.0
        %420 = vmatpush1.msra.mxu0 0.0
        %421 = vmatprep.subr.mxu0 0.0
        %422 = vmatpush1.msra.mxu0 0.0
        %423 = vmatprep.subr.mxu0 0.0
        %424 = vmatpush1.msra.mxu0 0.0
        %425 = vmatprep.subr.mxu0 0.0
        %426 = vmatpush1.msra.mxu0 0.0
        %427 = vmatprep.subr.mxu0 0.0
        %428 = vmatpush1.msra.mxu0 0.0
        %429 = vmatprep.subr.mxu0 0.0
        %430 = vmatpush1.msra.mxu0 0.0
        %431 = vmatprep.subr.mxu0 0.0
        %432 = vmatpush1.msra.mxu0 0.0
        %433 = vmatprep.subr.mxu0 0.0
        %434 = vmatpush1.msra.mxu0 0.0
        %435 = vmatprep.subr.mxu0 0.0
        %436 = vmatpush1.msra.mxu0 0.0
        %437 = vmatprep.subr.mxu0 0.0
        %438 = vmatpush1.msra.mxu0 0.0
        %439 = vmatprep.subr.mxu0 0.0
        %440 = vmatpush1.msra.mxu0 0.0
        %441 = vmatprep.subr.mxu0 0.0
        %442 = vmatpush1.msra.mxu0 0.0
        %443 = vmatprep.subr.mxu0 0.0
        %444 = vmatpush1.msra.mxu0 0.0
        %445 = vmatprep.subr.mxu0 0.0
        %446 = vmatpush1.msra.mxu0 0.0
        %447 = vmatprep.subr.mxu0 0.0
        %448 = vmatpush1.msra.mxu0 0.0
        %449 = vmatprep.subr.mxu0 0.0
        %450 = vmatpush1.msra.mxu0 0.0
        %451 = vmatprep.subr.mxu0 0.0
        %452 = vmatpush1.msra.mxu0 0.0
        %453 = vmatprep.subr.mxu0 0.0
        %454 = vmatpush1.msra.mxu0 0.0
        %455 = vmatprep.subr.mxu0 0.0
        %456 = vmatpush1.msra.mxu0 0.0
        %457 = vmatprep.subr.mxu0 0.0
        %458 = vmatpush1.msra.mxu0 0.0
        %459 = vmatprep.subr.mxu0 0.0
        %460 = vmatpush1.msra.mxu0 0.0
        %461 = vmatprep.subr.mxu0 0.0
        %462 = vmatpush1.msra.mxu0 0.0
        %463 = vmatprep.subr.mxu0 0.0
        %464 = vmatpush1.msra.mxu0 0.0
        %465 = vmatprep.subr.mxu0 0.0
        %466 = vmatpush1.msra.mxu0 0.0
        %467 = vmatprep.subr.mxu0 0.0
        %468 = vmatpush1.msra.mxu0 0.0
        %469 = vmatprep.subr.mxu0 0.0
        %470 = vmatpush1.msra.mxu0 0.0
        %471 = vmatprep.subr.mxu0 0.0
        %472 = vmatpush1.msra.mxu0 0.0
        %473 = vmatprep.subr.mxu0 0.0
        %474 = vmatpush1.msra.mxu0 0.0
        %475 = vmatprep.subr.mxu0 0.0
        %476 = vmatpush1.msra.mxu0 0.0
        %477 = vmatprep.subr.mxu0 0.0
        %478 = vmatpush1.msra.mxu0 0.0
        %479 = vmatprep.mubr.f32.mxu0 0.0
        %480 = vmatmul.mubr.f32.gmra.mrb[0].mxu0 %v413
        %v481 = vpop.f32.mrb[0].mxu0
        %v482 = vadd.f32 0.0, %v481
        %v483 = vpop.f32.mrb[0].mxu0
        %484 = vdwg.mxu0
        %v485 = vmax.f32 %v409, %v482
        %v486 = vpack.c.bf16 %v485, %v485
        %s487 = scalar_lea.vmem %s136, 8
        %488 = vst.msk [vmem:[%s487] sm:$0xf] %vm165, %v486
        %s489 = scalar_lea.vmem %s113, 32 [#allocation2]
        %v490 = vld [vmem:[%s489] sm:$0xff]
        %v491 = vld [vmem:[%s489 + $0x8] sm:$0xff]
        %s492 = scalar_lea.vmem %s113, 48 [#allocation2]
        %v493 = vld [vmem:[%s492] sm:$0xff]
        %v494 = vld [vmem:[%s492 + $0x8] sm:$0xff]
        %v495 = vmax.f32 %v490, %v493
        %v496 = vmax.f32 %v491, %v494
        %v498 = vsel %vm180, %v495, 0
        %v501 = vsel %vm180, %v496, 0
        %503 = vmatprep.subr.mxu0 0.0
        %504 = vmatpush1.msra.mxu0 %v148
        %505 = vmatprep.subr.mxu0 0.0
        %506 = vmatpush1.msra.mxu0 %v149
        %507 = vmatprep.subr.mxu0 0.0
        %508 = vmatpush1.msra.mxu0 0.0
        %509 = vmatprep.subr.mxu0 0.0
        %510 = vmatpush1.msra.mxu0 0.0
        %511 = vmatprep.subr.mxu0 0.0
        %512 = vmatpush1.msra.mxu0 0.0
        %513 = vmatprep.subr.mxu0 0.0
        %514 = vmatpush1.msra.mxu0 0.0
        %515 = vmatprep.subr.mxu0 0.0
        %516 = vmatpush1.msra.mxu0 0.0
        %517 = vmatprep.subr.mxu0 0.0
        %518 = vmatpush1.msra.mxu0 0.0
        %519 = vmatprep.subr.mxu0 0.0
        %520 = vmatpush1.msra.mxu0 0.0
        %521 = vmatprep.subr.mxu0 0.0
        %522 = vmatpush1.msra.mxu0 0.0
        %523 = vmatprep.subr.mxu0 0.0
        %524 = vmatpush1.msra.mxu0 0.0
        %525 = vmatprep.subr.mxu0 0.0
        %526 = vmatpush1.msra.mxu0 0.0
        %527 = vmatprep.subr.mxu0 0.0
        %528 = vmatpush1.msra.mxu0 0.0
        %529 = vmatprep.subr.mxu0 0.0
        %530 = vmatpush1.msra.mxu0 0.0
        %531 = vmatprep.subr.mxu0 0.0
        %532 = vmatpush1.msra.mxu0 0.0
        %533 = vmatprep.subr.mxu0 0.0
        %534 = vmatpush1.msra.mxu0 0.0
        %535 = vmatprep.subr.mxu0 0.0
        %536 = vmatpush1.msra.mxu0 0.0
        %537 = vmatprep.subr.mxu0 0.0
        %538 = vmatpush1.msra.mxu0 0.0
        %539 = vmatprep.subr.mxu0 0.0
        %540 = vmatpush1.msra.mxu0 0.0
        %541 = vmatprep.subr.mxu0 0.0
        %542 = vmatpush1.msra.mxu0 0.0
        %543 = vmatprep.subr.mxu0 0.0
        %544 = vmatpush1.msra.mxu0 0.0
        %545 = vmatprep.subr.mxu0 0.0
        %546 = vmatpush1.msra.mxu0 0.0
        %547 = vmatprep.subr.mxu0 0.0
        %548 = vmatpush1.msra.mxu0 0.0
        %549 = vmatprep.subr.mxu0 0.0
        %550 = vmatpush1.msra.mxu0 0.0
        %551 = vmatprep.subr.mxu0 0.0
        %552 = vmatpush1.msra.mxu0 0.0
        %553 = vmatprep.subr.mxu0 0.0
        %554 = vmatpush1.msra.mxu0 0.0
        %555 = vmatprep.subr.mxu0 0.0
        %556 = vmatpush1.msra.mxu0 0.0
        %557 = vmatprep.subr.mxu0 0.0
        %558 = vmatpush1.msra.mxu0 0.0
        %559 = vmatprep.subr.mxu0 0.0
        %560 = vmatpush1.msra.mxu0 0.0
        %561 = vmatprep.subr.mxu0 0.0
        %562 = vmatpush1.msra.mxu0 0.0
        %563 = vmatprep.subr.mxu0 0.0
        %564 = vmatpush1.msra.mxu0 0.0
        %565 = vmatprep.subr.mxu0 0.0
        %566 = vmatpush1.msra.mxu0 0.0
        %567 = vmatprep.mubr.f32.mxu0 0.0
        %568 = vmatmul.mubr.f32.gmra.mrb[0].mxu0 %v498
        %v569 = vpop.f32.mrb[0].mxu0
        %v570 = vadd.f32 0.0, %v569
        %v571 = vpop.f32.mrb[0].mxu0
        %572 = vmatprep.mubr.f32.mxu0 0.0
        %573 = vmatmul.mubr.f32.gmra.mrb[0].mxu0 %v501
        %v574 = vpop.f32.mrb[0].mxu0
        %v575 = vadd.f32 0.0, %v574
        %v576 = vpop.f32.mrb[0].mxu0
        %577 = vdwg.mxu0
        %578 = vmatprep.subr.mxu0 0.0
        %579 = vmatpush1.msra.mxu0 %v155
        %580 = vmatprep.subr.mxu0 0.0
        %581 = vmatpush1.msra.mxu0 %v156
        %582 = vmatprep.subr.mxu0 0.0
        %583 = vmatpush1.msra.mxu0 0.0
        %584 = vmatprep.subr.mxu0 0.0
        %585 = vmatpush1.msra.mxu0 0.0
        %586 = vmatprep.subr.mxu0 0.0
        %587 = vmatpush1.msra.mxu0 0.0
        %588 = vmatprep.subr.mxu0 0.0
        %589 = vmatpush1.msra.mxu0 0.0
        %590 = vmatprep.subr.mxu0 0.0
        %591 = vmatpush1.msra.mxu0 0.0
        %592 = vmatprep.subr.mxu0 0.0
        %593 = vmatpush1.msra.mxu0 0.0
        %594 = vmatprep.subr.mxu0 0.0
        %595 = vmatpush1.msra.mxu0 0.0
        %596 = vmatprep.subr.mxu0 0.0
        %597 = vmatpush1.msra.mxu0 0.0
        %598 = vmatprep.subr.mxu0 0.0
        %599 = vmatpush1.msra.mxu0 0.0
        %600 = vmatprep.subr.mxu0 0.0
        %601 = vmatpush1.msra.mxu0 0.0
        %602 = vmatprep.subr.mxu0 0.0
        %603 = vmatpush1.msra.mxu0 0.0
        %604 = vmatprep.subr.mxu0 0.0
        %605 = vmatpush1.msra.mxu0 0.0
        %606 = vmatprep.subr.mxu0 0.0
        %607 = vmatpush1.msra.mxu0 0.0
        %608 = vmatprep.subr.mxu0 0.0
        %609 = vmatpush1.msra.mxu0 0.0
        %610 = vmatprep.subr.mxu0 0.0
        %611 = vmatpush1.msra.mxu0 0.0
        %612 = vmatprep.subr.mxu0 0.0
        %613 = vmatpush1.msra.mxu0 0.0
        %614 = vmatprep.subr.mxu0 0.0
        %615 = vmatpush1.msra.mxu0 0.0
        %616 = vmatprep.subr.mxu0 0.0
        %617 = vmatpush1.msra.mxu0 0.0
        %618 = vmatprep.subr.mxu0 0.0
        %619 = vmatpush1.msra.mxu0 0.0
        %620 = vmatprep.subr.mxu0 0.0
        %621 = vmatpush1.msra.mxu0 0.0
        %622 = vmatprep.subr.mxu0 0.0
        %623 = vmatpush1.msra.mxu0 0.0
        %624 = vmatprep.subr.mxu0 0.0
        %625 = vmatpush1.msra.mxu0 0.0
        %626 = vmatprep.subr.mxu0 0.0
        %627 = vmatpush1.msra.mxu0 0.0
        %628 = vmatprep.subr.mxu0 0.0
        %629 = vmatpush1.msra.mxu0 0.0
        %630 = vmatprep.subr.mxu0 0.0
        %631 = vmatpush1.msra.mxu0 0.0
        %632 = vmatprep.subr.mxu0 0.0
        %633 = vmatpush1.msra.mxu0 0.0
        %634 = vmatprep.subr.mxu0 0.0
        %635 = vmatpush1.msra.mxu0 0.0
        %636 = vmatprep.subr.mxu0 0.0
        %637 = vmatpush1.msra.mxu0 0.0
        %638 = vmatprep.subr.mxu0 0.0
        %639 = vmatpush1.msra.mxu0 0.0
        %640 = vmatprep.subr.mxu0 0.0
        %641 = vmatpush1.msra.mxu0 0.0
        %642 = vmatprep.mubr.f32.mxu0 0.0
        %643 = vmatmul.mubr.f32.gmra.mrb[0].mxu0 %v498
        %v644 = vpop.f32.mrb[0].mxu0
        %v645 = vadd.f32 0.0, %v644
        %v646 = vpop.f32.mrb[0].mxu0
        %647 = vmatprep.mubr.f32.mxu0 0.0
        %648 = vmatmul.mubr.f32.gmra.mrb[0].mxu0 %v501
        %v649 = vpop.f32.mrb[0].mxu0
        %v650 = vadd.f32 0.0, %v649
        %v651 = vpop.f32.mrb[0].mxu0
        %652 = vdwg.mxu0
        %v653 = vmax.f32 %v570, %v645
        %v654 = vmax.f32 %v575, %v650
        %655 = vmatprep.subr.mxu0 0.0
        %656 = vmatpush1.msra.mxu0 %v653
        %657 = vmatprep.subr.mxu0 0.0
        %658 = vmatpush1.msra.mxu0 %v654
        %659 = vmatprep.subr.mxu0 0.0
        %660 = vmatpush1.msra.mxu0 0.0
        %661 = vmatprep.subr.mxu0 0.0
        %662 = vmatpush1.msra.mxu0 0.0
        %663 = vmatprep.subr.mxu0 0.0
        %664 = vmatpush1.msra.mxu0 0.0
        %665 = vmatprep.subr.mxu0 0.0
        %666 = vmatpush1.msra.mxu0 0.0
        %667 = vmatprep.subr.mxu0 0.0
        %668 = vmatpush1.msra.mxu0 0.0
        %669 = vmatprep.subr.mxu0 0.0
        %670 = vmatpush1.msra.mxu0 0.0
        %671 = vmatprep.subr.mxu0 0.0
        %672 = vmatpush1.msra.mxu0 0.0
        %673 = vmatprep.subr.mxu0 0.0
        %674 = vmatpush1.msra.mxu0 0.0
        %675 = vmatprep.subr.mxu0 0.0
        %676 = vmatpush1.msra.mxu0 0.0
        %677 = vmatprep.subr.mxu0 0.0
        %678 = vmatpush1.msra.mxu0 0.0
        %679 = vmatprep.subr.mxu0 0.0
        %680 = vmatpush1.msra.mxu0 0.0
        %681 = vmatprep.subr.mxu0 0.0
        %682 = vmatpush1.msra.mxu0 0.0
        %683 = vmatprep.subr.mxu0 0.0
        %684 = vmatpush1.msra.mxu0 0.0
        %685 = vmatprep.subr.mxu0 0.0
        %686 = vmatpush1.msra.mxu0 0.0
        %687 = vmatprep.subr.mxu0 0.0
        %688 = vmatpush1.msra.mxu0 0.0
        %689 = vmatprep.subr.mxu0 0.0
        %690 = vmatpush1.msra.mxu0 0.0
        %691 = vmatprep.subr.mxu0 0.0
        %692 = vmatpush1.msra.mxu0 0.0
        %693 = vmatprep.subr.mxu0 0.0
        %694 = vmatpush1.msra.mxu0 0.0
        %695 = vmatprep.subr.mxu0 0.0
        %696 = vmatpush1.msra.mxu0 0.0
        %697 = vmatprep.subr.mxu0 0.0
        %698 = vmatpush1.msra.mxu0 0.0
        %699 = vmatprep.subr.mxu0 0.0
        %700 = vmatpush1.msra.mxu0 0.0
        %701 = vmatprep.subr.mxu0 0.0
        %702 = vmatpush1.msra.mxu0 0.0
        %703 = vmatprep.subr.mxu0 0.0
        %704 = vmatpush1.msra.mxu0 0.0
        %705 = vmatprep.subr.mxu0 0.0
        %706 = vmatpush1.msra.mxu0 0.0
        %707 = vmatprep.subr.mxu0 0.0
        %708 = vmatpush1.msra.mxu0 0.0
        %709 = vmatprep.subr.mxu0 0.0
        %710 = vmatpush1.msra.mxu0 0.0
        %711 = vmatprep.subr.mxu0 0.0
        %712 = vmatpush1.msra.mxu0 0.0
        %713 = vmatprep.subr.mxu0 0.0
        %714 = vmatpush1.msra.mxu0 0.0
        %715 = vmatprep.subr.mxu0 0.0
        %716 = vmatpush1.msra.mxu0 0.0
        %717 = vmatprep.subr.mxu0 0.0
        %718 = vmatpush1.msra.mxu0 0.0
        %719 = vmatprep.mubr.f32.mxu0 0.0
        %720 = vmatmul.mubr.f32.gmra.mrb[0].mxu0 %v340
        %v721 = vpop.f32.mrb[0].mxu0
        %v722 = vadd.f32 0.0, %v721
        %v723 = vpop.f32.mrb[0].mxu0
        %724 = vdwg.mxu0
        %725 = vmatprep.subr.mxu0 0.0
        %726 = vmatpush1.msra.mxu0 %v653
        %727 = vmatprep.subr.mxu0 0.0
        %728 = vmatpush1.msra.mxu0 %v654
        %729 = vmatprep.subr.mxu0 0.0
        %730 = vmatpush1.msra.mxu0 0.0
        %731 = vmatprep.subr.mxu0 0.0
        %732 = vmatpush1.msra.mxu0 0.0
        %733 = vmatprep.subr.mxu0 0.0
        %734 = vmatpush1.msra.mxu0 0.0
        %735 = vmatprep.subr.mxu0 0.0
        %736 = vmatpush1.msra.mxu0 0.0
        %737 = vmatprep.subr.mxu0 0.0
        %738 = vmatpush1.msra.mxu0 0.0
        %739 = vmatprep.subr.mxu0 0.0
        %740 = vmatpush1.msra.mxu0 0.0
        %741 = vmatprep.subr.mxu0 0.0
        %742 = vmatpush1.msra.mxu0 0.0
        %743 = vmatprep.subr.mxu0 0.0
        %744 = vmatpush1.msra.mxu0 0.0
        %745 = vmatprep.subr.mxu0 0.0
        %746 = vmatpush1.msra.mxu0 0.0
        %747 = vmatprep.subr.mxu0 0.0
        %748 = vmatpush1.msra.mxu0 0.0
        %749 = vmatprep.subr.mxu0 0.0
        %750 = vmatpush1.msra.mxu0 0.0
        %751 = vmatprep.subr.mxu0 0.0
        %752 = vmatpush1.msra.mxu0 0.0
        %753 = vmatprep.subr.mxu0 0.0
        %754 = vmatpush1.msra.mxu0 0.0
        %755 = vmatprep.subr.mxu0 0.0
        %756 = vmatpush1.msra.mxu0 0.0
        %757 = vmatprep.subr.mxu0 0.0
        %758 = vmatpush1.msra.mxu0 0.0
        %759 = vmatprep.subr.mxu0 0.0
        %760 = vmatpush1.msra.mxu0 0.0
        %761 = vmatprep.subr.mxu0 0.0
        %762 = vmatpush1.msra.mxu0 0.0
        %763 = vmatprep.subr.mxu0 0.0
        %764 = vmatpush1.msra.mxu0 0.0
        %765 = vmatprep.subr.mxu0 0.0
        %766 = vmatpush1.msra.mxu0 0.0
        %767 = vmatprep.subr.mxu0 0.0
        %768 = vmatpush1.msra.mxu0 0.0
        %769 = vmatprep.subr.mxu0 0.0
        %770 = vmatpush1.msra.mxu0 0.0
        %771 = vmatprep.subr.mxu0 0.0
        %772 = vmatpush1.msra.mxu0 0.0
        %773 = vmatprep.subr.mxu0 0.0
        %774 = vmatpush1.msra.mxu0 0.0
        %775 = vmatprep.subr.mxu0 0.0
        %776 = vmatpush1.msra.mxu0 0.0
        %777 = vmatprep.subr.mxu0 0.0
        %778 = vmatpush1.msra.mxu0 0.0
        %779 = vmatprep.subr.mxu0 0.0
        %780 = vmatpush1.msra.mxu0 0.0
        %781 = vmatprep.subr.mxu0 0.0
        %782 = vmatpush1.msra.mxu0 0.0
        %783 = vmatprep.subr.mxu0 0.0
        %784 = vmatpush1.msra.mxu0 0.0
        %785 = vmatprep.subr.mxu0 0.0
        %786 = vmatpush1.msra.mxu0 0.0
        %787 = vmatprep.subr.mxu0 0.0
        %788 = vmatpush1.msra.mxu0 0.0
        %789 = vmatprep.mubr.f32.mxu0 0.0
        %790 = vmatmul.mubr.f32.gmra.mrb[0].mxu0 %v413
        %v791 = vpop.f32.mrb[0].mxu0
        %v792 = vadd.f32 0.0, %v791
        %v793 = vpop.f32.mrb[0].mxu0
        %794 = vdwg.mxu0
        %v795 = vmax.f32 %v722, %v792
        %v796 = vpack.c.bf16 %v795, %v795
        %s797 = scalar_lea.vmem %s136, 12
        %798 = vst.msk [vmem:[%s797] sm:$0xf] %vm165, %v796
        %s799 = scalar_lea.vmem %s113, 64 [#allocation2]
        %v800 = vld [vmem:[%s799] sm:$0xff]
        %v801 = vld [vmem:[%s799 + $0x8] sm:$0xff]
        %s802 = scalar_lea.vmem %s113, 80 [#allocation2]
        %v803 = vld [vmem:[%s802] sm:$0xff]
        %v804 = vld [vmem:[%s802 + $0x8] sm:$0xff]
        %v805 = vmax.f32 %v800, %v803
        %v806 = vmax.f32 %v801, %v804
        %v808 = vsel %vm180, %v805, 0
        %v811 = vsel %vm180, %v806, 0
        %813 = vmatprep.subr.mxu0 0.0
        %814 = vmatpush1.msra.mxu0 %v148
        %815 = vmatprep.subr.mxu0 0.0
        %816 = vmatpush1.msra.mxu0 %v149
        %817 = vmatprep.subr.mxu0 0.0
        %818 = vmatpush1.msra.mxu0 0.0
        %819 = vmatprep.subr.mxu0 0.0
        %820 = vmatpush1.msra.mxu0 0.0
        %821 = vmatprep.subr.mxu0 0.0
        %822 = vmatpush1.msra.mxu0 0.0
        %823 = vmatprep.subr.mxu0 0.0
        %824 = vmatpush1.msra.mxu0 0.0
        %825 = vmatprep.subr.mxu0 0.0
        %826 = vmatpush1.msra.mxu0 0.0
        %827 = vmatprep.subr.mxu0 0.0
        %828 = vmatpush1.msra.mxu0 0.0
        %829 = vmatprep.subr.mxu0 0.0
        %830 = vmatpush1.msra.mxu0 0.0
        %831 = vmatprep.subr.mxu0 0.0
        %832 = vmatpush1.msra.mxu0 0.0
        %833 = vmatprep.subr.mxu0 0.0
        %834 = vmatpush1.msra.mxu0 0.0
        %835 = vmatprep.subr.mxu0 0.0
        %836 = vmatpush1.msra.mxu0 0.0
        %837 = vmatprep.subr.mxu0 0.0
        %838 = vmatpush1.msra.mxu0 0.0
        %839 = vmatprep.subr.mxu0 0.0
        %840 = vmatpush1.msra.mxu0 0.0
        %841 = vmatprep.subr.mxu0 0.0
        %842 = vmatpush1.msra.mxu0 0.0
        %843 = vmatprep.subr.mxu0 0.0
        %844 = vmatpush1.msra.mxu0 0.0
        %845 = vmatprep.subr.mxu0 0.0
        %846 = vmatpush1.msra.mxu0 0.0
        %847 = vmatprep.subr.mxu0 0.0
        %848 = vmatpush1.msra.mxu0 0.0
        %849 = vmatprep.subr.mxu0 0.0
        %850 = vmatpush1.msra.mxu0 0.0
        %851 = vmatprep.subr.mxu0 0.0
        %852 = vmatpush1.msra.mxu0 0.0
        %853 = vmatprep.subr.mxu0 0.0
        %854 = vmatpush1.msra.mxu0 0.0
        %855 = vmatprep.subr.mxu0 0.0
        %856 = vmatpush1.msra.mxu0 0.0
        %857 = vmatprep.subr.mxu0 0.0
        %858 = vmatpush1.msra.mxu0 0.0
        %859 = vmatprep.subr.mxu0 0.0
        %860 = vmatpush1.msra.mxu0 0.0
        %861 = vmatprep.subr.mxu0 0.0
        %862 = vmatpush1.msra.mxu0 0.0
        %863 = vmatprep.subr.mxu0 0.0
        %864 = vmatpush1.msra.mxu0 0.0
        %865 = vmatprep.subr.mxu0 0.0
        %866 = vmatpush1.msra.mxu0 0.0
        %867 = vmatprep.subr.mxu0 0.0
        %868 = vmatpush1.msra.mxu0 0.0
        %869 = vmatprep.subr.mxu0 0.0
        %870 = vmatpush1.msra.mxu0 0.0
        %871 = vmatprep.subr.mxu0 0.0
        %872 = vmatpush1.msra.mxu0 0.0
        %873 = vmatprep.subr.mxu0 0.0
        %874 = vmatpush1.msra.mxu0 0.0
        %875 = vmatprep.subr.mxu0 0.0
        %876 = vmatpush1.msra.mxu0 0.0
        %877 = vmatprep.mubr.f32.mxu0 0.0
        %878 = vmatmul.mubr.f32.gmra.mrb[0].mxu0 %v808
        %v879 = vpop.f32.mrb[0].mxu0
        %v880 = vadd.f32 0.0, %v879
        %v881 = vpop.f32.mrb[0].mxu0
        %882 = vmatprep.mubr.f32.mxu0 0.0
        %883 = vmatmul.mubr.f32.gmra.mrb[0].mxu0 %v811
        %v884 = vpop.f32.mrb[0].mxu0
        %v885 = vadd.f32 0.0, %v884
        %v886 = vpop.f32.mrb[0].mxu0
        %887 = vdwg.mxu0
        %888 = vmatprep.subr.mxu0 0.0
        %889 = vmatpush1.msra.mxu0 %v155
        %890 = vmatprep.subr.mxu0 0.0
        %891 = vmatpush1.msra.mxu0 %v156
        %892 = vmatprep.subr.mxu0 0.0
        %893 = vmatpush1.msra.mxu0 0.0
        %894 = vmatprep.subr.mxu0 0.0
        %895 = vmatpush1.msra.mxu0 0.0
        %896 = vmatprep.subr.mxu0 0.0
        %897 = vmatpush1.msra.mxu0 0.0
        %898 = vmatprep.subr.mxu0 0.0
        %899 = vmatpush1.msra.mxu0 0.0
        %900 = vmatprep.subr.mxu0 0.0
        %901 = vmatpush1.msra.mxu0 0.0
        %902 = vmatprep.subr.mxu0 0.0
        %903 = vmatpush1.msra.mxu0 0.0
        %904 = vmatprep.subr.mxu0 0.0
        %905 = vmatpush1.msra.mxu0 0.0
        %906 = vmatprep.subr.mxu0 0.0
        %907 = vmatpush1.msra.mxu0 0.0
        %908 = vmatprep.subr.mxu0 0.0
        %909 = vmatpush1.msra.mxu0 0.0
        %910 = vmatprep.subr.mxu0 0.0
        %911 = vmatpush1.msra.mxu0 0.0
        %912 = vmatprep.subr.mxu0 0.0
        %913 = vmatpush1.msra.mxu0 0.0
        %914 = vmatprep.subr.mxu0 0.0
        %915 = vmatpush1.msra.mxu0 0.0
        %916 = vmatprep.subr.mxu0 0.0
        %917 = vmatpush1.msra.mxu0 0.0
        %918 = vmatprep.subr.mxu0 0.0
        %919 = vmatpush1.msra.mxu0 0.0
        %920 = vmatprep.subr.mxu0 0.0
        %921 = vmatpush1.msra.mxu0 0.0
        %922 = vmatprep.subr.mxu0 0.0
        %923 = vmatpush1.msra.mxu0 0.0
        %924 = vmatprep.subr.mxu0 0.0
        %925 = vmatpush1.msra.mxu0 0.0
        %926 = vmatprep.subr.mxu0 0.0
        %927 = vmatpush1.msra.mxu0 0.0
        %928 = vmatprep.subr.mxu0 0.0
        %929 = vmatpush1.msra.mxu0 0.0
        %930 = vmatprep.subr.mxu0 0.0
        %931 = vmatpush1.msra.mxu0 0.0
        %932 = vmatprep.subr.mxu0 0.0
        %933 = vmatpush1.msra.mxu0 0.0
        %934 = vmatprep.subr.mxu0 0.0
        %935 = vmatpush1.msra.mxu0 0.0
        %936 = vmatprep.subr.mxu0 0.0
        %937 = vmatpush1.msra.mxu0 0.0
        %938 = vmatprep.subr.mxu0 0.0
        %939 = vmatpush1.msra.mxu0 0.0
        %940 = vmatprep.subr.mxu0 0.0
        %941 = vmatpush1.msra.mxu0 0.0
        %942 = vmatprep.subr.mxu0 0.0
        %943 = vmatpush1.msra.mxu0 0.0
        %944 = vmatprep.subr.mxu0 0.0
        %945 = vmatpush1.msra.mxu0 0.0
        %946 = vmatprep.subr.mxu0 0.0
        %947 = vmatpush1.msra.mxu0 0.0
        %948 = vmatprep.subr.mxu0 0.0
        %949 = vmatpush1.msra.mxu0 0.0
        %950 = vmatprep.subr.mxu0 0.0
        %951 = vmatpush1.msra.mxu0 0.0
        %952 = vmatprep.mubr.f32.mxu0 0.0
        %953 = vmatmul.mubr.f32.gmra.mrb[0].mxu0 %v808
        %v954 = vpop.f32.mrb[0].mxu0
        %v955 = vadd.f32 0.0, %v954
        %v956 = vpop.f32.mrb[0].mxu0
        %957 = vmatprep.mubr.f32.mxu0 0.0
        %958 = vmatmul.mubr.f32.gmra.mrb[0].mxu0 %v811
        %v959 = vpop.f32.mrb[0].mxu0
        %v960 = vadd.f32 0.0, %v959
        %v961 = vpop.f32.mrb[0].mxu0
        %962 = vdwg.mxu0
        %v963 = vmax.f32 %v880, %v955
        %v964 = vmax.f32 %v885, %v960
        %965 = vmatprep.subr.mxu0 0.0
        %966 = vmatpush1.msra.mxu0 %v963
        %967 = vmatprep.subr.mxu0 0.0
        %968 = vmatpush1.msra.mxu0 %v964
        %969 = vmatprep.subr.mxu0 0.0
        %970 = vmatpush1.msra.mxu0 0.0
        %971 = vmatprep.subr.mxu0 0.0
        %972 = vmatpush1.msra.mxu0 0.0
        %973 = vmatprep.subr.mxu0 0.0
        %974 = vmatpush1.msra.mxu0 0.0
        %975 = vmatprep.subr.mxu0 0.0
        %976 = vmatpush1.msra.mxu0 0.0
        %977 = vmatprep.subr.mxu0 0.0
        %978 = vmatpush1.msra.mxu0 0.0
        %979 = vmatprep.subr.mxu0 0.0
        %980 = vmatpush1.msra.mxu0 0.0
        %981 = vmatprep.subr.mxu0 0.0
        %982 = vmatpush1.msra.mxu0 0.0
        %983 = vmatprep.subr.mxu0 0.0
        %984 = vmatpush1.msra.mxu0 0.0
        %985 = vmatprep.subr.mxu0 0.0
        %986 = vmatpush1.msra.mxu0 0.0
        %987 = vmatprep.subr.mxu0 0.0
        %988 = vmatpush1.msra.mxu0 0.0
        %989 = vmatprep.subr.mxu0 0.0
        %990 = vmatpush1.msra.mxu0 0.0
        %991 = vmatprep.subr.mxu0 0.0
        %992 = vmatpush1.msra.mxu0 0.0
        %993 = vmatprep.subr.mxu0 0.0
        %994 = vmatpush1.msra.mxu0 0.0
        %995 = vmatprep.subr.mxu0 0.0
        %996 = vmatpush1.msra.mxu0 0.0
        %997 = vmatprep.subr.mxu0 0.0
        %998 = vmatpush1.msra.mxu0 0.0
        %999 = vmatprep.subr.mxu0 0.0
        %1000 = vmatpush1.msra.mxu0 0.0
        %1001 = vmatprep.subr.mxu0 0.0
        %1002 = vmatpush1.msra.mxu0 0.0
        %1003 = vmatprep.subr.mxu0 0.0
        %1004 = vmatpush1.msra.mxu0 0.0
        %1005 = vmatprep.subr.mxu0 0.0
        %1006 = vmatpush1.msra.mxu0 0.0
        %1007 = vmatprep.subr.mxu0 0.0
        %1008 = vmatpush1.msra.mxu0 0.0
        %1009 = vmatprep.subr.mxu0 0.0
        %1010 = vmatpush1.msra.mxu0 0.0
        %1011 = vmatprep.subr.mxu0 0.0
        %1012 = vmatpush1.msra.mxu0 0.0
        %1013 = vmatprep.subr.mxu0 0.0
        %1014 = vmatpush1.msra.mxu0 0.0
        %1015 = vmatprep.subr.mxu0 0.0
        %1016 = vmatpush1.msra.mxu0 0.0
        %1017 = vmatprep.subr.mxu0 0.0
        %1018 = vmatpush1.msra.mxu0 0.0
        %1019 = vmatprep.subr.mxu0 0.0
        %1020 = vmatpush1.msra.mxu0 0.0
        %1021 = vmatprep.subr.mxu0 0.0
        %1022 = vmatpush1.msra.mxu0 0.0
        %1023 = vmatprep.subr.mxu0 0.0
        %1024 = vmatpush1.msra.mxu0 0.0
        %1025 = vmatprep.subr.mxu0 0.0
        %1026 = vmatpush1.msra.mxu0 0.0
        %1027 = vmatprep.subr.mxu0 0.0
        %1028 = vmatpush1.msra.mxu0 0.0
        %1029 = vmatprep.mubr.f32.mxu0 0.0
        %1030 = vmatmul.mubr.f32.gmra.mrb[0].mxu0 %v340
        %v1031 = vpop.f32.mrb[0].mxu0
        %v1032 = vadd.f32 0.0, %v1031
        %v1033 = vpop.f32.mrb[0].mxu0
        %1034 = vdwg.mxu0
        %1035 = vmatprep.subr.mxu0 0.0
        %1036 = vmatpush1.msra.mxu0 %v963
        %1037 = vmatprep.subr.mxu0 0.0
        %1038 = vmatpush1.msra.mxu0 %v964
        %1039 = vmatprep.subr.mxu0 0.0
        %1040 = vmatpush1.msra.mxu0 0.0
        %1041 = vmatprep.subr.mxu0 0.0
        %1042 = vmatpush1.msra.mxu0 0.0
        %1043 = vmatprep.subr.mxu0 0.0
        %1044 = vmatpush1.msra.mxu0 0.0
        %1045 = vmatprep.subr.mxu0 0.0
        %1046 = vmatpush1.msra.mxu0 0.0
        %1047 = vmatprep.subr.mxu0 0.0
        %1048 = vmatpush1.msra.mxu0 0.0
        %1049 = vmatprep.subr.mxu0 0.0
        %1050 = vmatpush1.msra.mxu0 0.0
        %1051 = vmatprep.subr.mxu0 0.0
        %1052 = vmatpush1.msra.mxu0 0.0
        %1053 = vmatprep.subr.mxu0 0.0
        %1054 = vmatpush1.msra.mxu0 0.0
        %1055 = vmatprep.subr.mxu0 0.0
        %1056 = vmatpush1.msra.mxu0 0.0
        %1057 = vmatprep.subr.mxu0 0.0
        %1058 = vmatpush1.msra.mxu0 0.0
        %1059 = vmatprep.subr.mxu0 0.0
        %1060 = vmatpush1.msra.mxu0 0.0
        %1061 = vmatprep.subr.mxu0 0.0
        %1062 = vmatpush1.msra.mxu0 0.0
        %1063 = vmatprep.subr.mxu0 0.0
        %1064 = vmatpush1.msra.mxu0 0.0
        %1065 = vmatprep.subr.mxu0 0.0
        %1066 = vmatpush1.msra.mxu0 0.0
        %1067 = vmatprep.subr.mxu0 0.0
        %1068 = vmatpush1.msra.mxu0 0.0
        %1069 = vmatprep.subr.mxu0 0.0
        %1070 = vmatpush1.msra.mxu0 0.0
        %1071 = vmatprep.subr.mxu0 0.0
        %1072 = vmatpush1.msra.mxu0 0.0
        %1073 = vmatprep.subr.mxu0 0.0
        %1074 = vmatpush1.msra.mxu0 0.0
        %1075 = vmatprep.subr.mxu0 0.0
        %1076 = vmatpush1.msra.mxu0 0.0
        %1077 = vmatprep.subr.mxu0 0.0
        %1078 = vmatpush1.msra.mxu0 0.0
        %1079 = vmatprep.subr.mxu0 0.0
        %1080 = vmatpush1.msra.mxu0 0.0
        %1081 = vmatprep.subr.mxu0 0.0
        %1082 = vmatpush1.msra.mxu0 0.0
        %1083 = vmatprep.subr.mxu0 0.0
        %1084 = vmatpush1.msra.mxu0 0.0
        %1085 = vmatprep.subr.mxu0 0.0
        %1086 = vmatpush1.msra.mxu0 0.0
        %1087 = vmatprep.subr.mxu0 0.0
        %1088 = vmatpush1.msra.mxu0 0.0
        %1089 = vmatprep.subr.mxu0 0.0
        %1090 = vmatpush1.msra.mxu0 0.0
        %1091 = vmatprep.subr.mxu0 0.0
        %1092 = vmatpush1.msra.mxu0 0.0
        %1093 = vmatprep.subr.mxu0 0.0
        %1094 = vmatpush1.msra.mxu0 0.0
        %1095 = vmatprep.subr.mxu0 0.0
        %1096 = vmatpush1.msra.mxu0 0.0
        %1097 = vmatprep.subr.mxu0 0.0
        %1098 = vmatpush1.msra.mxu0 0.0
        %1099 = vmatprep.mubr.f32.mxu0 0.0
        %1100 = vmatmul.mubr.f32.gmra.mrb[0].mxu0 %v413
        %v1101 = vpop.f32.mrb[0].mxu0
        %v1102 = vadd.f32 0.0, %v1101
        %v1103 = vpop.f32.mrb[0].mxu0
        %1104 = vdwg.mxu0
        %v1105 = vmax.f32 %v1032, %v1102
        %v1106 = vpack.c.bf16 %v1105, %v1105
        %s1107 = scalar_lea.vmem %s136, 16
        %1108 = vst.msk [vmem:[%s1107] sm:$0xf] %vm165, %v1106
        %s1109 = scalar_lea.vmem %s113, 96 [#allocation2]
        %v1110 = vld [vmem:[%s1109] sm:$0xff]
        %v1111 = vld [vmem:[%s1109 + $0x8] sm:$0xff]
        %s1112 = scalar_lea.vmem %s113, 112 [#allocation2]
        %v1113 = vld [vmem:[%s1112] sm:$0xff]
        %v1114 = vld [vmem:[%s1112 + $0x8] sm:$0xff]
        %v1115 = vmax.f32 %v1110, %v1113
        %v1116 = vmax.f32 %v1111, %v1114
        %v1118 = vsel %vm180, %v1115, 0
        %v1121 = vsel %vm180, %v1116, 0
        %1123 = vmatprep.subr.mxu0 0.0
        %1124 = vmatpush1.msra.mxu0 %v148
        %1125 = vmatprep.subr.mxu0 0.0
        %1126 = vmatpush1.msra.mxu0 %v149
        %1127 = vmatprep.subr.mxu0 0.0
        %1128 = vmatpush1.msra.mxu0 0.0
        %1129 = vmatprep.subr.mxu0 0.0
        %1130 = vmatpush1.msra.mxu0 0.0
        %1131 = vmatprep.subr.mxu0 0.0
        %1132 = vmatpush1.msra.mxu0 0.0
        %1133 = vmatprep.subr.mxu0 0.0
        %1134 = vmatpush1.msra.mxu0 0.0
        %1135 = vmatprep.subr.mxu0 0.0
        %1136 = vmatpush1.msra.mxu0 0.0
        %1137 = vmatprep.subr.mxu0 0.0
        %1138 = vmatpush1.msra.mxu0 0.0
        %1139 = vmatprep.subr.mxu0 0.0
        %1140 = vmatpush1.msra.mxu0 0.0
        %1141 = vmatprep.subr.mxu0 0.0
        %1142 = vmatpush1.msra.mxu0 0.0
        %1143 = vmatprep.subr.mxu0 0.0
        %1144 = vmatpush1.msra.mxu0 0.0
        %1145 = vmatprep.subr.mxu0 0.0
        %1146 = vmatpush1.msra.mxu0 0.0
        %1147 = vmatprep.subr.mxu0 0.0
        %1148 = vmatpush1.msra.mxu0 0.0
        %1149 = vmatprep.subr.mxu0 0.0
        %1150 = vmatpush1.msra.mxu0 0.0
        %1151 = vmatprep.subr.mxu0 0.0
        %1152 = vmatpush1.msra.mxu0 0.0
        %1153 = vmatprep.subr.mxu0 0.0
        %1154 = vmatpush1.msra.mxu0 0.0
        %1155 = vmatprep.subr.mxu0 0.0
        %1156 = vmatpush1.msra.mxu0 0.0
        %1157 = vmatprep.subr.mxu0 0.0
        %1158 = vmatpush1.msra.mxu0 0.0
        %1159 = vmatprep.subr.mxu0 0.0
        %1160 = vmatpush1.msra.mxu0 0.0
        %1161 = vmatprep.subr.mxu0 0.0
        %1162 = vmatpush1.msra.mxu0 0.0
        %1163 = vmatprep.subr.mxu0 0.0
        %1164 = vmatpush1.msra.mxu0 0.0
        %1165 = vmatprep.subr.mxu0 0.0
        %1166 = vmatpush1.msra.mxu0 0.0
        %1167 = vmatprep.subr.mxu0 0.0
        %1168 = vmatpush1.msra.mxu0 0.0
        %1169 = vmatprep.subr.mxu0 0.0
        %1170 = vmatpush1.msra.mxu0 0.0
        %1171 = vmatprep.subr.mxu0 0.0
        %1172 = vmatpush1.msra.mxu0 0.0
        %1173 = vmatprep.subr.mxu0 0.0
        %1174 = vmatpush1.msra.mxu0 0.0
        %1175 = vmatprep.subr.mxu0 0.0
        %1176 = vmatpush1.msra.mxu0 0.0
        %1177 = vmatprep.subr.mxu0 0.0
        %1178 = vmatpush1.msra.mxu0 0.0
        %1179 = vmatprep.subr.mxu0 0.0
        %1180 = vmatpush1.msra.mxu0 0.0
        %1181 = vmatprep.subr.mxu0 0.0
        %1182 = vmatpush1.msra.mxu0 0.0
        %1183 = vmatprep.subr.mxu0 0.0
        %1184 = vmatpush1.msra.mxu0 0.0
        %1185 = vmatprep.subr.mxu0 0.0
        %1186 = vmatpush1.msra.mxu0 0.0
        %1187 = vmatprep.mubr.f32.mxu0 0.0
        %1188 = vmatmul.mubr.f32.gmra.mrb[0].mxu0 %v1118
        %v1189 = vpop.f32.mrb[0].mxu0
        %v1190 = vadd.f32 0.0, %v1189
        %v1191 = vpop.f32.mrb[0].mxu0
        %1192 = vmatprep.mubr.f32.mxu0 0.0
        %1193 = vmatmul.mubr.f32.gmra.mrb[0].mxu0 %v1121
        %v1194 = vpop.f32.mrb[0].mxu0
        %v1195 = vadd.f32 0.0, %v1194
        %v1196 = vpop.f32.mrb[0].mxu0
        %1197 = vdwg.mxu0
        %1198 = vmatprep.subr.mxu0 0.0
        %1199 = vmatpush1.msra.mxu0 %v155
        %1200 = vmatprep.subr.mxu0 0.0
        %1201 = vmatpush1.msra.mxu0 %v156
        %1202 = vmatprep.subr.mxu0 0.0
        %1203 = vmatpush1.msra.mxu0 0.0
        %1204 = vmatprep.subr.mxu0 0.0
        %1205 = vmatpush1.msra.mxu0 0.0
        %1206 = vmatprep.subr.mxu0 0.0
        %1207 = vmatpush1.msra.mxu0 0.0
        %1208 = vmatprep.subr.mxu0 0.0
        %1209 = vmatpush1.msra.mxu0 0.0
        %1210 = vmatprep.subr.mxu0 0.0
        %1211 = vmatpush1.msra.mxu0 0.0
        %1212 = vmatprep.subr.mxu0 0.0
        %1213 = vmatpush1.msra.mxu0 0.0
        %1214 = vmatprep.subr.mxu0 0.0
        %1215 = vmatpush1.msra.mxu0 0.0
        %1216 = vmatprep.subr.mxu0 0.0
        %1217 = vmatpush1.msra.mxu0 0.0
        %1218 = vmatprep.subr.mxu0 0.0
        %1219 = vmatpush1.msra.mxu0 0.0
        %1220 = vmatprep.subr.mxu0 0.0
        %1221 = vmatpush1.msra.mxu0 0.0
        %1222 = vmatprep.subr.mxu0 0.0
        %1223 = vmatpush1.msra.mxu0 0.0
        %1224 = vmatprep.subr.mxu0 0.0
        %1225 = vmatpush1.msra.mxu0 0.0
        %1226 = vmatprep.subr.mxu0 0.0
        %1227 = vmatpush1.msra.mxu0 0.0
        %1228 = vmatprep.subr.mxu0 0.0
        %1229 = vmatpush1.msra.mxu0 0.0
        %1230 = vmatprep.subr.mxu0 0.0
        %1231 = vmatpush1.msra.mxu0 0.0
        %1232 = vmatprep.subr.mxu0 0.0
        %1233 = vmatpush1.msra.mxu0 0.0
        %1234 = vmatprep.subr.mxu0 0.0
        %1235 = vmatpush1.msra.mxu0 0.0
        %1236 = vmatprep.subr.mxu0 0.0
        %1237 = vmatpush1.msra.mxu0 0.0
        %1238 = vmatprep.subr.mxu0 0.0
        %1239 = vmatpush1.msra.mxu0 0.0
        %1240 = vmatprep.subr.mxu0 0.0
        %1241 = vmatpush1.msra.mxu0 0.0
        %1242 = vmatprep.subr.mxu0 0.0
        %1243 = vmatpush1.msra.mxu0 0.0
        %1244 = vmatprep.subr.mxu0 0.0
        %1245 = vmatpush1.msra.mxu0 0.0
        %1246 = vmatprep.subr.mxu0 0.0
        %1247 = vmatpush1.msra.mxu0 0.0
        %1248 = vmatprep.subr.mxu0 0.0
        %1249 = vmatpush1.msra.mxu0 0.0
        %1250 = vmatprep.subr.mxu0 0.0
        %1251 = vmatpush1.msra.mxu0 0.0
        %1252 = vmatprep.subr.mxu0 0.0
        %1253 = vmatpush1.msra.mxu0 0.0
        %1254 = vmatprep.subr.mxu0 0.0
        %1255 = vmatpush1.msra.mxu0 0.0
        %1256 = vmatprep.subr.mxu0 0.0
        %1257 = vmatpush1.msra.mxu0 0.0
        %1258 = vmatprep.subr.mxu0 0.0
        %1259 = vmatpush1.msra.mxu0 0.0
        %1260 = vmatprep.subr.mxu0 0.0
        %1261 = vmatpush1.msra.mxu0 0.0
        %1262 = vmatprep.mubr.f32.mxu0 0.0
        %1263 = vmatmul.mubr.f32.gmra.mrb[0].mxu0 %v1118
        %v1264 = vpop.f32.mrb[0].mxu0
        %v1265 = vadd.f32 0.0, %v1264
        %v1266 = vpop.f32.mrb[0].mxu0
        %1267 = vmatprep.mubr.f32.mxu0 0.0
        %1268 = vmatmul.mubr.f32.gmra.mrb[0].mxu0 %v1121
        %v1269 = vpop.f32.mrb[0].mxu0
        %v1270 = vadd.f32 0.0, %v1269
        %v1271 = vpop.f32.mrb[0].mxu0
        %1272 = vdwg.mxu0
        %v1273 = vmax.f32 %v1190, %v1265
        %v1274 = vmax.f32 %v1195, %v1270
        %1275 = vmatprep.subr.mxu0 0.0
        %1276 = vmatpush1.msra.mxu0 %v1273
        %1277 = vmatprep.subr.mxu0 0.0
        %1278 = vmatpush1.msra.mxu0 %v1274
        %1279 = vmatprep.subr.mxu0 0.0
        %1280 = vmatpush1.msra.mxu0 0.0
        %1281 = vmatprep.subr.mxu0 0.0
        %1282 = vmatpush1.msra.mxu0 0.0
        %1283 = vmatprep.subr.mxu0 0.0
        %1284 = vmatpush1.msra.mxu0 0.0
        %1285 = vmatprep.subr.mxu0 0.0
        %1286 = vmatpush1.msra.mxu0 0.0
        %1287 = vmatprep.subr.mxu0 0.0
        %1288 = vmatpush1.msra.mxu0 0.0
        %1289 = vmatprep.subr.mxu0 0.0
        %1290 = vmatpush1.msra.mxu0 0.0
        %1291 = vmatprep.subr.mxu0 0.0
        %1292 = vmatpush1.msra.mxu0 0.0
        %1293 = vmatprep.subr.mxu0 0.0
        %1294 = vmatpush1.msra.mxu0 0.0
        %1295 = vmatprep.subr.mxu0 0.0
        %1296 = vmatpush1.msra.mxu0 0.0
        %1297 = vmatprep.subr.mxu0 0.0
        %1298 = vmatpush1.msra.mxu0 0.0
        %1299 = vmatprep.subr.mxu0 0.0
        %1300 = vmatpush1.msra.mxu0 0.0
        %1301 = vmatprep.subr.mxu0 0.0
        %1302 = vmatpush1.msra.mxu0 0.0
        %1303 = vmatprep.subr.mxu0 0.0
        %1304 = vmatpush1.msra.mxu0 0.0
        %1305 = vmatprep.subr.mxu0 0.0
        %1306 = vmatpush1.msra.mxu0 0.0
        %1307 = vmatprep.subr.mxu0 0.0
        %1308 = vmatpush1.msra.mxu0 0.0
        %1309 = vmatprep.subr.mxu0 0.0
        %1310 = vmatpush1.msra.mxu0 0.0
        %1311 = vmatprep.subr.mxu0 0.0
        %1312 = vmatpush1.msra.mxu0 0.0
        %1313 = vmatprep.subr.mxu0 0.0
        %1314 = vmatpush1.msra.mxu0 0.0
        %1315 = vmatprep.subr.mxu0 0.0
        %1316 = vmatpush1.msra.mxu0 0.0
        %1317 = vmatprep.subr.mxu0 0.0
        %1318 = vmatpush1.msra.mxu0 0.0
        %1319 = vmatprep.subr.mxu0 0.0
        %1320 = vmatpush1.msra.mxu0 0.0
        %1321 = vmatprep.subr.mxu0 0.0
        %1322 = vmatpush1.msra.mxu0 0.0
        %1323 = vmatprep.subr.mxu0 0.0
        %1324 = vmatpush1.msra.mxu0 0.0
        %1325 = vmatprep.subr.mxu0 0.0
        %1326 = vmatpush1.msra.mxu0 0.0
        %1327 = vmatprep.subr.mxu0 0.0
        %1328 = vmatpush1.msra.mxu0 0.0
        %1329 = vmatprep.subr.mxu0 0.0
        %1330 = vmatpush1.msra.mxu0 0.0
        %1331 = vmatprep.subr.mxu0 0.0
        %1332 = vmatpush1.msra.mxu0 0.0
        %1333 = vmatprep.subr.mxu0 0.0
        %1334 = vmatpush1.msra.mxu0 0.0
        %1335 = vmatprep.subr.mxu0 0.0
        %1336 = vmatpush1.msra.mxu0 0.0
        %1337 = vmatprep.subr.mxu0 0.0
        %1338 = vmatpush1.msra.mxu0 0.0
        %1339 = vmatprep.mubr.f32.mxu0 0.0
        %1340 = vmatmul.mubr.f32.gmra.mrb[0].mxu0 %v340
        %v1341 = vpop.f32.mrb[0].mxu0
        %v1342 = vadd.f32 0.0, %v1341
        %v1343 = vpop.f32.mrb[0].mxu0
        %1344 = vdwg.mxu0
        %1345 = vmatprep.subr.mxu0 0.0
        %1346 = vmatpush1.msra.mxu0 %v1273
        %1347 = vmatprep.subr.mxu0 0.0
        %1348 = vmatpush1.msra.mxu0 %v1274
        %1349 = vmatprep.subr.mxu0 0.0
        %1350 = vmatpush1.msra.mxu0 0.0
        %1351 = vmatprep.subr.mxu0 0.0
        %1352 = vmatpush1.msra.mxu0 0.0
        %1353 = vmatprep.subr.mxu0 0.0
        %1354 = vmatpush1.msra.mxu0 0.0
        %1355 = vmatprep.subr.mxu0 0.0
        %1356 = vmatpush1.msra.mxu0 0.0
        %1357 = vmatprep.subr.mxu0 0.0
        %1358 = vmatpush1.msra.mxu0 0.0
        %1359 = vmatprep.subr.mxu0 0.0
        %1360 = vmatpush1.msra.mxu0 0.0
        %1361 = vmatprep.subr.mxu0 0.0
        %1362 = vmatpush1.msra.mxu0 0.0
        %1363 = vmatprep.subr.mxu0 0.0
        %1364 = vmatpush1.msra.mxu0 0.0
        %1365 = vmatprep.subr.mxu0 0.0
        %1366 = vmatpush1.msra.mxu0 0.0
        %1367 = vmatprep.subr.mxu0 0.0
        %1368 = vmatpush1.msra.mxu0 0.0
        %1369 = vmatprep.subr.mxu0 0.0
        %1370 = vmatpush1.msra.mxu0 0.0
        %1371 = vmatprep.subr.mxu0 0.0
        %1372 = vmatpush1.msra.mxu0 0.0
        %1373 = vmatprep.subr.mxu0 0.0
        %1374 = vmatpush1.msra.mxu0 0.0
        %1375 = vmatprep.subr.mxu0 0.0
        %1376 = vmatpush1.msra.mxu0 0.0
        %1377 = vmatprep.subr.mxu0 0.0
        %1378 = vmatpush1.msra.mxu0 0.0
        %1379 = vmatprep.subr.mxu0 0.0
        %1380 = vmatpush1.msra.mxu0 0.0
        %1381 = vmatprep.subr.mxu0 0.0
        %1382 = vmatpush1.msra.mxu0 0.0
        %1383 = vmatprep.subr.mxu0 0.0
        %1384 = vmatpush1.msra.mxu0 0.0
        %1385 = vmatprep.subr.mxu0 0.0
        %1386 = vmatpush1.msra.mxu0 0.0
        %1387 = vmatprep.subr.mxu0 0.0
        %1388 = vmatpush1.msra.mxu0 0.0
        %1389 = vmatprep.subr.mxu0 0.0
        %1390 = vmatpush1.msra.mxu0 0.0
        %1391 = vmatprep.subr.mxu0 0.0
        %1392 = vmatpush1.msra.mxu0 0.0
        %1393 = vmatprep.subr.mxu0 0.0
        %1394 = vmatpush1.msra.mxu0 0.0
        %1395 = vmatprep.subr.mxu0 0.0
        %1396 = vmatpush1.msra.mxu0 0.0
        %1397 = vmatprep.subr.mxu0 0.0
        %1398 = vmatpush1.msra.mxu0 0.0
        %1399 = vmatprep.subr.mxu0 0.0
        %1400 = vmatpush1.msra.mxu0 0.0
        %1401 = vmatprep.subr.mxu0 0.0
        %1402 = vmatpush1.msra.mxu0 0.0
        %1403 = vmatprep.subr.mxu0 0.0
        %1404 = vmatpush1.msra.mxu0 0.0
        %1405 = vmatprep.subr.mxu0 0.0
        %1406 = vmatpush1.msra.mxu0 0.0
        %1407 = vmatprep.subr.mxu0 0.0
        %1408 = vmatpush1.msra.mxu0 0.0
        %1409 = vmatprep.mubr.f32.mxu0 0.0
        %1410 = vmatmul.mubr.f32.gmra.mrb[0].mxu0 %v413
        %v1411 = vpop.f32.mrb[0].mxu0
        %v1412 = vadd.f32 0.0, %v1411
        %v1413 = vpop.f32.mrb[0].mxu0
        %1414 = vdwg.mxu0
        %v1415 = vmax.f32 %v1342, %v1412
        %v1416 = vpack.c.bf16 %v1415, %v1415
        %s1417 = scalar_lea.vmem %s136, 20
        %1418 = vst.msk [vmem:[%s1417] sm:$0xf] %vm165, %v1416
        %s1419 = scalar_lea.vmem %s113, 128 [#allocation2]
        %v1420 = vld [vmem:[%s1419] sm:$0xff]
        %v1421 = vld [vmem:[%s1419 + $0x8] sm:$0xff]
        %s1422 = scalar_lea.vmem %s113, 144 [#allocation2]
        %v1423 = vld [vmem:[%s1422] sm:$0xff]
        %v1424 = vld [vmem:[%s1422 + $0x8] sm:$0xff]
        %v1425 = vmax.f32 %v1420, %v1423
        %v1426 = vmax.f32 %v1421, %v1424
        %v1428 = vsel %vm180, %v1425, 0
        %v1431 = vsel %vm180, %v1426, 0
        %1433 = vmatprep.subr.mxu0 0.0
        %1434 = vmatpush1.msra.mxu0 %v148
        %1435 = vmatprep.subr.mxu0 0.0
        %1436 = vmatpush1.msra.mxu0 %v149
        %1437 = vmatprep.subr.mxu0 0.0
        %1438 = vmatpush1.msra.mxu0 0.0
        %1439 = vmatprep.subr.mxu0 0.0
        %1440 = vmatpush1.msra.mxu0 0.0
        %1441 = vmatprep.subr.mxu0 0.0
        %1442 = vmatpush1.msra.mxu0 0.0
        %1443 = vmatprep.subr.mxu0 0.0
        %1444 = vmatpush1.msra.mxu0 0.0
        %1445 = vmatprep.subr.mxu0 0.0
        %1446 = vmatpush1.msra.mxu0 0.0
        %1447 = vmatprep.subr.mxu0 0.0
        %1448 = vmatpush1.msra.mxu0 0.0
        %1449 = vmatprep.subr.mxu0 0.0
        %1450 = vmatpush1.msra.mxu0 0.0
        %1451 = vmatprep.subr.mxu0 0.0
        %1452 = vmatpush1.msra.mxu0 0.0
        %1453 = vmatprep.subr.mxu0 0.0
        %1454 = vmatpush1.msra.mxu0 0.0
        %1455 = vmatprep.subr.mxu0 0.0
        %1456 = vmatpush1.msra.mxu0 0.0
        %1457 = vmatprep.subr.mxu0 0.0
        %1458 = vmatpush1.msra.mxu0 0.0
        %1459 = vmatprep.subr.mxu0 0.0
        %1460 = vmatpush1.msra.mxu0 0.0
        %1461 = vmatprep.subr.mxu0 0.0
        %1462 = vmatpush1.msra.mxu0 0.0
        %1463 = vmatprep.subr.mxu0 0.0
        %1464 = vmatpush1.msra.mxu0 0.0
        %1465 = vmatprep.subr.mxu0 0.0
        %1466 = vmatpush1.msra.mxu0 0.0
        %1467 = vmatprep.subr.mxu0 0.0
        %1468 = vmatpush1.msra.mxu0 0.0
        %1469 = vmatprep.subr.mxu0 0.0
        %1470 = vmatpush1.msra.mxu0 0.0
        %1471 = vmatprep.subr.mxu0 0.0
        %1472 = vmatpush1.msra.mxu0 0.0
        %1473 = vmatprep.subr.mxu0 0.0
        %1474 = vmatpush1.msra.mxu0 0.0
        %1475 = vmatprep.subr.mxu0 0.0
        %1476 = vmatpush1.msra.mxu0 0.0
        %1477 = vmatprep.subr.mxu0 0.0
        %1478 = vmatpush1.msra.mxu0 0.0
        %1479 = vmatprep.subr.mxu0 0.0
        %1480 = vmatpush1.msra.mxu0 0.0
        %1481 = vmatprep.subr.mxu0 0.0
        %1482 = vmatpush1.msra.mxu0 0.0
        %1483 = vmatprep.subr.mxu0 0.0
        %1484 = vmatpush1.msra.mxu0 0.0
        %1485 = vmatprep.subr.mxu0 0.0
        %1486 = vmatpush1.msra.mxu0 0.0
        %1487 = vmatprep.subr.mxu0 0.0
        %1488 = vmatpush1.msra.mxu0 0.0
        %1489 = vmatprep.subr.mxu0 0.0
        %1490 = vmatpush1.msra.mxu0 0.0
        %1491 = vmatprep.subr.mxu0 0.0
        %1492 = vmatpush1.msra.mxu0 0.0
        %1493 = vmatprep.subr.mxu0 0.0
        %1494 = vmatpush1.msra.mxu0 0.0
        %1495 = vmatprep.subr.mxu0 0.0
        %1496 = vmatpush1.msra.mxu0 0.0
        %1497 = vmatprep.mubr.f32.mxu0 0.0
        %1498 = vmatmul.mubr.f32.gmra.mrb[0].mxu0 %v1428
        %v1499 = vpop.f32.mrb[0].mxu0
        %v1500 = vadd.f32 0.0, %v1499
        %v1501 = vpop.f32.mrb[0].mxu0
        %1502 = vmatprep.mubr.f32.mxu0 0.0
        %1503 = vmatmul.mubr.f32.gmra.mrb[0].mxu0 %v1431
        %v1504 = vpop.f32.mrb[0].mxu0
        %v1505 = vadd.f32 0.0, %v1504
        %v1506 = vpop.f32.mrb[0].mxu0
        %1507 = vdwg.mxu0
        %1508 = vmatprep.subr.mxu0 0.0
        %1509 = vmatpush1.msra.mxu0 %v155
        %1510 = vmatprep.subr.mxu0 0.0
        %1511 = vmatpush1.msra.mxu0 %v156
        %1512 = vmatprep.subr.mxu0 0.0
        %1513 = vmatpush1.msra.mxu0 0.0
        %1514 = vmatprep.subr.mxu0 0.0
        %1515 = vmatpush1.msra.mxu0 0.0
        %1516 = vmatprep.subr.mxu0 0.0
        %1517 = vmatpush1.msra.mxu0 0.0
        %1518 = vmatprep.subr.mxu0 0.0
        %1519 = vmatpush1.msra.mxu0 0.0
        %1520 = vmatprep.subr.mxu0 0.0
        %1521 = vmatpush1.msra.mxu0 0.0
        %1522 = vmatprep.subr.mxu0 0.0
        %1523 = vmatpush1.msra.mxu0 0.0
        %1524 = vmatprep.subr.mxu0 0.0
        %1525 = vmatpush1.msra.mxu0 0.0
        %1526 = vmatprep.subr.mxu0 0.0
        %1527 = vmatpush1.msra.mxu0 0.0
        %1528 = vmatprep.subr.mxu0 0.0
        %1529 = vmatpush1.msra.mxu0 0.0
        %1530 = vmatprep.subr.mxu0 0.0
        %1531 = vmatpush1.msra.mxu0 0.0
        %1532 = vmatprep.subr.mxu0 0.0
        %1533 = vmatpush1.msra.mxu0 0.0
        %1534 = vmatprep.subr.mxu0 0.0
        %1535 = vmatpush1.msra.mxu0 0.0
        %1536 = vmatprep.subr.mxu0 0.0
        %1537 = vmatpush1.msra.mxu0 0.0
        %1538 = vmatprep.subr.mxu0 0.0
        %1539 = vmatpush1.msra.mxu0 0.0
        %1540 = vmatprep.subr.mxu0 0.0
        %1541 = vmatpush1.msra.mxu0 0.0
        %1542 = vmatprep.subr.mxu0 0.0
        %1543 = vmatpush1.msra.mxu0 0.0
        %1544 = vmatprep.subr.mxu0 0.0
        %1545 = vmatpush1.msra.mxu0 0.0
        %1546 = vmatprep.subr.mxu0 0.0
        %1547 = vmatpush1.msra.mxu0 0.0
        %1548 = vmatprep.subr.mxu0 0.0
        %1549 = vmatpush1.msra.mxu0 0.0
        %1550 = vmatprep.subr.mxu0 0.0
        %1551 = vmatpush1.msra.mxu0 0.0
        %1552 = vmatprep.subr.mxu0 0.0
        %1553 = vmatpush1.msra.mxu0 0.0
        %1554 = vmatprep.subr.mxu0 0.0
        %1555 = vmatpush1.msra.mxu0 0.0
        %1556 = vmatprep.subr.mxu0 0.0
        %1557 = vmatpush1.msra.mxu0 0.0
        %1558 = vmatprep.subr.mxu0 0.0
        %1559 = vmatpush1.msra.mxu0 0.0
        %1560 = vmatprep.subr.mxu0 0.0
        %1561 = vmatpush1.msra.mxu0 0.0
        %1562 = vmatprep.subr.mxu0 0.0
        %1563 = vmatpush1.msra.mxu0 0.0
        %1564 = vmatprep.subr.mxu0 0.0
        %1565 = vmatpush1.msra.mxu0 0.0
        %1566 = vmatprep.subr.mxu0 0.0
        %1567 = vmatpush1.msra.mxu0 0.0
        %1568 = vmatprep.subr.mxu0 0.0
        %1569 = vmatpush1.msra.mxu0 0.0
        %1570 = vmatprep.subr.mxu0 0.0
        %1571 = vmatpush1.msra.mxu0 0.0
        %1572 = vmatprep.mubr.f32.mxu0 0.0
        %1573 = vmatmul.mubr.f32.gmra.mrb[0].mxu0 %v1428
        %v1574 = vpop.f32.mrb[0].mxu0
        %v1575 = vadd.f32 0.0, %v1574
        %v1576 = vpop.f32.mrb[0].mxu0
        %1577 = vmatprep.mubr.f32.mxu0 0.0
        %1578 = vmatmul.mubr.f32.gmra.mrb[0].mxu0 %v1431
        %v1579 = vpop.f32.mrb[0].mxu0
        %v1580 = vadd.f32 0.0, %v1579
        %v1581 = vpop.f32.mrb[0].mxu0
        %1582 = vdwg.mxu0
        %v1583 = vmax.f32 %v1500, %v1575
        %v1584 = vmax.f32 %v1505, %v1580
        %1585 = vmatprep.subr.mxu0 0.0
        %1586 = vmatpush1.msra.mxu0 %v1583
        %1587 = vmatprep.subr.mxu0 0.0
        %1588 = vmatpush1.msra.mxu0 %v1584
        %1589 = vmatprep.subr.mxu0 0.0
        %1590 = vmatpush1.msra.mxu0 0.0
        %1591 = vmatprep.subr.mxu0 0.0
        %1592 = vmatpush1.msra.mxu0 0.0
        %1593 = vmatprep.subr.mxu0 0.0
        %1594 = vmatpush1.msra.mxu0 0.0
        %1595 = vmatprep.subr.mxu0 0.0
        %1596 = vmatpush1.msra.mxu0 0.0
        %1597 = vmatprep.subr.mxu0 0.0
        %1598 = vmatpush1.msra.mxu0 0.0
        %1599 = vmatprep.subr.mxu0 0.0
        %1600 = vmatpush1.msra.mxu0 0.0
        %1601 = vmatprep.subr.mxu0 0.0
        %1602 = vmatpush1.msra.mxu0 0.0
        %1603 = vmatprep.subr.mxu0 0.0
        %1604 = vmatpush1.msra.mxu0 0.0
        %1605 = vmatprep.subr.mxu0 0.0
        %1606 = vmatpush1.msra.mxu0 0.0
        %1607 = vmatprep.subr.mxu0 0.0
        %1608 = vmatpush1.msra.mxu0 0.0
        %1609 = vmatprep.subr.mxu0 0.0
        %1610 = vmatpush1.msra.mxu0 0.0
        %1611 = vmatprep.subr.mxu0 0.0
        %1612 = vmatpush1.msra.mxu0 0.0
        %1613 = vmatprep.subr.mxu0 0.0
        %1614 = vmatpush1.msra.mxu0 0.0
        %1615 = vmatprep.subr.mxu0 0.0
        %1616 = vmatpush1.msra.mxu0 0.0
        %1617 = vmatprep.subr.mxu0 0.0
        %1618 = vmatpush1.msra.mxu0 0.0
        %1619 = vmatprep.subr.mxu0 0.0
        %1620 = vmatpush1.msra.mxu0 0.0
        %1621 = vmatprep.subr.mxu0 0.0
        %1622 = vmatpush1.msra.mxu0 0.0
        %1623 = vmatprep.subr.mxu0 0.0
        %1624 = vmatpush1.msra.mxu0 0.0
        %1625 = vmatprep.subr.mxu0 0.0
        %1626 = vmatpush1.msra.mxu0 0.0
        %1627 = vmatprep.subr.mxu0 0.0
        %1628 = vmatpush1.msra.mxu0 0.0
        %1629 = vmatprep.subr.mxu0 0.0
        %1630 = vmatpush1.msra.mxu0 0.0
        %1631 = vmatprep.subr.mxu0 0.0
        %1632 = vmatpush1.msra.mxu0 0.0
        %1633 = vmatprep.subr.mxu0 0.0
        %1634 = vmatpush1.msra.mxu0 0.0
        %1635 = vmatprep.subr.mxu0 0.0
        %1636 = vmatpush1.msra.mxu0 0.0
        %1637 = vmatprep.subr.mxu0 0.0
        %1638 = vmatpush1.msra.mxu0 0.0
        %1639 = vmatprep.subr.mxu0 0.0
        %1640 = vmatpush1.msra.mxu0 0.0
        %1641 = vmatprep.subr.mxu0 0.0
        %1642 = vmatpush1.msra.mxu0 0.0
        %1643 = vmatprep.subr.mxu0 0.0
        %1644 = vmatpush1.msra.mxu0 0.0
        %1645 = vmatprep.subr.mxu0 0.0
        %1646 = vmatpush1.msra.mxu0 0.0
        %1647 = vmatprep.subr.mxu0 0.0
        %1648 = vmatpush1.msra.mxu0 0.0
        %1649 = vmatprep.mubr.f32.mxu0 0.0
        %1650 = vmatmul.mubr.f32.gmra.mrb[0].mxu0 %v340
        %v1651 = vpop.f32.mrb[0].mxu0
        %v1652 = vadd.f32 0.0, %v1651
        %v1653 = vpop.f32.mrb[0].mxu0
        %1654 = vdwg.mxu0
        %1655 = vmatprep.subr.mxu0 0.0
        %1656 = vmatpush1.msra.mxu0 %v1583
        %1657 = vmatprep.subr.mxu0 0.0
        %1658 = vmatpush1.msra.mxu0 %v1584
        %1659 = vmatprep.subr.mxu0 0.0
        %1660 = vmatpush1.msra.mxu0 0.0
        %1661 = vmatprep.subr.mxu0 0.0
        %1662 = vmatpush1.msra.mxu0 0.0
        %1663 = vmatprep.subr.mxu0 0.0
        %1664 = vmatpush1.msra.mxu0 0.0
        %1665 = vmatprep.subr.mxu0 0.0
        %1666 = vmatpush1.msra.mxu0 0.0
        %1667 = vmatprep.subr.mxu0 0.0
        %1668 = vmatpush1.msra.mxu0 0.0
        %1669 = vmatprep.subr.mxu0 0.0
        %1670 = vmatpush1.msra.mxu0 0.0
        %1671 = vmatprep.subr.mxu0 0.0
        %1672 = vmatpush1.msra.mxu0 0.0
        %1673 = vmatprep.subr.mxu0 0.0
        %1674 = vmatpush1.msra.mxu0 0.0
        %1675 = vmatprep.subr.mxu0 0.0
        %1676 = vmatpush1.msra.mxu0 0.0
        %1677 = vmatprep.subr.mxu0 0.0
        %1678 = vmatpush1.msra.mxu0 0.0
        %1679 = vmatprep.subr.mxu0 0.0
        %1680 = vmatpush1.msra.mxu0 0.0
        %1681 = vmatprep.subr.mxu0 0.0
        %1682 = vmatpush1.msra.mxu0 0.0
        %1683 = vmatprep.subr.mxu0 0.0
        %1684 = vmatpush1.msra.mxu0 0.0
        %1685 = vmatprep.subr.mxu0 0.0
        %1686 = vmatpush1.msra.mxu0 0.0
        %1687 = vmatprep.subr.mxu0 0.0
        %1688 = vmatpush1.msra.mxu0 0.0
        %1689 = vmatprep.subr.mxu0 0.0
        %1690 = vmatpush1.msra.mxu0 0.0
        %1691 = vmatprep.subr.mxu0 0.0
        %1692 = vmatpush1.msra.mxu0 0.0
        %1693 = vmatprep.subr.mxu0 0.0
        %1694 = vmatpush1.msra.mxu0 0.0
        %1695 = vmatprep.subr.mxu0 0.0
        %1696 = vmatpush1.msra.mxu0 0.0
        %1697 = vmatprep.subr.mxu0 0.0
        %1698 = vmatpush1.msra.mxu0 0.0
        %1699 = vmatprep.subr.mxu0 0.0
        %1700 = vmatpush1.msra.mxu0 0.0
        %1701 = vmatprep.subr.mxu0 0.0
        %1702 = vmatpush1.msra.mxu0 0.0
        %1703 = vmatprep.subr.mxu0 0.0
        %1704 = vmatpush1.msra.mxu0 0.0
        %1705 = vmatprep.subr.mxu0 0.0
        %1706 = vmatpush1.msra.mxu0 0.0
        %1707 = vmatprep.subr.mxu0 0.0
        %1708 = vmatpush1.msra.mxu0 0.0
        %1709 = vmatprep.subr.mxu0 0.0
        %1710 = vmatpush1.msra.mxu0 0.0
        %1711 = vmatprep.subr.mxu0 0.0
        %1712 = vmatpush1.msra.mxu0 0.0
        %1713 = vmatprep.subr.mxu0 0.0
        %1714 = vmatpush1.msra.mxu0 0.0
        %1715 = vmatprep.subr.mxu0 0.0
        %1716 = vmatpush1.msra.mxu0 0.0
        %1717 = vmatprep.subr.mxu0 0.0
        %1718 = vmatpush1.msra.mxu0 0.0
        %1719 = vmatprep.mubr.f32.mxu0 0.0
        %1720 = vmatmul.mubr.f32.gmra.mrb[0].mxu0 %v413
        %v1721 = vpop.f32.mrb[0].mxu0
        %v1722 = vadd.f32 0.0, %v1721
        %v1723 = vpop.f32.mrb[0].mxu0
        %1724 = vdwg.mxu0
        %v1725 = vmax.f32 %v1652, %v1722
        %v1726 = vpack.c.bf16 %v1725, %v1725
        %s1727 = scalar_lea.vmem %s136, 24
        %1728 = vst.msk [vmem:[%s1727] sm:$0xf] %vm165, %v1726
        %s1729 = scalar_lea.vmem %s113, 160 [#allocation2]
        %v1730 = vld [vmem:[%s1729] sm:$0xff]
        %v1731 = vld [vmem:[%s1729 + $0x8] sm:$0xff]
        %s1732 = scalar_lea.vmem %s113, 176 [#allocation2]
        %v1733 = vld [vmem:[%s1732] sm:$0xff]
        %v1734 = vld [vmem:[%s1732 + $0x8] sm:$0xff]
        %v1735 = vmax.f32 %v1730, %v1733
        %v1736 = vmax.f32 %v1731, %v1734
        %v1738 = vsel %vm180, %v1735, 0
        %v1741 = vsel %vm180, %v1736, 0
        %1743 = vmatprep.subr.mxu0 0.0
        %1744 = vmatpush1.msra.mxu0 %v148
        %1745 = vmatprep.subr.mxu0 0.0
        %1746 = vmatpush1.msra.mxu0 %v149
        %1747 = vmatprep.subr.mxu0 0.0
        %1748 = vmatpush1.msra.mxu0 0.0
        %1749 = vmatprep.subr.mxu0 0.0
        %1750 = vmatpush1.msra.mxu0 0.0
        %1751 = vmatprep.subr.mxu0 0.0
        %1752 = vmatpush1.msra.mxu0 0.0
        %1753 = vmatprep.subr.mxu0 0.0
        %1754 = vmatpush1.msra.mxu0 0.0
        %1755 = vmatprep.subr.mxu0 0.0
        %1756 = vmatpush1.msra.mxu0 0.0
        %1757 = vmatprep.subr.mxu0 0.0
        %1758 = vmatpush1.msra.mxu0 0.0
        %1759 = vmatprep.subr.mxu0 0.0
        %1760 = vmatpush1.msra.mxu0 0.0
        %1761 = vmatprep.subr.mxu0 0.0
        %1762 = vmatpush1.msra.mxu0 0.0
        %1763 = vmatprep.subr.mxu0 0.0
        %1764 = vmatpush1.msra.mxu0 0.0
        %1765 = vmatprep.subr.mxu0 0.0
        %1766 = vmatpush1.msra.mxu0 0.0
        %1767 = vmatprep.subr.mxu0 0.0
        %1768 = vmatpush1.msra.mxu0 0.0
        %1769 = vmatprep.subr.mxu0 0.0
        %1770 = vmatpush1.msra.mxu0 0.0
        %1771 = vmatprep.subr.mxu0 0.0
        %1772 = vmatpush1.msra.mxu0 0.0
        %1773 = vmatprep.subr.mxu0 0.0
        %1774 = vmatpush1.msra.mxu0 0.0
        %1775 = vmatprep.subr.mxu0 0.0
        %1776 = vmatpush1.msra.mxu0 0.0
        %1777 = vmatprep.subr.mxu0 0.0
        %1778 = vmatpush1.msra.mxu0 0.0
        %1779 = vmatprep.subr.mxu0 0.0
        %1780 = vmatpush1.msra.mxu0 0.0
        %1781 = vmatprep.subr.mxu0 0.0
        %1782 = vmatpush1.msra.mxu0 0.0
        %1783 = vmatprep.subr.mxu0 0.0
        %1784 = vmatpush1.msra.mxu0 0.0
        %1785 = vmatprep.subr.mxu0 0.0
        %1786 = vmatpush1.msra.mxu0 0.0
        %1787 = vmatprep.subr.mxu0 0.0
        %1788 = vmatpush1.msra.mxu0 0.0
        %1789 = vmatprep.subr.mxu0 0.0
        %1790 = vmatpush1.msra.mxu0 0.0
        %1791 = vmatprep.subr.mxu0 0.0
        %1792 = vmatpush1.msra.mxu0 0.0
        %1793 = vmatprep.subr.mxu0 0.0
        %1794 = vmatpush1.msra.mxu0 0.0
        %1795 = vmatprep.subr.mxu0 0.0
        %1796 = vmatpush1.msra.mxu0 0.0
        %1797 = vmatprep.subr.mxu0 0.0
        %1798 = vmatpush1.msra.mxu0 0.0
        %1799 = vmatprep.subr.mxu0 0.0
        %1800 = vmatpush1.msra.mxu0 0.0
        %1801 = vmatprep.subr.mxu0 0.0
        %1802 = vmatpush1.msra.mxu0 0.0
        %1803 = vmatprep.subr.mxu0 0.0
        %1804 = vmatpush1.msra.mxu0 0.0
        %1805 = vmatprep.subr.mxu0 0.0
        %1806 = vmatpush1.msra.mxu0 0.0
        %1807 = vmatprep.mubr.f32.mxu0 0.0
        %1808 = vmatmul.mubr.f32.gmra.mrb[0].mxu0 %v1738
        %v1809 = vpop.f32.mrb[0].mxu0
        %v1810 = vadd.f32 0.0, %v1809
        %v1811 = vpop.f32.mrb[0].mxu0
        %1812 = vmatprep.mubr.f32.mxu0 0.0
        %1813 = vmatmul.mubr.f32.gmra.mrb[0].mxu0 %v1741
        %v1814 = vpop.f32.mrb[0].mxu0
        %v1815 = vadd.f32 0.0, %v1814
        %v1816 = vpop.f32.mrb[0].mxu0
        %1817 = vdwg.mxu0
        %1818 = vmatprep.subr.mxu0 0.0
        %1819 = vmatpush1.msra.mxu0 %v155
        %1820 = vmatprep.subr.mxu0 0.0
        %1821 = vmatpush1.msra.mxu0 %v156
        %1822 = vmatprep.subr.mxu0 0.0
        %1823 = vmatpush1.msra.mxu0 0.0
        %1824 = vmatprep.subr.mxu0 0.0
        %1825 = vmatpush1.msra.mxu0 0.0
        %1826 = vmatprep.subr.mxu0 0.0
        %1827 = vmatpush1.msra.mxu0 0.0
        %1828 = vmatprep.subr.mxu0 0.0
        %1829 = vmatpush1.msra.mxu0 0.0
        %1830 = vmatprep.subr.mxu0 0.0
        %1831 = vmatpush1.msra.mxu0 0.0
        %1832 = vmatprep.subr.mxu0 0.0
        %1833 = vmatpush1.msra.mxu0 0.0
        %1834 = vmatprep.subr.mxu0 0.0
        %1835 = vmatpush1.msra.mxu0 0.0
        %1836 = vmatprep.subr.mxu0 0.0
        %1837 = vmatpush1.msra.mxu0 0.0
        %1838 = vmatprep.subr.mxu0 0.0
        %1839 = vmatpush1.msra.mxu0 0.0
        %1840 = vmatprep.subr.mxu0 0.0
        %1841 = vmatpush1.msra.mxu0 0.0
        %1842 = vmatprep.subr.mxu0 0.0
        %1843 = vmatpush1.msra.mxu0 0.0
        %1844 = vmatprep.subr.mxu0 0.0
        %1845 = vmatpush1.msra.mxu0 0.0
        %1846 = vmatprep.subr.mxu0 0.0
        %1847 = vmatpush1.msra.mxu0 0.0
        %1848 = vmatprep.subr.mxu0 0.0
        %1849 = vmatpush1.msra.mxu0 0.0
        %1850 = vmatprep.subr.mxu0 0.0
        %1851 = vmatpush1.msra.mxu0 0.0
        %1852 = vmatprep.subr.mxu0 0.0
        %1853 = vmatpush1.msra.mxu0 0.0
        %1854 = vmatprep.subr.mxu0 0.0
        %1855 = vmatpush1.msra.mxu0 0.0
        %1856 = vmatprep.subr.mxu0 0.0
        %1857 = vmatpush1.msra.mxu0 0.0
        %1858 = vmatprep.subr.mxu0 0.0
        %1859 = vmatpush1.msra.mxu0 0.0
        %1860 = vmatprep.subr.mxu0 0.0
        %1861 = vmatpush1.msra.mxu0 0.0
        %1862 = vmatprep.subr.mxu0 0.0
        %1863 = vmatpush1.msra.mxu0 0.0
        %1864 = vmatprep.subr.mxu0 0.0
        %1865 = vmatpush1.msra.mxu0 0.0
        %1866 = vmatprep.subr.mxu0 0.0
        %1867 = vmatpush1.msra.mxu0 0.0
        %1868 = vmatprep.subr.mxu0 0.0
        %1869 = vmatpush1.msra.mxu0 0.0
        %1870 = vmatprep.subr.mxu0 0.0
        %1871 = vmatpush1.msra.mxu0 0.0
        %1872 = vmatprep.subr.mxu0 0.0
        %1873 = vmatpush1.msra.mxu0 0.0
        %1874 = vmatprep.subr.mxu0 0.0
        %1875 = vmatpush1.msra.mxu0 0.0
        %1876 = vmatprep.subr.mxu0 0.0
        %1877 = vmatpush1.msra.mxu0 0.0
        %1878 = vmatprep.subr.mxu0 0.0
        %1879 = vmatpush1.msra.mxu0 0.0
        %1880 = vmatprep.subr.mxu0 0.0
        %1881 = vmatpush1.msra.mxu0 0.0
        %1882 = vmatprep.mubr.f32.mxu0 0.0
        %1883 = vmatmul.mubr.f32.gmra.mrb[0].mxu0 %v1738
        %v1884 = vpop.f32.mrb[0].mxu0
        %v1885 = vadd.f32 0.0, %v1884
        %v1886 = vpop.f32.mrb[0].mxu0
        %1887 = vmatprep.mubr.f32.mxu0 0.0
        %1888 = vmatmul.mubr.f32.gmra.mrb[0].mxu0 %v1741
        %v1889 = vpop.f32.mrb[0].mxu0
        %v1890 = vadd.f32 0.0, %v1889
        %v1891 = vpop.f32.mrb[0].mxu0
        %1892 = vdwg.mxu0
        %v1893 = vmax.f32 %v1810, %v1885
        %v1894 = vmax.f32 %v1815, %v1890
        %1895 = vmatprep.subr.mxu0 0.0
        %1896 = vmatpush1.msra.mxu0 %v1893
        %1897 = vmatprep.subr.mxu0 0.0
        %1898 = vmatpush1.msra.mxu0 %v1894
        %1899 = vmatprep.subr.mxu0 0.0
        %1900 = vmatpush1.msra.mxu0 0.0
        %1901 = vmatprep.subr.mxu0 0.0
        %1902 = vmatpush1.msra.mxu0 0.0
        %1903 = vmatprep.subr.mxu0 0.0
        %1904 = vmatpush1.msra.mxu0 0.0
        %1905 = vmatprep.subr.mxu0 0.0
        %1906 = vmatpush1.msra.mxu0 0.0
        %1907 = vmatprep.subr.mxu0 0.0
        %1908 = vmatpush1.msra.mxu0 0.0
        %1909 = vmatprep.subr.mxu0 0.0
        %1910 = vmatpush1.msra.mxu0 0.0
        %1911 = vmatprep.subr.mxu0 0.0
        %1912 = vmatpush1.msra.mxu0 0.0
        %1913 = vmatprep.subr.mxu0 0.0
        %1914 = vmatpush1.msra.mxu0 0.0
        %1915 = vmatprep.subr.mxu0 0.0
        %1916 = vmatpush1.msra.mxu0 0.0
        %1917 = vmatprep.subr.mxu0 0.0
        %1918 = vmatpush1.msra.mxu0 0.0
        %1919 = vmatprep.subr.mxu0 0.0
        %1920 = vmatpush1.msra.mxu0 0.0
        %1921 = vmatprep.subr.mxu0 0.0
        %1922 = vmatpush1.msra.mxu0 0.0
        %1923 = vmatprep.subr.mxu0 0.0
        %1924 = vmatpush1.msra.mxu0 0.0
        %1925 = vmatprep.subr.mxu0 0.0
        %1926 = vmatpush1.msra.mxu0 0.0
        %1927 = vmatprep.subr.mxu0 0.0
        %1928 = vmatpush1.msra.mxu0 0.0
        %1929 = vmatprep.subr.mxu0 0.0
        %1930 = vmatpush1.msra.mxu0 0.0
        %1931 = vmatprep.subr.mxu0 0.0
        %1932 = vmatpush1.msra.mxu0 0.0
        %1933 = vmatprep.subr.mxu0 0.0
        %1934 = vmatpush1.msra.mxu0 0.0
        %1935 = vmatprep.subr.mxu0 0.0
        %1936 = vmatpush1.msra.mxu0 0.0
        %1937 = vmatprep.subr.mxu0 0.0
        %1938 = vmatpush1.msra.mxu0 0.0
        %1939 = vmatprep.subr.mxu0 0.0
        %1940 = vmatpush1.msra.mxu0 0.0
        %1941 = vmatprep.subr.mxu0 0.0
        %1942 = vmatpush1.msra.mxu0 0.0
        %1943 = vmatprep.subr.mxu0 0.0
        %1944 = vmatpush1.msra.mxu0 0.0
        %1945 = vmatprep.subr.mxu0 0.0
        %1946 = vmatpush1.msra.mxu0 0.0
        %1947 = vmatprep.subr.mxu0 0.0
        %1948 = vmatpush1.msra.mxu0 0.0
        %1949 = vmatprep.subr.mxu0 0.0
        %1950 = vmatpush1.msra.mxu0 0.0
        %1951 = vmatprep.subr.mxu0 0.0
        %1952 = vmatpush1.msra.mxu0 0.0
        %1953 = vmatprep.subr.mxu0 0.0
        %1954 = vmatpush1.msra.mxu0 0.0
        %1955 = vmatprep.subr.mxu0 0.0
        %1956 = vmatpush1.msra.mxu0 0.0
        %1957 = vmatprep.subr.mxu0 0.0
        %1958 = vmatpush1.msra.mxu0 0.0
        %1959 = vmatprep.mubr.f32.mxu0 0.0
        %1960 = vmatmul.mubr.f32.gmra.mrb[0].mxu0 %v340
        %v1961 = vpop.f32.mrb[0].mxu0
        %v1962 = vadd.f32 0.0, %v1961
        %v1963 = vpop.f32.mrb[0].mxu0
        %1964 = vdwg.mxu0
        %1965 = vmatprep.subr.mxu0 0.0
        %1966 = vmatpush1.msra.mxu0 %v1893
        %1967 = vmatprep.subr.mxu0 0.0
        %1968 = vmatpush1.msra.mxu0 %v1894
        %1969 = vmatprep.subr.mxu0 0.0
        %1970 = vmatpush1.msra.mxu0 0.0
        %1971 = vmatprep.subr.mxu0 0.0
        %1972 = vmatpush1.msra.mxu0 0.0
        %1973 = vmatprep.subr.mxu0 0.0
        %1974 = vmatpush1.msra.mxu0 0.0
        %1975 = vmatprep.subr.mxu0 0.0
        %1976 = vmatpush1.msra.mxu0 0.0
        %1977 = vmatprep.subr.mxu0 0.0
        %1978 = vmatpush1.msra.mxu0 0.0
        %1979 = vmatprep.subr.mxu0 0.0
        %1980 = vmatpush1.msra.mxu0 0.0
        %1981 = vmatprep.subr.mxu0 0.0
        %1982 = vmatpush1.msra.mxu0 0.0
        %1983 = vmatprep.subr.mxu0 0.0
        %1984 = vmatpush1.msra.mxu0 0.0
        %1985 = vmatprep.subr.mxu0 0.0
        %1986 = vmatpush1.msra.mxu0 0.0
        %1987 = vmatprep.subr.mxu0 0.0
        %1988 = vmatpush1.msra.mxu0 0.0
        %1989 = vmatprep.subr.mxu0 0.0
        %1990 = vmatpush1.msra.mxu0 0.0
        %1991 = vmatprep.subr.mxu0 0.0
        %1992 = vmatpush1.msra.mxu0 0.0
        %1993 = vmatprep.subr.mxu0 0.0
        %1994 = vmatpush1.msra.mxu0 0.0
        %1995 = vmatprep.subr.mxu0 0.0
        %1996 = vmatpush1.msra.mxu0 0.0
        %1997 = vmatprep.subr.mxu0 0.0
        %1998 = vmatpush1.msra.mxu0 0.0
        %1999 = vmatprep.subr.mxu0 0.0
        %2000 = vmatpush1.msra.mxu0 0.0
        %2001 = vmatprep.subr.mxu0 0.0
        %2002 = vmatpush1.msra.mxu0 0.0
        %2003 = vmatprep.subr.mxu0 0.0
        %2004 = vmatpush1.msra.mxu0 0.0
        %2005 = vmatprep.subr.mxu0 0.0
        %2006 = vmatpush1.msra.mxu0 0.0
        %2007 = vmatprep.subr.mxu0 0.0
        %2008 = vmatpush1.msra.mxu0 0.0
        %2009 = vmatprep.subr.mxu0 0.0
        %2010 = vmatpush1.msra.mxu0 0.0
        %2011 = vmatprep.subr.mxu0 0.0
        %2012 = vmatpush1.msra.mxu0 0.0
        %2013 = vmatprep.subr.mxu0 0.0
        %2014 = vmatpush1.msra.mxu0 0.0
        %2015 = vmatprep.subr.mxu0 0.0
        %2016 = vmatpush1.msra.mxu0 0.0
        %2017 = vmatprep.subr.mxu0 0.0
        %2018 = vmatpush1.msra.mxu0 0.0
        %2019 = vmatprep.subr.mxu0 0.0
        %2020 = vmatpush1.msra.mxu0 0.0
        %2021 = vmatprep.subr.mxu0 0.0
        %2022 = vmatpush1.msra.mxu0 0.0
        %2023 = vmatprep.subr.mxu0 0.0
        %2024 = vmatpush1.msra.mxu0 0.0
        %2025 = vmatprep.subr.mxu0 0.0
        %2026 = vmatpush1.msra.mxu0 0.0
        %2027 = vmatprep.subr.mxu0 0.0
        %2028 = vmatpush1.msra.mxu0 0.0
        %2029 = vmatprep.mubr.f32.mxu0 0.0
        %2030 = vmatmul.mubr.f32.gmra.mrb[0].mxu0 %v413
        %v2031 = vpop.f32.mrb[0].mxu0
        %v2032 = vadd.f32 0.0, %v2031
        %v2033 = vpop.f32.mrb[0].mxu0
        %2034 = vdwg.mxu0
        %v2035 = vmax.f32 %v1962, %v2032
        %v2036 = vpack.c.bf16 %v2035, %v2035
        %s2037 = scalar_lea.vmem %s136, 28
        %2038 = vst.msk [vmem:[%s2037] sm:$0xf] %vm165, %v2036
        %s2039 = scalar_lea.vmem %s113, 192 [#allocation2]
        %v2040 = vld [vmem:[%s2039] sm:$0xff]
        %v2041 = vld [vmem:[%s2039 + $0x8] sm:$0xff]
        %s2042 = scalar_lea.vmem %s113, 208 [#allocation2]
        %v2043 = vld [vmem:[%s2042] sm:$0xff]
        %v2044 = vld [vmem:[%s2042 + $0x8] sm:$0xff]
        %v2045 = vmax.f32 %v2040, %v2043
        %v2046 = vmax.f32 %v2041, %v2044
        %v2048 = vsel %vm180, %v2045, 0
        %v2051 = vsel %vm180, %v2046, 0
        %2053 = vmatprep.subr.mxu0 0.0
        %2054 = vmatpush1.msra.mxu0 %v148
        %2055 = vmatprep.subr.mxu0 0.0
        %2056 = vmatpush1.msra.mxu0 %v149
        %2057 = vmatprep.subr.mxu0 0.0
        %2058 = vmatpush1.msra.mxu0 0.0
        %2059 = vmatprep.subr.mxu0 0.0
        %2060 = vmatpush1.msra.mxu0 0.0
        %2061 = vmatprep.subr.mxu0 0.0
        %2062 = vmatpush1.msra.mxu0 0.0
        %2063 = vmatprep.subr.mxu0 0.0
        %2064 = vmatpush1.msra.mxu0 0.0
        %2065 = vmatprep.subr.mxu0 0.0
        %2066 = vmatpush1.msra.mxu0 0.0
        %2067 = vmatprep.subr.mxu0 0.0
        %2068 = vmatpush1.msra.mxu0 0.0
        %2069 = vmatprep.subr.mxu0 0.0
        %2070 = vmatpush1.msra.mxu0 0.0
        %2071 = vmatprep.subr.mxu0 0.0
        %2072 = vmatpush1.msra.mxu0 0.0
        %2073 = vmatprep.subr.mxu0 0.0
        %2074 = vmatpush1.msra.mxu0 0.0
        %2075 = vmatprep.subr.mxu0 0.0
        %2076 = vmatpush1.msra.mxu0 0.0
        %2077 = vmatprep.subr.mxu0 0.0
        %2078 = vmatpush1.msra.mxu0 0.0
        %2079 = vmatprep.subr.mxu0 0.0
        %2080 = vmatpush1.msra.mxu0 0.0
        %2081 = vmatprep.subr.mxu0 0.0
        %2082 = vmatpush1.msra.mxu0 0.0
        %2083 = vmatprep.subr.mxu0 0.0
        %2084 = vmatpush1.msra.mxu0 0.0
        %2085 = vmatprep.subr.mxu0 0.0
        %2086 = vmatpush1.msra.mxu0 0.0
        %2087 = vmatprep.subr.mxu0 0.0
        %2088 = vmatpush1.msra.mxu0 0.0
        %2089 = vmatprep.subr.mxu0 0.0
        %2090 = vmatpush1.msra.mxu0 0.0
        %2091 = vmatprep.subr.mxu0 0.0
        %2092 = vmatpush1.msra.mxu0 0.0
        %2093 = vmatprep.subr.mxu0 0.0
        %2094 = vmatpush1.msra.mxu0 0.0
        %2095 = vmatprep.subr.mxu0 0.0
        %2096 = vmatpush1.msra.mxu0 0.0
        %2097 = vmatprep.subr.mxu0 0.0
        %2098 = vmatpush1.msra.mxu0 0.0
        %2099 = vmatprep.subr.mxu0 0.0
        %2100 = vmatpush1.msra.mxu0 0.0
        %2101 = vmatprep.subr.mxu0 0.0
        %2102 = vmatpush1.msra.mxu0 0.0
        %2103 = vmatprep.subr.mxu0 0.0
        %2104 = vmatpush1.msra.mxu0 0.0
        %2105 = vmatprep.subr.mxu0 0.0
        %2106 = vmatpush1.msra.mxu0 0.0
        %2107 = vmatprep.subr.mxu0 0.0
        %2108 = vmatpush1.msra.mxu0 0.0
        %2109 = vmatprep.subr.mxu0 0.0
        %2110 = vmatpush1.msra.mxu0 0.0
        %2111 = vmatprep.subr.mxu0 0.0
        %2112 = vmatpush1.msra.mxu0 0.0
        %2113 = vmatprep.subr.mxu0 0.0
        %2114 = vmatpush1.msra.mxu0 0.0
        %2115 = vmatprep.subr.mxu0 0.0
        %2116 = vmatpush1.msra.mxu0 0.0
        %2117 = vmatprep.mubr.f32.mxu0 0.0
        %2118 = vmatmul.mubr.f32.gmra.mrb[0].mxu0 %v2048
        %v2119 = vpop.f32.mrb[0].mxu0
        %v2120 = vadd.f32 0.0, %v2119
        %v2121 = vpop.f32.mrb[0].mxu0
        %2122 = vmatprep.mubr.f32.mxu0 0.0
        %2123 = vmatmul.mubr.f32.gmra.mrb[0].mxu0 %v2051
        %v2124 = vpop.f32.mrb[0].mxu0
        %v2125 = vadd.f32 0.0, %v2124
        %v2126 = vpop.f32.mrb[0].mxu0
        %2127 = vdwg.mxu0
        %2128 = vmatprep.subr.mxu0 0.0
        %2129 = vmatpush1.msra.mxu0 %v155
        %2130 = vmatprep.subr.mxu0 0.0
        %2131 = vmatpush1.msra.mxu0 %v156
        %2132 = vmatprep.subr.mxu0 0.0
        %2133 = vmatpush1.msra.mxu0 0.0
        %2134 = vmatprep.subr.mxu0 0.0
        %2135 = vmatpush1.msra.mxu0 0.0
        %2136 = vmatprep.subr.mxu0 0.0
        %2137 = vmatpush1.msra.mxu0 0.0
        %2138 = vmatprep.subr.mxu0 0.0
        %2139 = vmatpush1.msra.mxu0 0.0
        %2140 = vmatprep.subr.mxu0 0.0
        %2141 = vmatpush1.msra.mxu0 0.0
        %2142 = vmatprep.subr.mxu0 0.0
        %2143 = vmatpush1.msra.mxu0 0.0
        %2144 = vmatprep.subr.mxu0 0.0
        %2145 = vmatpush1.msra.mxu0 0.0
        %2146 = vmatprep.subr.mxu0 0.0
        %2147 = vmatpush1.msra.mxu0 0.0
        %2148 = vmatprep.subr.mxu0 0.0
        %2149 = vmatpush1.msra.mxu0 0.0
        %2150 = vmatprep.subr.mxu0 0.0
        %2151 = vmatpush1.msra.mxu0 0.0
        %2152 = vmatprep.subr.mxu0 0.0
        %2153 = vmatpush1.msra.mxu0 0.0
        %2154 = vmatprep.subr.mxu0 0.0
        %2155 = vmatpush1.msra.mxu0 0.0
        %2156 = vmatprep.subr.mxu0 0.0
        %2157 = vmatpush1.msra.mxu0 0.0
        %2158 = vmatprep.subr.mxu0 0.0
        %2159 = vmatpush1.msra.mxu0 0.0
        %2160 = vmatprep.subr.mxu0 0.0
        %2161 = vmatpush1.msra.mxu0 0.0
        %2162 = vmatprep.subr.mxu0 0.0
        %2163 = vmatpush1.msra.mxu0 0.0
        %2164 = vmatprep.subr.mxu0 0.0
        %2165 = vmatpush1.msra.mxu0 0.0
        %2166 = vmatprep.subr.mxu0 0.0
        %2167 = vmatpush1.msra.mxu0 0.0
        %2168 = vmatprep.subr.mxu0 0.0
        %2169 = vmatpush1.msra.mxu0 0.0
        %2170 = vmatprep.subr.mxu0 0.0
        %2171 = vmatpush1.msra.mxu0 0.0
        %2172 = vmatprep.subr.mxu0 0.0
        %2173 = vmatpush1.msra.mxu0 0.0
        %2174 = vmatprep.subr.mxu0 0.0
        %2175 = vmatpush1.msra.mxu0 0.0
        %2176 = vmatprep.subr.mxu0 0.0
        %2177 = vmatpush1.msra.mxu0 0.0
        %2178 = vmatprep.subr.mxu0 0.0
        %2179 = vmatpush1.msra.mxu0 0.0
        %2180 = vmatprep.subr.mxu0 0.0
        %2181 = vmatpush1.msra.mxu0 0.0
        %2182 = vmatprep.subr.mxu0 0.0
        %2183 = vmatpush1.msra.mxu0 0.0
        %2184 = vmatprep.subr.mxu0 0.0
        %2185 = vmatpush1.msra.mxu0 0.0
        %2186 = vmatprep.subr.mxu0 0.0
        %2187 = vmatpush1.msra.mxu0 0.0
        %2188 = vmatprep.subr.mxu0 0.0
        %2189 = vmatpush1.msra.mxu0 0.0
        %2190 = vmatprep.subr.mxu0 0.0
        %2191 = vmatpush1.msra.mxu0 0.0
        %2192 = vmatprep.mubr.f32.mxu0 0.0
        %2193 = vmatmul.mubr.f32.gmra.mrb[0].mxu0 %v2048
        %v2194 = vpop.f32.mrb[0].mxu0
        %v2195 = vadd.f32 0.0, %v2194
        %v2196 = vpop.f32.mrb[0].mxu0
        %2197 = vmatprep.mubr.f32.mxu0 0.0
        %2198 = vmatmul.mubr.f32.gmra.mrb[0].mxu0 %v2051
        %v2199 = vpop.f32.mrb[0].mxu0
        %v2200 = vadd.f32 0.0, %v2199
        %v2201 = vpop.f32.mrb[0].mxu0
        %2202 = vdwg.mxu0
        %v2203 = vmax.f32 %v2120, %v2195
        %v2204 = vmax.f32 %v2125, %v2200
        %2205 = vmatprep.subr.mxu0 0.0
        %2206 = vmatpush1.msra.mxu0 %v2203
        %2207 = vmatprep.subr.mxu0 0.0
        %2208 = vmatpush1.msra.mxu0 %v2204
        %2209 = vmatprep.subr.mxu0 0.0
        %2210 = vmatpush1.msra.mxu0 0.0
        %2211 = vmatprep.subr.mxu0 0.0
        %2212 = vmatpush1.msra.mxu0 0.0
        %2213 = vmatprep.subr.mxu0 0.0
        %2214 = vmatpush1.msra.mxu0 0.0
        %2215 = vmatprep.subr.mxu0 0.0
        %2216 = vmatpush1.msra.mxu0 0.0
        %2217 = vmatprep.subr.mxu0 0.0
        %2218 = vmatpush1.msra.mxu0 0.0
        %2219 = vmatprep.subr.mxu0 0.0
        %2220 = vmatpush1.msra.mxu0 0.0
        %2221 = vmatprep.subr.mxu0 0.0
        %2222 = vmatpush1.msra.mxu0 0.0
        %2223 = vmatprep.subr.mxu0 0.0
        %2224 = vmatpush1.msra.mxu0 0.0
        %2225 = vmatprep.subr.mxu0 0.0
        %2226 = vmatpush1.msra.mxu0 0.0
        %2227 = vmatprep.subr.mxu0 0.0
        %2228 = vmatpush1.msra.mxu0 0.0
        %2229 = vmatprep.subr.mxu0 0.0
        %2230 = vmatpush1.msra.mxu0 0.0
        %2231 = vmatprep.subr.mxu0 0.0
        %2232 = vmatpush1.msra.mxu0 0.0
        %2233 = vmatprep.subr.mxu0 0.0
        %2234 = vmatpush1.msra.mxu0 0.0
        %2235 = vmatprep.subr.mxu0 0.0
        %2236 = vmatpush1.msra.mxu0 0.0
        %2237 = vmatprep.subr.mxu0 0.0
        %2238 = vmatpush1.msra.mxu0 0.0
        %2239 = vmatprep.subr.mxu0 0.0
        %2240 = vmatpush1.msra.mxu0 0.0
        %2241 = vmatprep.subr.mxu0 0.0
        %2242 = vmatpush1.msra.mxu0 0.0
        %2243 = vmatprep.subr.mxu0 0.0
        %2244 = vmatpush1.msra.mxu0 0.0
        %2245 = vmatprep.subr.mxu0 0.0
        %2246 = vmatpush1.msra.mxu0 0.0
        %2247 = vmatprep.subr.mxu0 0.0
        %2248 = vmatpush1.msra.mxu0 0.0
        %2249 = vmatprep.subr.mxu0 0.0
        %2250 = vmatpush1.msra.mxu0 0.0
        %2251 = vmatprep.subr.mxu0 0.0
        %2252 = vmatpush1.msra.mxu0 0.0
        %2253 = vmatprep.subr.mxu0 0.0
        %2254 = vmatpush1.msra.mxu0 0.0
        %2255 = vmatprep.subr.mxu0 0.0
        %2256 = vmatpush1.msra.mxu0 0.0
        %2257 = vmatprep.subr.mxu0 0.0
        %2258 = vmatpush1.msra.mxu0 0.0
        %2259 = vmatprep.subr.mxu0 0.0
        %2260 = vmatpush1.msra.mxu0 0.0
        %2261 = vmatprep.subr.mxu0 0.0
        %2262 = vmatpush1.msra.mxu0 0.0
        %2263 = vmatprep.subr.mxu0 0.0
        %2264 = vmatpush1.msra.mxu0 0.0
        %2265 = vmatprep.subr.mxu0 0.0
        %2266 = vmatpush1.msra.mxu0 0.0
        %2267 = vmatprep.subr.mxu0 0.0
        %2268 = vmatpush1.msra.mxu0 0.0
        %2269 = vmatprep.mubr.f32.mxu0 0.0
        %2270 = vmatmul.mubr.f32.gmra.mrb[0].mxu0 %v340
        %v2271 = vpop.f32.mrb[0].mxu0
        %v2272 = vadd.f32 0.0, %v2271
        %v2273 = vpop.f32.mrb[0].mxu0
        %2274 = vdwg.mxu0
        %2275 = vmatprep.subr.mxu0 0.0
        %2276 = vmatpush1.msra.mxu0 %v2203
        %2277 = vmatprep.subr.mxu0 0.0
        %2278 = vmatpush1.msra.mxu0 %v2204
        %2279 = vmatprep.subr.mxu0 0.0
        %2280 = vmatpush1.msra.mxu0 0.0
        %2281 = vmatprep.subr.mxu0 0.0
        %2282 = vmatpush1.msra.mxu0 0.0
        %2283 = vmatprep.subr.mxu0 0.0
        %2284 = vmatpush1.msra.mxu0 0.0
        %2285 = vmatprep.subr.mxu0 0.0
        %2286 = vmatpush1.msra.mxu0 0.0
        %2287 = vmatprep.subr.mxu0 0.0
        %2288 = vmatpush1.msra.mxu0 0.0
        %2289 = vmatprep.subr.mxu0 0.0
        %2290 = vmatpush1.msra.mxu0 0.0
        %2291 = vmatprep.subr.mxu0 0.0
        %2292 = vmatpush1.msra.mxu0 0.0
        %2293 = vmatprep.subr.mxu0 0.0
        %2294 = vmatpush1.msra.mxu0 0.0
        %2295 = vmatprep.subr.mxu0 0.0
        %2296 = vmatpush1.msra.mxu0 0.0
        %2297 = vmatprep.subr.mxu0 0.0
        %2298 = vmatpush1.msra.mxu0 0.0
        %2299 = vmatprep.subr.mxu0 0.0
        %2300 = vmatpush1.msra.mxu0 0.0
        %2301 = vmatprep.subr.mxu0 0.0
        %2302 = vmatpush1.msra.mxu0 0.0
        %2303 = vmatprep.subr.mxu0 0.0
        %2304 = vmatpush1.msra.mxu0 0.0
        %2305 = vmatprep.subr.mxu0 0.0
        %2306 = vmatpush1.msra.mxu0 0.0
        %2307 = vmatprep.subr.mxu0 0.0
        %2308 = vmatpush1.msra.mxu0 0.0
        %2309 = vmatprep.subr.mxu0 0.0
        %2310 = vmatpush1.msra.mxu0 0.0
        %2311 = vmatprep.subr.mxu0 0.0
        %2312 = vmatpush1.msra.mxu0 0.0
        %2313 = vmatprep.subr.mxu0 0.0
        %2314 = vmatpush1.msra.mxu0 0.0
        %2315 = vmatprep.subr.mxu0 0.0
        %2316 = vmatpush1.msra.mxu0 0.0
        %2317 = vmatprep.subr.mxu0 0.0
        %2318 = vmatpush1.msra.mxu0 0.0
        %2319 = vmatprep.subr.mxu0 0.0
        %2320 = vmatpush1.msra.mxu0 0.0
        %2321 = vmatprep.subr.mxu0 0.0
        %2322 = vmatpush1.msra.mxu0 0.0
        %2323 = vmatprep.subr.mxu0 0.0
        %2324 = vmatpush1.msra.mxu0 0.0
        %2325 = vmatprep.subr.mxu0 0.0
        %2326 = vmatpush1.msra.mxu0 0.0
        %2327 = vmatprep.subr.mxu0 0.0
        %2328 = vmatpush1.msra.mxu0 0.0
        %2329 = vmatprep.subr.mxu0 0.0
        %2330 = vmatpush1.msra.mxu0 0.0
        %2331 = vmatprep.subr.mxu0 0.0
        %2332 = vmatpush1.msra.mxu0 0.0
        %2333 = vmatprep.subr.mxu0 0.0
        %2334 = vmatpush1.msra.mxu0 0.0
        %2335 = vmatprep.subr.mxu0 0.0
        %2336 = vmatpush1.msra.mxu0 0.0
        %2337 = vmatprep.subr.mxu0 0.0
        %2338 = vmatpush1.msra.mxu0 0.0
        %2339 = vmatprep.mubr.f32.mxu0 0.0
        %2340 = vmatmul.mubr.f32.gmra.mrb[0].mxu0 %v413
        %v2341 = vpop.f32.mrb[0].mxu0
        %v2342 = vadd.f32 0.0, %v2341
        %v2343 = vpop.f32.mrb[0].mxu0
        %2344 = vdwg.mxu0
        %v2345 = vmax.f32 %v2272, %v2342
        %v2346 = vpack.c.bf16 %v2345, %v2345
        %s2347 = scalar_lea.vmem %s136, 32
        %2348 = vst.msk [vmem:[%s2347] sm:$0xf] %vm165, %v2346
        %s2349 = scalar_lea.vmem %s113, 224 [#allocation2]
        %v2350 = vld [vmem:[%s2349] sm:$0xff]
        %v2351 = vld [vmem:[%s2349 + $0x8] sm:$0xff]
        %s2352 = scalar_lea.vmem %s113, 240 [#allocation2]
        %v2353 = vld [vmem:[%s2352] sm:$0xff]
        %v2354 = vld [vmem:[%s2352 + $0x8] sm:$0xff]
        %v2355 = vmax.f32 %v2350, %v2353
        %v2356 = vmax.f32 %v2351, %v2354
        %v2358 = vsel %vm180, %v2355, 0
        %v2361 = vsel %vm180, %v2356, 0
        %2363 = vmatprep.subr.mxu0 0.0
        %2364 = vmatpush1.msra.mxu0 %v148
        %2365 = vmatprep.subr.mxu0 0.0
        %2366 = vmatpush1.msra.mxu0 %v149
        %2367 = vmatprep.subr.mxu0 0.0
        %2368 = vmatpush1.msra.mxu0 0.0
        %2369 = vmatprep.subr.mxu0 0.0
        %2370 = vmatpush1.msra.mxu0 0.0
        %2371 = vmatprep.subr.mxu0 0.0
        %2372 = vmatpush1.msra.mxu0 0.0
        %2373 = vmatprep.subr.mxu0 0.0
        %2374 = vmatpush1.msra.mxu0 0.0
        %2375 = vmatprep.subr.mxu0 0.0
        %2376 = vmatpush1.msra.mxu0 0.0
        %2377 = vmatprep.subr.mxu0 0.0
        %2378 = vmatpush1.msra.mxu0 0.0
        %2379 = vmatprep.subr.mxu0 0.0
        %2380 = vmatpush1.msra.mxu0 0.0
        %2381 = vmatprep.subr.mxu0 0.0
        %2382 = vmatpush1.msra.mxu0 0.0
        %2383 = vmatprep.subr.mxu0 0.0
        %2384 = vmatpush1.msra.mxu0 0.0
        %2385 = vmatprep.subr.mxu0 0.0
        %2386 = vmatpush1.msra.mxu0 0.0
        %2387 = vmatprep.subr.mxu0 0.0
        %2388 = vmatpush1.msra.mxu0 0.0
        %2389 = vmatprep.subr.mxu0 0.0
        %2390 = vmatpush1.msra.mxu0 0.0
        %2391 = vmatprep.subr.mxu0 0.0
        %2392 = vmatpush1.msra.mxu0 0.0
        %2393 = vmatprep.subr.mxu0 0.0
        %2394 = vmatpush1.msra.mxu0 0.0
        %2395 = vmatprep.subr.mxu0 0.0
        %2396 = vmatpush1.msra.mxu0 0.0
        %2397 = vmatprep.subr.mxu0 0.0
        %2398 = vmatpush1.msra.mxu0 0.0
        %2399 = vmatprep.subr.mxu0 0.0
        %2400 = vmatpush1.msra.mxu0 0.0
        %2401 = vmatprep.subr.mxu0 0.0
        %2402 = vmatpush1.msra.mxu0 0.0
        %2403 = vmatprep.subr.mxu0 0.0
        %2404 = vmatpush1.msra.mxu0 0.0
        %2405 = vmatprep.subr.mxu0 0.0
        %2406 = vmatpush1.msra.mxu0 0.0
        %2407 = vmatprep.subr.mxu0 0.0
        %2408 = vmatpush1.msra.mxu0 0.0
        %2409 = vmatprep.subr.mxu0 0.0
        %2410 = vmatpush1.msra.mxu0 0.0
        %2411 = vmatprep.subr.mxu0 0.0
        %2412 = vmatpush1.msra.mxu0 0.0
        %2413 = vmatprep.subr.mxu0 0.0
        %2414 = vmatpush1.msra.mxu0 0.0
        %2415 = vmatprep.subr.mxu0 0.0
        %2416 = vmatpush1.msra.mxu0 0.0
        %2417 = vmatprep.subr.mxu0 0.0
        %2418 = vmatpush1.msra.mxu0 0.0
        %2419 = vmatprep.subr.mxu0 0.0
        %2420 = vmatpush1.msra.mxu0 0.0
        %2421 = vmatprep.subr.mxu0 0.0
        %2422 = vmatpush1.msra.mxu0 0.0
        %2423 = vmatprep.subr.mxu0 0.0
        %2424 = vmatpush1.msra.mxu0 0.0
        %2425 = vmatprep.subr.mxu0 0.0
        %2426 = vmatpush1.msra.mxu0 0.0
        %2427 = vmatprep.mubr.f32.mxu0 0.0
        %2428 = vmatmul.mubr.f32.gmra.mrb[0].mxu0 %v2358
        %v2429 = vpop.f32.mrb[0].mxu0
        %v2430 = vadd.f32 0.0, %v2429
        %v2431 = vpop.f32.mrb[0].mxu0
        %2432 = vmatprep.mubr.f32.mxu0 0.0
        %2433 = vmatmul.mubr.f32.gmra.mrb[0].mxu0 %v2361
        %v2434 = vpop.f32.mrb[0].mxu0
        %v2435 = vadd.f32 0.0, %v2434
        %v2436 = vpop.f32.mrb[0].mxu0
        %2437 = vdwg.mxu0
        %2438 = vmatprep.subr.mxu0 0.0
        %2439 = vmatpush1.msra.mxu0 %v155
        %2440 = vmatprep.subr.mxu0 0.0
        %2441 = vmatpush1.msra.mxu0 %v156
        %2442 = vmatprep.subr.mxu0 0.0
        %2443 = vmatpush1.msra.mxu0 0.0
        %2444 = vmatprep.subr.mxu0 0.0
        %2445 = vmatpush1.msra.mxu0 0.0
        %2446 = vmatprep.subr.mxu0 0.0
        %2447 = vmatpush1.msra.mxu0 0.0
        %2448 = vmatprep.subr.mxu0 0.0
        %2449 = vmatpush1.msra.mxu0 0.0
        %2450 = vmatprep.subr.mxu0 0.0
        %2451 = vmatpush1.msra.mxu0 0.0
        %2452 = vmatprep.subr.mxu0 0.0
        %2453 = vmatpush1.msra.mxu0 0.0
        %2454 = vmatprep.subr.mxu0 0.0
        %2455 = vmatpush1.msra.mxu0 0.0
        %2456 = vmatprep.subr.mxu0 0.0
        %2457 = vmatpush1.msra.mxu0 0.0
        %2458 = vmatprep.subr.mxu0 0.0
        %2459 = vmatpush1.msra.mxu0 0.0
        %2460 = vmatprep.subr.mxu0 0.0
        %2461 = vmatpush1.msra.mxu0 0.0
        %2462 = vmatprep.subr.mxu0 0.0
        %2463 = vmatpush1.msra.mxu0 0.0
        %2464 = vmatprep.subr.mxu0 0.0
        %2465 = vmatpush1.msra.mxu0 0.0
        %2466 = vmatprep.subr.mxu0 0.0
        %2467 = vmatpush1.msra.mxu0 0.0
        %2468 = vmatprep.subr.mxu0 0.0
        %2469 = vmatpush1.msra.mxu0 0.0
        %2470 = vmatprep.subr.mxu0 0.0
        %2471 = vmatpush1.msra.mxu0 0.0
        %2472 = vmatprep.subr.mxu0 0.0
        %2473 = vmatpush1.msra.mxu0 0.0
        %2474 = vmatprep.subr.mxu0 0.0
        %2475 = vmatpush1.msra.mxu0 0.0
        %2476 = vmatprep.subr.mxu0 0.0
        %2477 = vmatpush1.msra.mxu0 0.0
        %2478 = vmatprep.subr.mxu0 0.0
        %2479 = vmatpush1.msra.mxu0 0.0
        %2480 = vmatprep.subr.mxu0 0.0
        %2481 = vmatpush1.msra.mxu0 0.0
        %2482 = vmatprep.subr.mxu0 0.0
        %2483 = vmatpush1.msra.mxu0 0.0
        %2484 = vmatprep.subr.mxu0 0.0
        %2485 = vmatpush1.msra.mxu0 0.0
        %2486 = vmatprep.subr.mxu0 0.0
        %2487 = vmatpush1.msra.mxu0 0.0
        %2488 = vmatprep.subr.mxu0 0.0
        %2489 = vmatpush1.msra.mxu0 0.0
        %2490 = vmatprep.subr.mxu0 0.0
        %2491 = vmatpush1.msra.mxu0 0.0
        %2492 = vmatprep.subr.mxu0 0.0
        %2493 = vmatpush1.msra.mxu0 0.0
        %2494 = vmatprep.subr.mxu0 0.0
        %2495 = vmatpush1.msra.mxu0 0.0
        %2496 = vmatprep.subr.mxu0 0.0
        %2497 = vmatpush1.msra.mxu0 0.0
        %2498 = vmatprep.subr.mxu0 0.0
        %2499 = vmatpush1.msra.mxu0 0.0
        %2500 = vmatprep.subr.mxu0 0.0
        %2501 = vmatpush1.msra.mxu0 0.0
        %2502 = vmatprep.mubr.f32.mxu0 0.0
        %2503 = vmatmul.mubr.f32.gmra.mrb[0].mxu0 %v2358
        %v2504 = vpop.f32.mrb[0].mxu0
        %v2505 = vadd.f32 0.0, %v2504
        %v2506 = vpop.f32.mrb[0].mxu0
        %2507 = vmatprep.mubr.f32.mxu0 0.0
        %2508 = vmatmul.mubr.f32.gmra.mrb[0].mxu0 %v2361
        %v2509 = vpop.f32.mrb[0].mxu0
        %v2510 = vadd.f32 0.0, %v2509
        %v2511 = vpop.f32.mrb[0].mxu0
        %2512 = vdwg.mxu0
        %v2513 = vmax.f32 %v2430, %v2505
        %v2514 = vmax.f32 %v2435, %v2510
        %2515 = vmatprep.subr.mxu0 0.0
        %2516 = vmatpush1.msra.mxu0 %v2513
        %2517 = vmatprep.subr.mxu0 0.0
        %2518 = vmatpush1.msra.mxu0 %v2514
        %2519 = vmatprep.subr.mxu0 0.0
        %2520 = vmatpush1.msra.mxu0 0.0
        %2521 = vmatprep.subr.mxu0 0.0
        %2522 = vmatpush1.msra.mxu0 0.0
        %2523 = vmatprep.subr.mxu0 0.0
        %2524 = vmatpush1.msra.mxu0 0.0
        %2525 = vmatprep.subr.mxu0 0.0
        %2526 = vmatpush1.msra.mxu0 0.0
        %2527 = vmatprep.subr.mxu0 0.0
        %2528 = vmatpush1.msra.mxu0 0.0
        %2529 = vmatprep.subr.mxu0 0.0
        %2530 = vmatpush1.msra.mxu0 0.0
        %2531 = vmatprep.subr.mxu0 0.0
        %2532 = vmatpush1.msra.mxu0 0.0
        %2533 = vmatprep.subr.mxu0 0.0
        %2534 = vmatpush1.msra.mxu0 0.0
        %2535 = vmatprep.subr.mxu0 0.0
        %2536 = vmatpush1.msra.mxu0 0.0
        %2537 = vmatprep.subr.mxu0 0.0
        %2538 = vmatpush1.msra.mxu0 0.0
        %2539 = vmatprep.subr.mxu0 0.0
        %2540 = vmatpush1.msra.mxu0 0.0
        %2541 = vmatprep.subr.mxu0 0.0
        %2542 = vmatpush1.msra.mxu0 0.0
        %2543 = vmatprep.subr.mxu0 0.0
        %2544 = vmatpush1.msra.mxu0 0.0
        %2545 = vmatprep.subr.mxu0 0.0
        %2546 = vmatpush1.msra.mxu0 0.0
        %2547 = vmatprep.subr.mxu0 0.0
        %2548 = vmatpush1.msra.mxu0 0.0
        %2549 = vmatprep.subr.mxu0 0.0
        %2550 = vmatpush1.msra.mxu0 0.0
        %2551 = vmatprep.subr.mxu0 0.0
        %2552 = vmatpush1.msra.mxu0 0.0
        %2553 = vmatprep.subr.mxu0 0.0
        %2554 = vmatpush1.msra.mxu0 0.0
        %2555 = vmatprep.subr.mxu0 0.0
        %2556 = vmatpush1.msra.mxu0 0.0
        %2557 = vmatprep.subr.mxu0 0.0
        %2558 = vmatpush1.msra.mxu0 0.0
        %2559 = vmatprep.subr.mxu0 0.0
        %2560 = vmatpush1.msra.mxu0 0.0
        %2561 = vmatprep.subr.mxu0 0.0
        %2562 = vmatpush1.msra.mxu0 0.0
        %2563 = vmatprep.subr.mxu0 0.0
        %2564 = vmatpush1.msra.mxu0 0.0
        %2565 = vmatprep.subr.mxu0 0.0
        %2566 = vmatpush1.msra.mxu0 0.0
        %2567 = vmatprep.subr.mxu0 0.0
        %2568 = vmatpush1.msra.mxu0 0.0
        %2569 = vmatprep.subr.mxu0 0.0
        %2570 = vmatpush1.msra.mxu0 0.0
        %2571 = vmatprep.subr.mxu0 0.0
        %2572 = vmatpush1.msra.mxu0 0.0
        %2573 = vmatprep.subr.mxu0 0.0
        %2574 = vmatpush1.msra.mxu0 0.0
        %2575 = vmatprep.subr.mxu0 0.0
        %2576 = vmatpush1.msra.mxu0 0.0
        %2577 = vmatprep.subr.mxu0 0.0
        %2578 = vmatpush1.msra.mxu0 0.0
        %2579 = vmatprep.mubr.f32.mxu0 0.0
        %2580 = vmatmul.mubr.f32.gmra.mrb[0].mxu0 %v340
        %v2581 = vpop.f32.mrb[0].mxu0
        %v2582 = vadd.f32 0.0, %v2581
        %v2583 = vpop.f32.mrb[0].mxu0
        %2584 = vdwg.mxu0
        %2585 = vmatprep.subr.mxu0 0.0
        %2586 = vmatpush1.msra.mxu0 %v2513
        %2587 = vmatprep.subr.mxu0 0.0
        %2588 = vmatpush1.msra.mxu0 %v2514
        %2589 = vmatprep.subr.mxu0 0.0
        %2590 = vmatpush1.msra.mxu0 0.0
        %2591 = vmatprep.subr.mxu0 0.0
        %2592 = vmatpush1.msra.mxu0 0.0
        %2593 = vmatprep.subr.mxu0 0.0
        %2594 = vmatpush1.msra.mxu0 0.0
        %2595 = vmatprep.subr.mxu0 0.0
        %2596 = vmatpush1.msra.mxu0 0.0
        %2597 = vmatprep.subr.mxu0 0.0
        %2598 = vmatpush1.msra.mxu0 0.0
        %2599 = vmatprep.subr.mxu0 0.0
        %2600 = vmatpush1.msra.mxu0 0.0
        %2601 = vmatprep.subr.mxu0 0.0
        %2602 = vmatpush1.msra.mxu0 0.0
        %2603 = vmatprep.subr.mxu0 0.0
        %2604 = vmatpush1.msra.mxu0 0.0
        %2605 = vmatprep.subr.mxu0 0.0
        %2606 = vmatpush1.msra.mxu0 0.0
        %2607 = vmatprep.subr.mxu0 0.0
        %2608 = vmatpush1.msra.mxu0 0.0
        %2609 = vmatprep.subr.mxu0 0.0
        %2610 = vmatpush1.msra.mxu0 0.0
        %2611 = vmatprep.subr.mxu0 0.0
        %2612 = vmatpush1.msra.mxu0 0.0
        %2613 = vmatprep.subr.mxu0 0.0
        %2614 = vmatpush1.msra.mxu0 0.0
        %2615 = vmatprep.subr.mxu0 0.0
        %2616 = vmatpush1.msra.mxu0 0.0
        %2617 = vmatprep.subr.mxu0 0.0
        %2618 = vmatpush1.msra.mxu0 0.0
        %2619 = vmatprep.subr.mxu0 0.0
        %2620 = vmatpush1.msra.mxu0 0.0
        %2621 = vmatprep.subr.mxu0 0.0
        %2622 = vmatpush1.msra.mxu0 0.0
        %2623 = vmatprep.subr.mxu0 0.0
        %2624 = vmatpush1.msra.mxu0 0.0
        %2625 = vmatprep.subr.mxu0 0.0
        %2626 = vmatpush1.msra.mxu0 0.0
        %2627 = vmatprep.subr.mxu0 0.0
        %2628 = vmatpush1.msra.mxu0 0.0
        %2629 = vmatprep.subr.mxu0 0.0
        %2630 = vmatpush1.msra.mxu0 0.0
        %2631 = vmatprep.subr.mxu0 0.0
        %2632 = vmatpush1.msra.mxu0 0.0
        %2633 = vmatprep.subr.mxu0 0.0
        %2634 = vmatpush1.msra.mxu0 0.0
        %2635 = vmatprep.subr.mxu0 0.0
        %2636 = vmatpush1.msra.mxu0 0.0
        %2637 = vmatprep.subr.mxu0 0.0
        %2638 = vmatpush1.msra.mxu0 0.0
        %2639 = vmatprep.subr.mxu0 0.0
        %2640 = vmatpush1.msra.mxu0 0.0
        %2641 = vmatprep.subr.mxu0 0.0
        %2642 = vmatpush1.msra.mxu0 0.0
        %2643 = vmatprep.subr.mxu0 0.0
        %2644 = vmatpush1.msra.mxu0 0.0
        %2645 = vmatprep.subr.mxu0 0.0
        %2646 = vmatpush1.msra.mxu0 0.0
        %2647 = vmatprep.subr.mxu0 0.0
        %2648 = vmatpush1.msra.mxu0 0.0
        %2649 = vmatprep.mubr.f32.mxu0 0.0
        %2650 = vmatmul.mubr.f32.gmra.mrb[0].mxu0 %v413
        %v2651 = vpop.f32.mrb[0].mxu0
        %v2652 = vadd.f32 0.0, %v2651
        %v2653 = vpop.f32.mrb[0].mxu0
        %2654 = vdwg.mxu0
        %v2655 = vmax.f32 %v2582, %v2652
        %v2656 = vpack.c.bf16 %v2655, %v2655
        %s2657 = scalar_lea.vmem %s136, 36
        %2658 = vst.msk [vmem:[%s2657] sm:$0xf] %vm165, %v2656
        %p2659 = scmp.lt.s32.totalorder %s15, 7
        %s2660 = scalar_select %p2659, %s15, 7
        %s2661 = smul.addr %s2660, 12
        %s2662 = smul.addr %s2661, 4
        %s2663 = scalar_lea.vmem %s1, %s2662
        // Predicated region
        $region29: #{tpu_custom_call.1} parent=23 // pred_check
          %p2664 = pneg %p59
        $region30: #{tpu_custom_call.1} parent=23 // pred_check_branch
          %2666 = sbr.rel (%p2664) target = $region32
        $region31: #{tpu_custom_call.1} parent=23 // pred_region
          _
        $region32: #{tpu_custom_call.1} parent=23 // pred_fallthru
          _
      $region24: #{tpu_custom_call.1} parent=5 // pred_fallthru
        _
      %p2667 = scmp.le.s32.totalorder 2, %s10
      // Predicated region
      $region33: #{tpu_custom_call.1} parent=5 // pred_check
        %p2668 = pneg %p2667
      $region34: #{tpu_custom_call.1} parent=5 // pred_check_branch
        %2670 = sbr.rel (%p2668) target = $region36
      $region35: #{tpu_custom_call.1} parent=5 // pred_region
        %s2671 = ssub.s32 %s10, 2
        // Predicated region
        $region37: #{tpu_custom_call.1} parent=35 // pred_check
          %p2672 = pneg %p65
        $region38: #{tpu_custom_call.1} parent=35 // pred_check_branch
          %2674 = sbr.rel (%p2672) target = $region40
        $region39: #{tpu_custom_call.1} parent=35 // pred_region
          %p2675 = scmp.lt.s32.totalorder %s16, 7
          %s2676 = scalar_select %p2675, %s16, 7
          %s2677 = smul.addr %s2676, 12
          %s2678 = smul.addr %s2677, 4
          %s2679 = scalar_lea.vmem %s1, %s2678
        $region40: #{tpu_custom_call.1} parent=35 // pred_fallthru
          _
      $region36: #{tpu_custom_call.1} parent=5 // pred_fallthru
        _
    $region6: #{tpu_custom_call.1} parent=1 // loop_footer
      %s14 = sadd.s32 1, %s10
    $region7: #{tpu_custom_call.1} parent=1 // loop_footer_branch
      %9 = sbr.rel target = $region3
    $region8: #{tpu_custom_call.1} parent=1 // loop_exit
      _
    %2680 = vsyncpa [#allocation3], 1
    %s2681 = scalar_lea.sflag [#allocation3], 1
    %2682 = vsyncpa %s2681, 1

</llo_original>
